<compile_context>
chip_gen: v6e
topology: v6e:2x2x1
jax: 0.10.0
libtpu: 0.0.40
codegen_flags: <defaults>
</compile_context>

<pallas_src>
import math

import jax
import jax.numpy as jnp
from jax.experimental import pallas as pl
from jax.experimental.pallas import tpu as pltpu

# ---------------------------------------------------------------------------
# Model configuration (scaled-down xlm-roberta-base)
# ---------------------------------------------------------------------------
B = 2             # batch
S = 8             # sequence length
H = 32            # hidden size            (768 in xlm-roberta-base)
NUM_HEADS = 4     # attention heads        (12 in xlm-roberta-base)
HEAD_DIM = H // NUM_HEADS
FFN = 64          # intermediate size      (3072 in xlm-roberta-base)
NUM_LAYERS = 2    # encoder layers         (12 in xlm-roberta-base)
VOCAB = 100
H1 = 256          # head: Linear(768, 256) -> Linear(H, 256)
H2 = 64           # head: Linear(256, 64)
NUM_LABELS = 10   # stand-in for len(encode_di)
LABELS_PAD = 128  # lane-dense logits slab; sliced to NUM_LABELS outside kernel

T = B * S
LN_EPS = 1e-5
BN_EPS = 1e-5
ATTN_SCALE = 1.0 / math.sqrt(HEAD_DIM)

# Whole-array-in-VMEM spec (everything is tiny; no grid/tiling needed).
VMEM_SPEC = pl.BlockSpec(memory_space=pltpu.MemorySpace.VMEM)


# ---------------------------------------------------------------------------
# In-kernel math helpers (traced inside the Pallas kernel)
# ---------------------------------------------------------------------------
def _layer_norm(x, g, b):
    mu = jnp.mean(x, axis=-1, keepdims=True)
    var = jnp.mean(jnp.square(x - mu), axis=-1, keepdims=True)
    return (x - mu) * jax.lax.rsqrt(var + LN_EPS) * g + b


def _softmax(x):
    m = jnp.max(x, axis=-1, keepdims=True)
    e = jnp.exp(x - m)
    return e / jnp.sum(e, axis=-1, keepdims=True)


def _gelu_tanh(x):
    # tanh-approx GELU (Mosaic-friendly; erf-based gelu used by HF differs ~1e-3).
    c = 0.7978845608028654
    return 0.5 * x * (1.0 + jnp.tanh(c * (x + 0.044715 * x * x * x)))


def _mish(x):
    # Mish(x) = x * tanh(softplus(x)); stable softplus avoids overflow for large x.
    sp = jnp.maximum(x, 0.0) + jnp.log(1.0 + jnp.exp(-jnp.abs(x)))
    return x * jnp.tanh(sp)


# ---------------------------------------------------------------------------
# Fused forward kernel: emb-LN + NUM_LAYERS encoder layers + pooler + head
# ---------------------------------------------------------------------------
def fused_bert_kernel(x_ref, maskb_ref, embln_ref,
                      wqkv_ref, bqkv_ref, wo_ref, bo_ref, ln1_ref,
                      w1_ref, b1_ref, w2_ref, b2_ref, ln2_ref,
                      wp_ref, bp_ref,
                      hw1_ref, hb1_ref, bn1_ref,
                      hw2_ref, hb2_ref, bn2_ref,
                      hw3_ref, hb3_ref,
                      o_ref):
    embln = embln_ref[...]                                   # [2, H] (gamma, beta)
    xf = _layer_norm(x_ref[...], embln[0:1, :], embln[1:2, :])   # [T, H]
    maskb = maskb_ref[...]                                   # [B, 1, S] additive mask

    # Encoder layers — fully unrolled Python loop (NUM_LAYERS = 2), activation
    # stays in vregs/VMEM across layers.
    for l in range(NUM_LAYERS):
        # Fused QKV projection: one [T,H] @ [H,3H] MXU pass.
        qkv = jnp.dot(xf, wqkv_ref[l],
                      preferred_element_type=jnp.float32) + bqkv_ref[l]   # [T, 3H]
        qkv3 = qkv.reshape(B, S, 3 * H)                       # split leading dim only

        # Per-head attention (HEAD_DIM = 8, tiny).  TODO(synk): at real dims,
        # batch heads via a [B*NH, S, HD] layout instead of a Python loop.
        ctx_heads = []
        for h in range(NUM_HEADS):
            qh = qkv3[:, :, h * HEAD_DIM:(h + 1) * HEAD_DIM]
            kh = qkv3[:, :, H + h * HEAD_DIM:H + (h + 1) * HEAD_DIM]
            vh = qkv3[:, :, 2 * H + h * HEAD_DIM:2 * H + (h + 1) * HEAD_DIM]
            scores = jnp.einsum('bqd,bkd->bqk', qh, kh,
                                preferred_element_type=jnp.float32) * ATTN_SCALE + maskb
            probs = _softmax(scores)
            ctx_heads.append(jnp.einsum('bqk,bkd->bqd', probs, vh,
                                        preferred_element_type=jnp.float32))
        ctx = jnp.concatenate(ctx_heads, axis=-1).reshape(T, H)      # [T, H]

        # Single output-projection matmul instead of 4 partial ones.
        attn = jnp.dot(ctx, wo_ref[l],
                       preferred_element_type=jnp.float32) + bo_ref[l]

        ln1 = ln1_ref[l]                                      # [2, H]
        x1 = _layer_norm(xf + attn, ln1[0:1, :], ln1[1:2, :])

        hid = _gelu_tanh(jnp.dot(x1, w1_ref[l],
                                 preferred_element_type=jnp.float32) + b1_ref[l])
        ffn = jnp.dot(hid, w2_ref[l],
                      preferred_element_type=jnp.float32) + b2_ref[l]

        ln2 = ln2_ref[l]
        xf = _layer_norm(x1 + ffn, ln2[0:1, :], ln2[1:2, :])

    # Roberta pooler: dense + tanh on the CLS token (row b*S of the flat activation).
    cls = jnp.concatenate([xf[b * S:b * S + 1, :] for b in range(B)], axis=0)  # [B, H]
    pooled = jnp.tanh(jnp.dot(cls, wp_ref[...],
                              preferred_element_type=jnp.float32) + bp_ref[...])

    # multilabel head: Linear -> Mish -> BatchNorm1d(eval) -> Dropout(identity), x2
    bn1 = bn1_ref[...]                                        # [4, H1]: g, b, mean, var
    h1 = _mish(jnp.dot(pooled, hw1_ref[...],
                       preferred_element_type=jnp.float32) + hb1_ref[...])
    h1 = (h1 - bn1[2:3, :]) * jax.lax.rsqrt(bn1[3:4, :] + BN_EPS) * bn1[0:1, :] + bn1[1:2, :]

    bn2 = bn2_ref[...]                                        # [4, H2]
    h2 = _mish(jnp.dot(h1, hw2_ref[...],
                       preferred_element_type=jnp.float32) + hb2_ref[...])
    h2 = (h2 - bn2[2:3, :]) * jax.lax.rsqrt(bn2[3:4, :] + BN_EPS) * bn2[0:1, :] + bn2[1:2, :]

    # Final Linear into a lane-dense [B, 128] slab (cols >= NUM_LABELS are zero-weighted).
    o_ref[...] = jnp.dot(h2, hw3_ref[...],
                         preferred_element_type=jnp.float32) + hb3_ref[...]


# ---------------------------------------------------------------------------
# Parameters (deterministic, packed / stacked layout)
# ---------------------------------------------------------------------------
def init_params(key):
    keys = iter(jax.random.split(key, 32))

    def w(shape):
        return jax.random.normal(next(keys), shape, jnp.float32) * 0.02

    zeros = lambda s: jnp.zeros(s, jnp.float32)
    ones = lambda s: jnp.ones(s, jnp.float32)

    ln_pack = jnp.tile(jnp.stack([ones((H,)), zeros((H,))])[None], (NUM_LAYERS, 1, 1))
    bn_pack = lambda n: jnp.stack([ones((n,)), zeros((n,)), zeros((n,)), ones((n,))])

    hw3 = zeros((H2, LABELS_PAD)).at[:, :NUM_LABELS].set(w((H2, NUM_LABELS)))

    return {
        # embeddings
        'tok_emb': w((VOCAB, H)),
        'pos_emb': w((S, H)),
        'type_emb': w((1, H)),
        'emb_ln': jnp.stack([ones((H,)), zeros((H,))]),                 # [2, H]
        # encoder layers, stacked along a leading NUM_LAYERS axis
        'wqkv': w((NUM_LAYERS, H, 3 * H)), 'bqkv': zeros((NUM_LAYERS, 1, 3 * H)),
        'wo': w((NUM_LAYERS, H, H)),       'bo': zeros((NUM_LAYERS, 1, H)),
        'ln1': ln_pack,
        'w1': w((NUM_LAYERS, H, FFN)),     'b1': zeros((NUM_LAYERS, 1, FFN)),
        'w2': w((NUM_LAYERS, FFN, H)),     'b2': zeros((NUM_LAYERS, 1, H)),
        'ln2': ln_pack,
        # pooler
        'pool_w': w((H, H)), 'pool_b': zeros((1, H)),
        # multilabel head (BN packed as [gamma, beta, running_mean, running_var])
        'hw1': w((H, H1)), 'hb1': zeros((1, H1)), 'bn1': bn_pack(H1),
        'hw2': w((H1, H2)), 'hb2': zeros((1, H2)), 'bn2': bn_pack(H2),
        'hw3': hw3, 'hb3': zeros((1, LABELS_PAD)),
    }


# ---------------------------------------------------------------------------
# Forward pass: embedding gather in XLA (glue), everything else in one kernel
# ---------------------------------------------------------------------------
def mybert_forward(params, input_ids, attention_mask):
    # Data-dependent embedding gather stays in XLA (glue, no dense hot path).
    x = (params['tok_emb'][input_ids]
         + params['pos_emb'][None, :, :]
         + params['type_emb'][0][None, None, :])               # [B, S, H]
    xf = x.reshape(T, H)                                       # flat [B*S, H]
    mask_bias = (attention_mask - 1.0)[:, None, :] * 1e9       # additive mask [B, 1, S]

    inputs = [xf, mask_bias, params['emb_ln'],
              params['wqkv'], params['bqkv'], params['wo'], params['bo'], params['ln1'],
              params['w1'], params['b1'], params['w2'], params['b2'], params['ln2'],
              params['pool_w'], params['pool_b'],
              params['hw1'], params['hb1'], params['bn1'],
              params['hw2'], params['hb2'], params['bn2'],
              params['hw3'], params['hb3']]

    logits_pad = pl.pallas_call(
        fused_bert_kernel,
        out_shape=jax.ShapeDtypeStruct((B, LABELS_PAD), jnp.float32),
        in_specs=[VMEM_SPEC] * len(inputs),
        out_specs=VMEM_SPEC,
    )(*inputs)

    return logits_pad[:, :NUM_LABELS]                          # [B, NUM_LABELS]


if __name__ == "__main__":
    key = jax.random.PRNGKey(0)
    k_ids, k_params = jax.random.split(key)

    input_ids = jax.random.randint(k_ids, (B, S), 0, VOCAB, dtype=jnp.int32)
    attention_mask = jnp.ones((B, S), jnp.float32).at[1, 6:].set(0.0)  # pad tail of sample 1

    params = init_params(k_params)

    logits = jax.jit(mybert_forward)(params, input_ids, attention_mask)
    jax.block_until_ready(logits)

    assert logits.shape == (B, NUM_LABELS)
    assert bool(jnp.all(jnp.isfinite(logits)))
    print("KERNEL_OK")
</pallas_src>

<mosaic_0001>
module attributes {stable_mosaic.version = 11 : i64} {
  func.func @fused_bert_kernel(%arg0: memref<16x32xf32, #tpu.memory_space<vmem>>, %arg1: memref<2x1x8xf32, #tpu.memory_space<vmem>>, %arg2: memref<2x32xf32, #tpu.memory_space<vmem>>, %arg3: memref<2x32x96xf32, #tpu.memory_space<vmem>>, %arg4: memref<2x1x96xf32, #tpu.memory_space<vmem>>, %arg5: memref<2x32x32xf32, #tpu.memory_space<vmem>>, %arg6: memref<2x1x32xf32, #tpu.memory_space<vmem>>, %arg7: memref<2x2x32xf32, #tpu.memory_space<vmem>>, %arg8: memref<2x32x64xf32, #tpu.memory_space<vmem>>, %arg9: memref<2x1x64xf32, #tpu.memory_space<vmem>>, %arg10: memref<2x64x32xf32, #tpu.memory_space<vmem>>, %arg11: memref<2x1x32xf32, #tpu.memory_space<vmem>>, %arg12: memref<2x2x32xf32, #tpu.memory_space<vmem>>, %arg13: memref<32x32xf32, #tpu.memory_space<vmem>>, %arg14: memref<1x32xf32, #tpu.memory_space<vmem>>, %arg15: memref<32x256xf32, #tpu.memory_space<vmem>>, %arg16: memref<1x256xf32, #tpu.memory_space<vmem>>, %arg17: memref<4x256xf32, #tpu.memory_space<vmem>>, %arg18: memref<256x64xf32, #tpu.memory_space<vmem>>, %arg19: memref<1x64xf32, #tpu.memory_space<vmem>>, %arg20: memref<4x64xf32, #tpu.memory_space<vmem>>, %arg21: memref<64x128xf32, #tpu.memory_space<vmem>>, %arg22: memref<1x128xf32, #tpu.memory_space<vmem>>, %arg23: memref<2x128xf32, #tpu.memory_space<vmem>>) attributes {dimension_semantics = [], scalar_prefetch = 0 : i64, scratch_operands = 0 : i64, tpu.core_type = #tpu.core_type<tc>} {
    %c0 = arith.constant 0 : index
    %c0_0 = arith.constant 0 : index
    %0 = vector.load %arg2[%c0, %c0_0] : memref<2x32xf32, #tpu.memory_space<vmem>>, vector<2x32xf32>
    %c0_1 = arith.constant 0 : index
    %c0_2 = arith.constant 0 : index
    %1 = vector.load %arg0[%c0_1, %c0_2] : memref<16x32xf32, #tpu.memory_space<vmem>>, vector<16x32xf32>
    %2 = vector.extract_strided_slice %0 {offsets = [0, 0], sizes = [1, 32], strides = [1, 1]} : vector<2x32xf32> to vector<1x32xf32>
    %3 = vector.extract_strided_slice %0 {offsets = [1, 0], sizes = [1, 32], strides = [1, 1]} : vector<2x32xf32> to vector<1x32xf32>
    %cst = arith.constant dense<0.000000e+00> : vector<16xf32>
    %4 = vector.multi_reduction <add>, %1, %cst [1] : vector<16x32xf32> to vector<16xf32>
    %5 = vector.shape_cast %4 : vector<16xf32> to vector<16x1xf32>
    %cst_3 = arith.constant 3.200000e+01 : f32
    %6 = vector.broadcast %cst_3 : f32 to vector<16x1xf32>
    %7 = arith.divf %5, %6 : vector<16x1xf32>
    %8 = vector.broadcast %7 : vector<16x1xf32> to vector<16x32xf32>
    %9 = arith.subf %1, %8 : vector<16x32xf32>
    %10 = arith.mulf %9, %9 : vector<16x32xf32>
    %cst_4 = arith.constant dense<0.000000e+00> : vector<16xf32>
    %11 = vector.multi_reduction <add>, %10, %cst_4 [1] : vector<16x32xf32> to vector<16xf32>
    %12 = vector.shape_cast %11 : vector<16xf32> to vector<16x1xf32>
    %cst_5 = arith.constant 3.200000e+01 : f32
    %13 = vector.broadcast %cst_5 : f32 to vector<16x1xf32>
    %14 = arith.divf %12, %13 : vector<16x1xf32>
    %15 = vector.broadcast %7 : vector<16x1xf32> to vector<16x32xf32>
    %16 = arith.subf %1, %15 : vector<16x32xf32>
    %cst_6 = arith.constant 9.99999974E-6 : f32
    %17 = vector.broadcast %cst_6 : f32 to vector<16x1xf32>
    %18 = arith.addf %14, %17 : vector<16x1xf32>
    %19 = math.rsqrt %18 : vector<16x1xf32>
    %20 = vector.broadcast %19 : vector<16x1xf32> to vector<16x32xf32>
    %21 = arith.mulf %16, %20 : vector<16x32xf32>
    %22 = vector.broadcast %2 : vector<1x32xf32> to vector<16x32xf32>
    %23 = arith.mulf %21, %22 : vector<16x32xf32>
    %24 = vector.broadcast %3 : vector<1x32xf32> to vector<16x32xf32>
    %25 = arith.addf %23, %24 : vector<16x32xf32>
    %c0_7 = arith.constant 0 : index
    %c0_8 = arith.constant 0 : index
    %c0_9 = arith.constant 0 : index
    %26 = vector.load %arg1[%c0_7, %c0_8, %c0_9] : memref<2x1x8xf32, #tpu.memory_space<vmem>>, vector<2x1x8xf32>
    %c0_10 = arith.constant 0 : index
    %c0_11 = arith.constant 0 : index
    %c0_12 = arith.constant 0 : index
    %27 = vector.load %arg3[%c0_10, %c0_11, %c0_12] : memref<2x32x96xf32, #tpu.memory_space<vmem>>, vector<1x32x96xf32>
    %28 = vector.shape_cast %27 : vector<1x32x96xf32> to vector<32x96xf32>
    %cst_13 = arith.constant dense<0.000000e+00> : vector<16x96xf32>
    %29 = tpu.matmul %25, %28, %cst_13 {dimension_numbers = #tpu.dot_dimension_numbers<[1], [0], [0], [1], [0, 0, 1, 1], [], []>} : vector<16x32xf32>, vector<32x96xf32>, vector<16x96xf32> -> vector<16x96xf32>
    %c0_14 = arith.constant 0 : index
    %c0_15 = arith.constant 0 : index
    %c0_16 = arith.constant 0 : index
    %30 = vector.load %arg4[%c0_14, %c0_15, %c0_16] : memref<2x1x96xf32, #tpu.memory_space<vmem>>, vector<1x1x96xf32>
    %31 = vector.shape_cast %30 : vector<1x1x96xf32> to vector<1x96xf32>
    %32 = vector.broadcast %31 : vector<1x96xf32> to vector<16x96xf32>
    %33 = arith.addf %29, %32 : vector<16x96xf32>
    %34 = vector.shape_cast %33 : vector<16x96xf32> to vector<2x8x96xf32>
    %35 = vector.extract_strided_slice %34 {offsets = [0, 0, 0], sizes = [2, 8, 8], strides = [1, 1, 1]} : vector<2x8x96xf32> to vector<2x8x8xf32>
    %36 = vector.extract_strided_slice %34 {offsets = [0, 0, 32], sizes = [2, 8, 8], strides = [1, 1, 1]} : vector<2x8x96xf32> to vector<2x8x8xf32>
    %37 = vector.extract_strided_slice %34 {offsets = [0, 0, 64], sizes = [2, 8, 8], strides = [1, 1, 1]} : vector<2x8x96xf32> to vector<2x8x8xf32>
    "tpu.trace_start"() <{level = 10 : i32, message = "bqd,bkd->bqk"}> : () -> ()
    %cst_17 = arith.constant dense<0.000000e+00> : vector<2x8x8xf32>
    %38 = tpu.matmul %35, %36, %cst_17 {dimension_numbers = #tpu.dot_dimension_numbers<[2], [2], [1], [1], [0, 0, 0, 1, 1, 1], [0], [0]>} : vector<2x8x8xf32>, vector<2x8x8xf32>, vector<2x8x8xf32> -> vector<2x8x8xf32>
    "tpu.trace_stop"() : () -> ()
    %cst_18 = arith.constant 0.353553385 : f32
    %39 = vector.broadcast %cst_18 : f32 to vector<2x8x8xf32>
    %40 = arith.mulf %38, %39 : vector<2x8x8xf32>
    %41 = vector.broadcast %26 : vector<2x1x8xf32> to vector<2x8x8xf32>
    %42 = arith.addf %40, %41 : vector<2x8x8xf32>
    %cst_19 = arith.constant dense<0xFF800000> : vector<2x8xf32>
    %43 = vector.multi_reduction <maximumf>, %42, %cst_19 [2] : vector<2x8x8xf32> to vector<2x8xf32>
    %44 = vector.shape_cast %43 : vector<2x8xf32> to vector<2x8x1xf32>
    %45 = vector.broadcast %44 : vector<2x8x1xf32> to vector<2x8x8xf32>
    %46 = arith.subf %42, %45 : vector<2x8x8xf32>
    %47 = math.exp %46 : vector<2x8x8xf32>
    %cst_20 = arith.constant dense<0.000000e+00> : vector<2x8xf32>
    %48 = vector.multi_reduction <add>, %47, %cst_20 [2] : vector<2x8x8xf32> to vector<2x8xf32>
    %49 = vector.shape_cast %48 : vector<2x8xf32> to vector<2x8x1xf32>
    %50 = vector.broadcast %49 : vector<2x8x1xf32> to vector<2x8x8xf32>
    %51 = arith.divf %47, %50 : vector<2x8x8xf32>
    "tpu.trace_start"() <{level = 10 : i32, message = "bqk,bkd->bqd"}> : () -> ()
    %cst_21 = arith.constant dense<0.000000e+00> : vector<2x8x8xf32>
    %52 = tpu.matmul %51, %37, %cst_21 {dimension_numbers = #tpu.dot_dimension_numbers<[2], [1], [1], [2], [0, 0, 0, 1, 1, 2], [0], [0]>} : vector<2x8x8xf32>, vector<2x8x8xf32>, vector<2x8x8xf32> -> vector<2x8x8xf32>
    "tpu.trace_stop"() : () -> ()
    %53 = vector.extract_strided_slice %34 {offsets = [0, 0, 8], sizes = [2, 8, 8], strides = [1, 1, 1]} : vector<2x8x96xf32> to vector<2x8x8xf32>
    %54 = vector.extract_strided_slice %34 {offsets = [0, 0, 40], sizes = [2, 8, 8], strides = [1, 1, 1]} : vector<2x8x96xf32> to vector<2x8x8xf32>
    %55 = vector.extract_strided_slice %34 {offsets = [0, 0, 72], sizes = [2, 8, 8], strides = [1, 1, 1]} : vector<2x8x96xf32> to vector<2x8x8xf32>
    "tpu.trace_start"() <{level = 10 : i32, message = "bqd,bkd->bqk"}> : () -> ()
    %cst_22 = arith.constant dense<0.000000e+00> : vector<2x8x8xf32>
    %56 = tpu.matmul %53, %54, %cst_22 {dimension_numbers = #tpu.dot_dimension_numbers<[2], [2], [1], [1], [0, 0, 0, 1, 1, 1], [0], [0]>} : vector<2x8x8xf32>, vector<2x8x8xf32>, vector<2x8x8xf32> -> vector<2x8x8xf32>
    "tpu.trace_stop"() : () -> ()
    %cst_23 = arith.constant 0.353553385 : f32
    %57 = vector.broadcast %cst_23 : f32 to vector<2x8x8xf32>
    %58 = arith.mulf %56, %57 : vector<2x8x8xf32>
    %59 = vector.broadcast %26 : vector<2x1x8xf32> to vector<2x8x8xf32>
    %60 = arith.addf %58, %59 : vector<2x8x8xf32>
    %cst_24 = arith.constant dense<0xFF800000> : vector<2x8xf32>
    %61 = vector.multi_reduction <maximumf>, %60, %cst_24 [2] : vector<2x8x8xf32> to vector<2x8xf32>
    %62 = vector.shape_cast %61 : vector<2x8xf32> to vector<2x8x1xf32>
    %63 = vector.broadcast %62 : vector<2x8x1xf32> to vector<2x8x8xf32>
    %64 = arith.subf %60, %63 : vector<2x8x8xf32>
    %65 = math.exp %64 : vector<2x8x8xf32>
    %cst_25 = arith.constant dense<0.000000e+00> : vector<2x8xf32>
    %66 = vector.multi_reduction <add>, %65, %cst_25 [2] : vector<2x8x8xf32> to vector<2x8xf32>
    %67 = vector.shape_cast %66 : vector<2x8xf32> to vector<2x8x1xf32>
    %68 = vector.broadcast %67 : vector<2x8x1xf32> to vector<2x8x8xf32>
    %69 = arith.divf %65, %68 : vector<2x8x8xf32>
    "tpu.trace_start"() <{level = 10 : i32, message = "bqk,bkd->bqd"}> : () -> ()
    %cst_26 = arith.constant dense<0.000000e+00> : vector<2x8x8xf32>
    %70 = tpu.matmul %69, %55, %cst_26 {dimension_numbers = #tpu.dot_dimension_numbers<[2], [1], [1], [2], [0, 0, 0, 1, 1, 2], [0], [0]>} : vector<2x8x8xf32>, vector<2x8x8xf32>, vector<2x8x8xf32> -> vector<2x8x8xf32>
    "tpu.trace_stop"() : () -> ()
    %71 = vector.extract_strided_slice %34 {offsets = [0, 0, 16], sizes = [2, 8, 8], strides = [1, 1, 1]} : vector<2x8x96xf32> to vector<2x8x8xf32>
    %72 = vector.extract_strided_slice %34 {offsets = [0, 0, 48], sizes = [2, 8, 8], strides = [1, 1, 1]} : vector<2x8x96xf32> to vector<2x8x8xf32>
    %73 = vector.extract_strided_slice %34 {offsets = [0, 0, 80], sizes = [2, 8, 8], strides = [1, 1, 1]} : vector<2x8x96xf32> to vector<2x8x8xf32>
    "tpu.trace_start"() <{level = 10 : i32, message = "bqd,bkd->bqk"}> : () -> ()
    %cst_27 = arith.constant dense<0.000000e+00> : vector<2x8x8xf32>
    %74 = tpu.matmul %71, %72, %cst_27 {dimension_numbers = #tpu.dot_dimension_numbers<[2], [2], [1], [1], [0, 0, 0, 1, 1, 1], [0], [0]>} : vector<2x8x8xf32>, vector<2x8x8xf32>, vector<2x8x8xf32> -> vector<2x8x8xf32>
    "tpu.trace_stop"() : () -> ()
    %cst_28 = arith.constant 0.353553385 : f32
    %75 = vector.broadcast %cst_28 : f32 to vector<2x8x8xf32>
    %76 = arith.mulf %74, %75 : vector<2x8x8xf32>
    %77 = vector.broadcast %26 : vector<2x1x8xf32> to vector<2x8x8xf32>
    %78 = arith.addf %76, %77 : vector<2x8x8xf32>
    %cst_29 = arith.constant dense<0xFF800000> : vector<2x8xf32>
    %79 = vector.multi_reduction <maximumf>, %78, %cst_29 [2] : vector<2x8x8xf32> to vector<2x8xf32>
    %80 = vector.shape_cast %79 : vector<2x8xf32> to vector<2x8x1xf32>
    %81 = vector.broadcast %80 : vector<2x8x1xf32> to vector<2x8x8xf32>
    %82 = arith.subf %78, %81 : vector<2x8x8xf32>
    %83 = math.exp %82 : vector<2x8x8xf32>
    %cst_30 = arith.constant dense<0.000000e+00> : vector<2x8xf32>
    %84 = vector.multi_reduction <add>, %83, %cst_30 [2] : vector<2x8x8xf32> to vector<2x8xf32>
    %85 = vector.shape_cast %84 : vector<2x8xf32> to vector<2x8x1xf32>
    %86 = vector.broadcast %85 : vector<2x8x1xf32> to vector<2x8x8xf32>
    %87 = arith.divf %83, %86 : vector<2x8x8xf32>
    "tpu.trace_start"() <{level = 10 : i32, message = "bqk,bkd->bqd"}> : () -> ()
    %cst_31 = arith.constant dense<0.000000e+00> : vector<2x8x8xf32>
    %88 = tpu.matmul %87, %73, %cst_31 {dimension_numbers = #tpu.dot_dimension_numbers<[2], [1], [1], [2], [0, 0, 0, 1, 1, 2], [0], [0]>} : vector<2x8x8xf32>, vector<2x8x8xf32>, vector<2x8x8xf32> -> vector<2x8x8xf32>
    "tpu.trace_stop"() : () -> ()
    %89 = vector.extract_strided_slice %34 {offsets = [0, 0, 24], sizes = [2, 8, 8], strides = [1, 1, 1]} : vector<2x8x96xf32> to vector<2x8x8xf32>
    %90 = vector.extract_strided_slice %34 {offsets = [0, 0, 56], sizes = [2, 8, 8], strides = [1, 1, 1]} : vector<2x8x96xf32> to vector<2x8x8xf32>
    %91 = vector.extract_strided_slice %34 {offsets = [0, 0, 88], sizes = [2, 8, 8], strides = [1, 1, 1]} : vector<2x8x96xf32> to vector<2x8x8xf32>
    "tpu.trace_start"() <{level = 10 : i32, message = "bqd,bkd->bqk"}> : () -> ()
    %cst_32 = arith.constant dense<0.000000e+00> : vector<2x8x8xf32>
    %92 = tpu.matmul %89, %90, %cst_32 {dimension_numbers = #tpu.dot_dimension_numbers<[2], [2], [1], [1], [0, 0, 0, 1, 1, 1], [0], [0]>} : vector<2x8x8xf32>, vector<2x8x8xf32>, vector<2x8x8xf32> -> vector<2x8x8xf32>
    "tpu.trace_stop"() : () -> ()
    %cst_33 = arith.constant 0.353553385 : f32
    %93 = vector.broadcast %cst_33 : f32 to vector<2x8x8xf32>
    %94 = arith.mulf %92, %93 : vector<2x8x8xf32>
    %95 = vector.broadcast %26 : vector<2x1x8xf32> to vector<2x8x8xf32>
    %96 = arith.addf %94, %95 : vector<2x8x8xf32>
    %cst_34 = arith.constant dense<0xFF800000> : vector<2x8xf32>
    %97 = vector.multi_reduction <maximumf>, %96, %cst_34 [2] : vector<2x8x8xf32> to vector<2x8xf32>
    %98 = vector.shape_cast %97 : vector<2x8xf32> to vector<2x8x1xf32>
    %99 = vector.broadcast %98 : vector<2x8x1xf32> to vector<2x8x8xf32>
    %100 = arith.subf %96, %99 : vector<2x8x8xf32>
    %101 = math.exp %100 : vector<2x8x8xf32>
    %cst_35 = arith.constant dense<0.000000e+00> : vector<2x8xf32>
    %102 = vector.multi_reduction <add>, %101, %cst_35 [2] : vector<2x8x8xf32> to vector<2x8xf32>
    %103 = vector.shape_cast %102 : vector<2x8xf32> to vector<2x8x1xf32>
    %104 = vector.broadcast %103 : vector<2x8x1xf32> to vector<2x8x8xf32>
    %105 = arith.divf %101, %104 : vector<2x8x8xf32>
    "tpu.trace_start"() <{level = 10 : i32, message = "bqk,bkd->bqd"}> : () -> ()
    %cst_36 = arith.constant dense<0.000000e+00> : vector<2x8x8xf32>
    %106 = tpu.matmul %105, %91, %cst_36 {dimension_numbers = #tpu.dot_dimension_numbers<[2], [1], [1], [2], [0, 0, 0, 1, 1, 2], [0], [0]>} : vector<2x8x8xf32>, vector<2x8x8xf32>, vector<2x8x8xf32> -> vector<2x8x8xf32>
    "tpu.trace_stop"() : () -> ()
    %107 = tpu.concatenate %52, %70, %88, %106 in 2 : vector<2x8x8xf32>, vector<2x8x8xf32>, vector<2x8x8xf32>, vector<2x8x8xf32> -> vector<2x8x32xf32>
    %108 = vector.shape_cast %107 : vector<2x8x32xf32> to vector<16x32xf32>
    %c0_37 = arith.constant 0 : index
    %c0_38 = arith.constant 0 : index
    %c0_39 = arith.constant 0 : index
    %109 = vector.load %arg5[%c0_37, %c0_38, %c0_39] : memref<2x32x32xf32, #tpu.memory_space<vmem>>, vector<1x32x32xf32>
    %110 = vector.shape_cast %109 : vector<1x32x32xf32> to vector<32x32xf32>
    %cst_40 = arith.constant dense<0.000000e+00> : vector<16x32xf32>
    %111 = tpu.matmul %108, %110, %cst_40 {dimension_numbers = #tpu.dot_dimension_numbers<[1], [0], [0], [1], [0, 0, 1, 1], [], []>} : vector<16x32xf32>, vector<32x32xf32>, vector<16x32xf32> -> vector<16x32xf32>
    %c0_41 = arith.constant 0 : index
    %c0_42 = arith.constant 0 : index
    %c0_43 = arith.constant 0 : index
    %112 = vector.load %arg6[%c0_41, %c0_42, %c0_43] : memref<2x1x32xf32, #tpu.memory_space<vmem>>, vector<1x1x32xf32>
    %113 = vector.shape_cast %112 : vector<1x1x32xf32> to vector<1x32xf32>
    %114 = vector.broadcast %113 : vector<1x32xf32> to vector<16x32xf32>
    %115 = arith.addf %111, %114 : vector<16x32xf32>
    %c0_44 = arith.constant 0 : index
    %c0_45 = arith.constant 0 : index
    %c0_46 = arith.constant 0 : index
    %116 = vector.load %arg7[%c0_44, %c0_45, %c0_46] : memref<2x2x32xf32, #tpu.memory_space<vmem>>, vector<1x2x32xf32>
    %117 = vector.shape_cast %116 : vector<1x2x32xf32> to vector<2x32xf32>
    %118 = arith.addf %25, %115 : vector<16x32xf32>
    %119 = vector.extract_strided_slice %117 {offsets = [0, 0], sizes = [1, 32], strides = [1, 1]} : vector<2x32xf32> to vector<1x32xf32>
    %120 = vector.extract_strided_slice %117 {offsets = [1, 0], sizes = [1, 32], strides = [1, 1]} : vector<2x32xf32> to vector<1x32xf32>
    %cst_47 = arith.constant dense<0.000000e+00> : vector<16xf32>
    %121 = vector.multi_reduction <add>, %118, %cst_47 [1] : vector<16x32xf32> to vector<16xf32>
    %122 = vector.shape_cast %121 : vector<16xf32> to vector<16x1xf32>
    %cst_48 = arith.constant 3.200000e+01 : f32
    %123 = vector.broadcast %cst_48 : f32 to vector<16x1xf32>
    %124 = arith.divf %122, %123 : vector<16x1xf32>
    %125 = vector.broadcast %124 : vector<16x1xf32> to vector<16x32xf32>
    %126 = arith.subf %118, %125 : vector<16x32xf32>
    %127 = arith.mulf %126, %126 : vector<16x32xf32>
    %cst_49 = arith.constant dense<0.000000e+00> : vector<16xf32>
    %128 = vector.multi_reduction <add>, %127, %cst_49 [1] : vector<16x32xf32> to vector<16xf32>
    %129 = vector.shape_cast %128 : vector<16xf32> to vector<16x1xf32>
    %cst_50 = arith.constant 3.200000e+01 : f32
    %130 = vector.broadcast %cst_50 : f32 to vector<16x1xf32>
    %131 = arith.divf %129, %130 : vector<16x1xf32>
    %132 = vector.broadcast %124 : vector<16x1xf32> to vector<16x32xf32>
    %133 = arith.subf %118, %132 : vector<16x32xf32>
    %cst_51 = arith.constant 9.99999974E-6 : f32
    %134 = vector.broadcast %cst_51 : f32 to vector<16x1xf32>
    %135 = arith.addf %131, %134 : vector<16x1xf32>
    %136 = math.rsqrt %135 : vector<16x1xf32>
    %137 = vector.broadcast %136 : vector<16x1xf32> to vector<16x32xf32>
    %138 = arith.mulf %133, %137 : vector<16x32xf32>
    %139 = vector.broadcast %119 : vector<1x32xf32> to vector<16x32xf32>
    %140 = arith.mulf %138, %139 : vector<16x32xf32>
    %141 = vector.broadcast %120 : vector<1x32xf32> to vector<16x32xf32>
    %142 = arith.addf %140, %141 : vector<16x32xf32>
    %c0_52 = arith.constant 0 : index
    %c0_53 = arith.constant 0 : index
    %c0_54 = arith.constant 0 : index
    %143 = vector.load %arg8[%c0_52, %c0_53, %c0_54] : memref<2x32x64xf32, #tpu.memory_space<vmem>>, vector<1x32x64xf32>
    %144 = vector.shape_cast %143 : vector<1x32x64xf32> to vector<32x64xf32>
    %cst_55 = arith.constant dense<0.000000e+00> : vector<16x64xf32>
    %145 = tpu.matmul %142, %144, %cst_55 {dimension_numbers = #tpu.dot_dimension_numbers<[1], [0], [0], [1], [0, 0, 1, 1], [], []>} : vector<16x32xf32>, vector<32x64xf32>, vector<16x64xf32> -> vector<16x64xf32>
    %c0_56 = arith.constant 0 : index
    %c0_57 = arith.constant 0 : index
    %c0_58 = arith.constant 0 : index
    %146 = vector.load %arg9[%c0_56, %c0_57, %c0_58] : memref<2x1x64xf32, #tpu.memory_space<vmem>>, vector<1x1x64xf32>
    %147 = vector.shape_cast %146 : vector<1x1x64xf32> to vector<1x64xf32>
    %148 = vector.broadcast %147 : vector<1x64xf32> to vector<16x64xf32>
    %149 = arith.addf %145, %148 : vector<16x64xf32>
    %cst_59 = arith.constant 5.000000e-01 : f32
    %150 = vector.broadcast %cst_59 : f32 to vector<16x64xf32>
    %151 = arith.mulf %150, %149 : vector<16x64xf32>
    %cst_60 = arith.constant 4.471500e-02 : f32
    %152 = vector.broadcast %cst_60 : f32 to vector<16x64xf32>
    %153 = arith.mulf %152, %149 : vector<16x64xf32>
    %154 = arith.mulf %153, %149 : vector<16x64xf32>
    %155 = arith.mulf %154, %149 : vector<16x64xf32>
    %156 = arith.addf %149, %155 : vector<16x64xf32>
    %cst_61 = arith.constant 0.797884583 : f32
    %157 = vector.broadcast %cst_61 : f32 to vector<16x64xf32>
    %158 = arith.mulf %157, %156 : vector<16x64xf32>
    %159 = math.tanh %158 : vector<16x64xf32>
    %cst_62 = arith.constant 1.000000e+00 : f32
    %160 = vector.broadcast %cst_62 : f32 to vector<16x64xf32>
    %161 = arith.addf %160, %159 : vector<16x64xf32>
    %162 = arith.mulf %151, %161 : vector<16x64xf32>
    %c0_63 = arith.constant 0 : index
    %c0_64 = arith.constant 0 : index
    %c0_65 = arith.constant 0 : index
    %163 = vector.load %arg10[%c0_63, %c0_64, %c0_65] : memref<2x64x32xf32, #tpu.memory_space<vmem>>, vector<1x64x32xf32>
    %164 = vector.shape_cast %163 : vector<1x64x32xf32> to vector<64x32xf32>
    %cst_66 = arith.constant dense<0.000000e+00> : vector<16x32xf32>
    %165 = tpu.matmul %162, %164, %cst_66 {dimension_numbers = #tpu.dot_dimension_numbers<[1], [0], [0], [1], [0, 0, 1, 1], [], []>} : vector<16x64xf32>, vector<64x32xf32>, vector<16x32xf32> -> vector<16x32xf32>
    %c0_67 = arith.constant 0 : index
    %c0_68 = arith.constant 0 : index
    %c0_69 = arith.constant 0 : index
    %166 = vector.load %arg11[%c0_67, %c0_68, %c0_69] : memref<2x1x32xf32, #tpu.memory_space<vmem>>, vector<1x1x32xf32>
    %167 = vector.shape_cast %166 : vector<1x1x32xf32> to vector<1x32xf32>
    %168 = vector.broadcast %167 : vector<1x32xf32> to vector<16x32xf32>
    %169 = arith.addf %165, %168 : vector<16x32xf32>
    %c0_70 = arith.constant 0 : index
    %c0_71 = arith.constant 0 : index
    %c0_72 = arith.constant 0 : index
    %170 = vector.load %arg12[%c0_70, %c0_71, %c0_72] : memref<2x2x32xf32, #tpu.memory_space<vmem>>, vector<1x2x32xf32>
    %171 = vector.shape_cast %170 : vector<1x2x32xf32> to vector<2x32xf32>
    %172 = arith.addf %142, %169 : vector<16x32xf32>
    %173 = vector.extract_strided_slice %171 {offsets = [0, 0], sizes = [1, 32], strides = [1, 1]} : vector<2x32xf32> to vector<1x32xf32>
    %174 = vector.extract_strided_slice %171 {offsets = [1, 0], sizes = [1, 32], strides = [1, 1]} : vector<2x32xf32> to vector<1x32xf32>
    %cst_73 = arith.constant dense<0.000000e+00> : vector<16xf32>
    %175 = vector.multi_reduction <add>, %172, %cst_73 [1] : vector<16x32xf32> to vector<16xf32>
    %176 = vector.shape_cast %175 : vector<16xf32> to vector<16x1xf32>
    %cst_74 = arith.constant 3.200000e+01 : f32
    %177 = vector.broadcast %cst_74 : f32 to vector<16x1xf32>
    %178 = arith.divf %176, %177 : vector<16x1xf32>
    %179 = vector.broadcast %178 : vector<16x1xf32> to vector<16x32xf32>
    %180 = arith.subf %172, %179 : vector<16x32xf32>
    %181 = arith.mulf %180, %180 : vector<16x32xf32>
    %cst_75 = arith.constant dense<0.000000e+00> : vector<16xf32>
    %182 = vector.multi_reduction <add>, %181, %cst_75 [1] : vector<16x32xf32> to vector<16xf32>
    %183 = vector.shape_cast %182 : vector<16xf32> to vector<16x1xf32>
    %cst_76 = arith.constant 3.200000e+01 : f32
    %184 = vector.broadcast %cst_76 : f32 to vector<16x1xf32>
    %185 = arith.divf %183, %184 : vector<16x1xf32>
    %186 = vector.broadcast %178 : vector<16x1xf32> to vector<16x32xf32>
    %187 = arith.subf %172, %186 : vector<16x32xf32>
    %cst_77 = arith.constant 9.99999974E-6 : f32
    %188 = vector.broadcast %cst_77 : f32 to vector<16x1xf32>
    %189 = arith.addf %185, %188 : vector<16x1xf32>
    %190 = math.rsqrt %189 : vector<16x1xf32>
    %191 = vector.broadcast %190 : vector<16x1xf32> to vector<16x32xf32>
    %192 = arith.mulf %187, %191 : vector<16x32xf32>
    %193 = vector.broadcast %173 : vector<1x32xf32> to vector<16x32xf32>
    %194 = arith.mulf %192, %193 : vector<16x32xf32>
    %195 = vector.broadcast %174 : vector<1x32xf32> to vector<16x32xf32>
    %196 = arith.addf %194, %195 : vector<16x32xf32>
    %c1 = arith.constant 1 : index
    %c0_78 = arith.constant 0 : index
    %c0_79 = arith.constant 0 : index
    %197 = vector.load %arg3[%c1, %c0_78, %c0_79] : memref<2x32x96xf32, #tpu.memory_space<vmem>>, vector<1x32x96xf32>
    %198 = vector.shape_cast %197 : vector<1x32x96xf32> to vector<32x96xf32>
    %cst_80 = arith.constant dense<0.000000e+00> : vector<16x96xf32>
    %199 = tpu.matmul %196, %198, %cst_80 {dimension_numbers = #tpu.dot_dimension_numbers<[1], [0], [0], [1], [0, 0, 1, 1], [], []>} : vector<16x32xf32>, vector<32x96xf32>, vector<16x96xf32> -> vector<16x96xf32>
    %c1_81 = arith.constant 1 : index
    %c0_82 = arith.constant 0 : index
    %c0_83 = arith.constant 0 : index
    %200 = vector.load %arg4[%c1_81, %c0_82, %c0_83] : memref<2x1x96xf32, #tpu.memory_space<vmem>>, vector<1x1x96xf32>
    %201 = vector.shape_cast %200 : vector<1x1x96xf32> to vector<1x96xf32>
    %202 = vector.broadcast %201 : vector<1x96xf32> to vector<16x96xf32>
    %203 = arith.addf %199, %202 : vector<16x96xf32>
    %204 = vector.shape_cast %203 : vector<16x96xf32> to vector<2x8x96xf32>
    %205 = vector.extract_strided_slice %204 {offsets = [0, 0, 0], sizes = [2, 8, 8], strides = [1, 1, 1]} : vector<2x8x96xf32> to vector<2x8x8xf32>
    %206 = vector.extract_strided_slice %204 {offsets = [0, 0, 32], sizes = [2, 8, 8], strides = [1, 1, 1]} : vector<2x8x96xf32> to vector<2x8x8xf32>
    %207 = vector.extract_strided_slice %204 {offsets = [0, 0, 64], sizes = [2, 8, 8], strides = [1, 1, 1]} : vector<2x8x96xf32> to vector<2x8x8xf32>
    "tpu.trace_start"() <{level = 10 : i32, message = "bqd,bkd->bqk"}> : () -> ()
    %cst_84 = arith.constant dense<0.000000e+00> : vector<2x8x8xf32>
    %208 = tpu.matmul %205, %206, %cst_84 {dimension_numbers = #tpu.dot_dimension_numbers<[2], [2], [1], [1], [0, 0, 0, 1, 1, 1], [0], [0]>} : vector<2x8x8xf32>, vector<2x8x8xf32>, vector<2x8x8xf32> -> vector<2x8x8xf32>
    "tpu.trace_stop"() : () -> ()
    %cst_85 = arith.constant 0.353553385 : f32
    %209 = vector.broadcast %cst_85 : f32 to vector<2x8x8xf32>
    %210 = arith.mulf %208, %209 : vector<2x8x8xf32>
    %211 = vector.broadcast %26 : vector<2x1x8xf32> to vector<2x8x8xf32>
    %212 = arith.addf %210, %211 : vector<2x8x8xf32>
    %cst_86 = arith.constant dense<0xFF800000> : vector<2x8xf32>
    %213 = vector.multi_reduction <maximumf>, %212, %cst_86 [2] : vector<2x8x8xf32> to vector<2x8xf32>
    %214 = vector.shape_cast %213 : vector<2x8xf32> to vector<2x8x1xf32>
    %215 = vector.broadcast %214 : vector<2x8x1xf32> to vector<2x8x8xf32>
    %216 = arith.subf %212, %215 : vector<2x8x8xf32>
    %217 = math.exp %216 : vector<2x8x8xf32>
    %cst_87 = arith.constant dense<0.000000e+00> : vector<2x8xf32>
    %218 = vector.multi_reduction <add>, %217, %cst_87 [2] : vector<2x8x8xf32> to vector<2x8xf32>
    %219 = vector.shape_cast %218 : vector<2x8xf32> to vector<2x8x1xf32>
    %220 = vector.broadcast %219 : vector<2x8x1xf32> to vector<2x8x8xf32>
    %221 = arith.divf %217, %220 : vector<2x8x8xf32>
    "tpu.trace_start"() <{level = 10 : i32, message = "bqk,bkd->bqd"}> : () -> ()
    %cst_88 = arith.constant dense<0.000000e+00> : vector<2x8x8xf32>
    %222 = tpu.matmul %221, %207, %cst_88 {dimension_numbers = #tpu.dot_dimension_numbers<[2], [1], [1], [2], [0, 0, 0, 1, 1, 2], [0], [0]>} : vector<2x8x8xf32>, vector<2x8x8xf32>, vector<2x8x8xf32> -> vector<2x8x8xf32>
    "tpu.trace_stop"() : () -> ()
    %223 = vector.extract_strided_slice %204 {offsets = [0, 0, 8], sizes = [2, 8, 8], strides = [1, 1, 1]} : vector<2x8x96xf32> to vector<2x8x8xf32>
    %224 = vector.extract_strided_slice %204 {offsets = [0, 0, 40], sizes = [2, 8, 8], strides = [1, 1, 1]} : vector<2x8x96xf32> to vector<2x8x8xf32>
    %225 = vector.extract_strided_slice %204 {offsets = [0, 0, 72], sizes = [2, 8, 8], strides = [1, 1, 1]} : vector<2x8x96xf32> to vector<2x8x8xf32>
    "tpu.trace_start"() <{level = 10 : i32, message = "bqd,bkd->bqk"}> : () -> ()
    %cst_89 = arith.constant dense<0.000000e+00> : vector<2x8x8xf32>
    %226 = tpu.matmul %223, %224, %cst_89 {dimension_numbers = #tpu.dot_dimension_numbers<[2], [2], [1], [1], [0, 0, 0, 1, 1, 1], [0], [0]>} : vector<2x8x8xf32>, vector<2x8x8xf32>, vector<2x8x8xf32> -> vector<2x8x8xf32>
    "tpu.trace_stop"() : () -> ()
    %cst_90 = arith.constant 0.353553385 : f32
    %227 = vector.broadcast %cst_90 : f32 to vector<2x8x8xf32>
    %228 = arith.mulf %226, %227 : vector<2x8x8xf32>
    %229 = vector.broadcast %26 : vector<2x1x8xf32> to vector<2x8x8xf32>
    %230 = arith.addf %228, %229 : vector<2x8x8xf32>
    %cst_91 = arith.constant dense<0xFF800000> : vector<2x8xf32>
    %231 = vector.multi_reduction <maximumf>, %230, %cst_91 [2] : vector<2x8x8xf32> to vector<2x8xf32>
    %232 = vector.shape_cast %231 : vector<2x8xf32> to vector<2x8x1xf32>
    %233 = vector.broadcast %232 : vector<2x8x1xf32> to vector<2x8x8xf32>
    %234 = arith.subf %230, %233 : vector<2x8x8xf32>
    %235 = math.exp %234 : vector<2x8x8xf32>
    %cst_92 = arith.constant dense<0.000000e+00> : vector<2x8xf32>
    %236 = vector.multi_reduction <add>, %235, %cst_92 [2] : vector<2x8x8xf32> to vector<2x8xf32>
    %237 = vector.shape_cast %236 : vector<2x8xf32> to vector<2x8x1xf32>
    %238 = vector.broadcast %237 : vector<2x8x1xf32> to vector<2x8x8xf32>
    %239 = arith.divf %235, %238 : vector<2x8x8xf32>
    "tpu.trace_start"() <{level = 10 : i32, message = "bqk,bkd->bqd"}> : () -> ()
    %cst_93 = arith.constant dense<0.000000e+00> : vector<2x8x8xf32>
    %240 = tpu.matmul %239, %225, %cst_93 {dimension_numbers = #tpu.dot_dimension_numbers<[2], [1], [1], [2], [0, 0, 0, 1, 1, 2], [0], [0]>} : vector<2x8x8xf32>, vector<2x8x8xf32>, vector<2x8x8xf32> -> vector<2x8x8xf32>
    "tpu.trace_stop"() : () -> ()
    %241 = vector.extract_strided_slice %204 {offsets = [0, 0, 16], sizes = [2, 8, 8], strides = [1, 1, 1]} : vector<2x8x96xf32> to vector<2x8x8xf32>
    %242 = vector.extract_strided_slice %204 {offsets = [0, 0, 48], sizes = [2, 8, 8], strides = [1, 1, 1]} : vector<2x8x96xf32> to vector<2x8x8xf32>
    %243 = vector.extract_strided_slice %204 {offsets = [0, 0, 80], sizes = [2, 8, 8], strides = [1, 1, 1]} : vector<2x8x96xf32> to vector<2x8x8xf32>
    "tpu.trace_start"() <{level = 10 : i32, message = "bqd,bkd->bqk"}> : () -> ()
    %cst_94 = arith.constant dense<0.000000e+00> : vector<2x8x8xf32>
    %244 = tpu.matmul %241, %242, %cst_94 {dimension_numbers = #tpu.dot_dimension_numbers<[2], [2], [1], [1], [0, 0, 0, 1, 1, 1], [0], [0]>} : vector<2x8x8xf32>, vector<2x8x8xf32>, vector<2x8x8xf32> -> vector<2x8x8xf32>
    "tpu.trace_stop"() : () -> ()
    %cst_95 = arith.constant 0.353553385 : f32
    %245 = vector.broadcast %cst_95 : f32 to vector<2x8x8xf32>
    %246 = arith.mulf %244, %245 : vector<2x8x8xf32>
    %247 = vector.broadcast %26 : vector<2x1x8xf32> to vector<2x8x8xf32>
    %248 = arith.addf %246, %247 : vector<2x8x8xf32>
    %cst_96 = arith.constant dense<0xFF800000> : vector<2x8xf32>
    %249 = vector.multi_reduction <maximumf>, %248, %cst_96 [2] : vector<2x8x8xf32> to vector<2x8xf32>
    %250 = vector.shape_cast %249 : vector<2x8xf32> to vector<2x8x1xf32>
    %251 = vector.broadcast %250 : vector<2x8x1xf32> to vector<2x8x8xf32>
    %252 = arith.subf %248, %251 : vector<2x8x8xf32>
    %253 = math.exp %252 : vector<2x8x8xf32>
    %cst_97 = arith.constant dense<0.000000e+00> : vector<2x8xf32>
    %254 = vector.multi_reduction <add>, %253, %cst_97 [2] : vector<2x8x8xf32> to vector<2x8xf32>
    %255 = vector.shape_cast %254 : vector<2x8xf32> to vector<2x8x1xf32>
    %256 = vector.broadcast %255 : vector<2x8x1xf32> to vector<2x8x8xf32>
    %257 = arith.divf %253, %256 : vector<2x8x8xf32>
    "tpu.trace_start"() <{level = 10 : i32, message = "bqk,bkd->bqd"}> : () -> ()
    %cst_98 = arith.constant dense<0.000000e+00> : vector<2x8x8xf32>
    %258 = tpu.matmul %257, %243, %cst_98 {dimension_numbers = #tpu.dot_dimension_numbers<[2], [1], [1], [2], [0, 0, 0, 1, 1, 2], [0], [0]>} : vector<2x8x8xf32>, vector<2x8x8xf32>, vector<2x8x8xf32> -> vector<2x8x8xf32>
    "tpu.trace_stop"() : () -> ()
    %259 = vector.extract_strided_slice %204 {offsets = [0, 0, 24], sizes = [2, 8, 8], strides = [1, 1, 1]} : vector<2x8x96xf32> to vector<2x8x8xf32>
    %260 = vector.extract_strided_slice %204 {offsets = [0, 0, 56], sizes = [2, 8, 8], strides = [1, 1, 1]} : vector<2x8x96xf32> to vector<2x8x8xf32>
    %261 = vector.extract_strided_slice %204 {offsets = [0, 0, 88], sizes = [2, 8, 8], strides = [1, 1, 1]} : vector<2x8x96xf32> to vector<2x8x8xf32>
    "tpu.trace_start"() <{level = 10 : i32, message = "bqd,bkd->bqk"}> : () -> ()
    %cst_99 = arith.constant dense<0.000000e+00> : vector<2x8x8xf32>
    %262 = tpu.matmul %259, %260, %cst_99 {dimension_numbers = #tpu.dot_dimension_numbers<[2], [2], [1], [1], [0, 0, 0, 1, 1, 1], [0], [0]>} : vector<2x8x8xf32>, vector<2x8x8xf32>, vector<2x8x8xf32> -> vector<2x8x8xf32>
    "tpu.trace_stop"() : () -> ()
    %cst_100 = arith.constant 0.353553385 : f32
    %263 = vector.broadcast %cst_100 : f32 to vector<2x8x8xf32>
    %264 = arith.mulf %262, %263 : vector<2x8x8xf32>
    %265 = vector.broadcast %26 : vector<2x1x8xf32> to vector<2x8x8xf32>
    %266 = arith.addf %264, %265 : vector<2x8x8xf32>
    %cst_101 = arith.constant dense<0xFF800000> : vector<2x8xf32>
    %267 = vector.multi_reduction <maximumf>, %266, %cst_101 [2] : vector<2x8x8xf32> to vector<2x8xf32>
    %268 = vector.shape_cast %267 : vector<2x8xf32> to vector<2x8x1xf32>
    %269 = vector.broadcast %268 : vector<2x8x1xf32> to vector<2x8x8xf32>
    %270 = arith.subf %266, %269 : vector<2x8x8xf32>
    %271 = math.exp %270 : vector<2x8x8xf32>
    %cst_102 = arith.constant dense<0.000000e+00> : vector<2x8xf32>
    %272 = vector.multi_reduction <add>, %271, %cst_102 [2] : vector<2x8x8xf32> to vector<2x8xf32>
    %273 = vector.shape_cast %272 : vector<2x8xf32> to vector<2x8x1xf32>
    %274 = vector.broadcast %273 : vector<2x8x1xf32> to vector<2x8x8xf32>
    %275 = arith.divf %271, %274 : vector<2x8x8xf32>
    "tpu.trace_start"() <{level = 10 : i32, message = "bqk,bkd->bqd"}> : () -> ()
    %cst_103 = arith.constant dense<0.000000e+00> : vector<2x8x8xf32>
    %276 = tpu.matmul %275, %261, %cst_103 {dimension_numbers = #tpu.dot_dimension_numbers<[2], [1], [1], [2], [0, 0, 0, 1, 1, 2], [0], [0]>} : vector<2x8x8xf32>, vector<2x8x8xf32>, vector<2x8x8xf32> -> vector<2x8x8xf32>
    "tpu.trace_stop"() : () -> ()
    %277 = tpu.concatenate %222, %240, %258, %276 in 2 : vector<2x8x8xf32>, vector<2x8x8xf32>, vector<2x8x8xf32>, vector<2x8x8xf32> -> vector<2x8x32xf32>
    %278 = vector.shape_cast %277 : vector<2x8x32xf32> to vector<16x32xf32>
    %c1_104 = arith.constant 1 : index
    %c0_105 = arith.constant 0 : index
    %c0_106 = arith.constant 0 : index
    %279 = vector.load %arg5[%c1_104, %c0_105, %c0_106] : memref<2x32x32xf32, #tpu.memory_space<vmem>>, vector<1x32x32xf32>
    %280 = vector.shape_cast %279 : vector<1x32x32xf32> to vector<32x32xf32>
    %cst_107 = arith.constant dense<0.000000e+00> : vector<16x32xf32>
    %281 = tpu.matmul %278, %280, %cst_107 {dimension_numbers = #tpu.dot_dimension_numbers<[1], [0], [0], [1], [0, 0, 1, 1], [], []>} : vector<16x32xf32>, vector<32x32xf32>, vector<16x32xf32> -> vector<16x32xf32>
    %c1_108 = arith.constant 1 : index
    %c0_109 = arith.constant 0 : index
    %c0_110 = arith.constant 0 : index
    %282 = vector.load %arg6[%c1_108, %c0_109, %c0_110] : memref<2x1x32xf32, #tpu.memory_space<vmem>>, vector<1x1x32xf32>
    %283 = vector.shape_cast %282 : vector<1x1x32xf32> to vector<1x32xf32>
    %284 = vector.broadcast %283 : vector<1x32xf32> to vector<16x32xf32>
    %285 = arith.addf %281, %284 : vector<16x32xf32>
    %c1_111 = arith.constant 1 : index
    %c0_112 = arith.constant 0 : index
    %c0_113 = arith.constant 0 : index
    %286 = vector.load %arg7[%c1_111, %c0_112, %c0_113] : memref<2x2x32xf32, #tpu.memory_space<vmem>>, vector<1x2x32xf32>
    %287 = vector.shape_cast %286 : vector<1x2x32xf32> to vector<2x32xf32>
    %288 = arith.addf %196, %285 : vector<16x32xf32>
    %289 = vector.extract_strided_slice %287 {offsets = [0, 0], sizes = [1, 32], strides = [1, 1]} : vector<2x32xf32> to vector<1x32xf32>
    %290 = vector.extract_strided_slice %287 {offsets = [1, 0], sizes = [1, 32], strides = [1, 1]} : vector<2x32xf32> to vector<1x32xf32>
    %cst_114 = arith.constant dense<0.000000e+00> : vector<16xf32>
    %291 = vector.multi_reduction <add>, %288, %cst_114 [1] : vector<16x32xf32> to vector<16xf32>
    %292 = vector.shape_cast %291 : vector<16xf32> to vector<16x1xf32>
    %cst_115 = arith.constant 3.200000e+01 : f32
    %293 = vector.broadcast %cst_115 : f32 to vector<16x1xf32>
    %294 = arith.divf %292, %293 : vector<16x1xf32>
    %295 = vector.broadcast %294 : vector<16x1xf32> to vector<16x32xf32>
    %296 = arith.subf %288, %295 : vector<16x32xf32>
    %297 = arith.mulf %296, %296 : vector<16x32xf32>
    %cst_116 = arith.constant dense<0.000000e+00> : vector<16xf32>
    %298 = vector.multi_reduction <add>, %297, %cst_116 [1] : vector<16x32xf32> to vector<16xf32>
    %299 = vector.shape_cast %298 : vector<16xf32> to vector<16x1xf32>
    %cst_117 = arith.constant 3.200000e+01 : f32
    %300 = vector.broadcast %cst_117 : f32 to vector<16x1xf32>
    %301 = arith.divf %299, %300 : vector<16x1xf32>
    %302 = vector.broadcast %294 : vector<16x1xf32> to vector<16x32xf32>
    %303 = arith.subf %288, %302 : vector<16x32xf32>
    %cst_118 = arith.constant 9.99999974E-6 : f32
    %304 = vector.broadcast %cst_118 : f32 to vector<16x1xf32>
    %305 = arith.addf %301, %304 : vector<16x1xf32>
    %306 = math.rsqrt %305 : vector<16x1xf32>
    %307 = vector.broadcast %306 : vector<16x1xf32> to vector<16x32xf32>
    %308 = arith.mulf %303, %307 : vector<16x32xf32>
    %309 = vector.broadcast %289 : vector<1x32xf32> to vector<16x32xf32>
    %310 = arith.mulf %308, %309 : vector<16x32xf32>
    %311 = vector.broadcast %290 : vector<1x32xf32> to vector<16x32xf32>
    %312 = arith.addf %310, %311 : vector<16x32xf32>
    %c1_119 = arith.constant 1 : index
    %c0_120 = arith.constant 0 : index
    %c0_121 = arith.constant 0 : index
    %313 = vector.load %arg8[%c1_119, %c0_120, %c0_121] : memref<2x32x64xf32, #tpu.memory_space<vmem>>, vector<1x32x64xf32>
    %314 = vector.shape_cast %313 : vector<1x32x64xf32> to vector<32x64xf32>
    %cst_122 = arith.constant dense<0.000000e+00> : vector<16x64xf32>
    %315 = tpu.matmul %312, %314, %cst_122 {dimension_numbers = #tpu.dot_dimension_numbers<[1], [0], [0], [1], [0, 0, 1, 1], [], []>} : vector<16x32xf32>, vector<32x64xf32>, vector<16x64xf32> -> vector<16x64xf32>
    %c1_123 = arith.constant 1 : index
    %c0_124 = arith.constant 0 : index
    %c0_125 = arith.constant 0 : index
    %316 = vector.load %arg9[%c1_123, %c0_124, %c0_125] : memref<2x1x64xf32, #tpu.memory_space<vmem>>, vector<1x1x64xf32>
    %317 = vector.shape_cast %316 : vector<1x1x64xf32> to vector<1x64xf32>
    %318 = vector.broadcast %317 : vector<1x64xf32> to vector<16x64xf32>
    %319 = arith.addf %315, %318 : vector<16x64xf32>
    %cst_126 = arith.constant 5.000000e-01 : f32
    %320 = vector.broadcast %cst_126 : f32 to vector<16x64xf32>
    %321 = arith.mulf %320, %319 : vector<16x64xf32>
    %cst_127 = arith.constant 4.471500e-02 : f32
    %322 = vector.broadcast %cst_127 : f32 to vector<16x64xf32>
    %323 = arith.mulf %322, %319 : vector<16x64xf32>
    %324 = arith.mulf %323, %319 : vector<16x64xf32>
    %325 = arith.mulf %324, %319 : vector<16x64xf32>
    %326 = arith.addf %319, %325 : vector<16x64xf32>
    %cst_128 = arith.constant 0.797884583 : f32
    %327 = vector.broadcast %cst_128 : f32 to vector<16x64xf32>
    %328 = arith.mulf %327, %326 : vector<16x64xf32>
    %329 = math.tanh %328 : vector<16x64xf32>
    %cst_129 = arith.constant 1.000000e+00 : f32
    %330 = vector.broadcast %cst_129 : f32 to vector<16x64xf32>
    %331 = arith.addf %330, %329 : vector<16x64xf32>
    %332 = arith.mulf %321, %331 : vector<16x64xf32>
    %c1_130 = arith.constant 1 : index
    %c0_131 = arith.constant 0 : index
    %c0_132 = arith.constant 0 : index
    %333 = vector.load %arg10[%c1_130, %c0_131, %c0_132] : memref<2x64x32xf32, #tpu.memory_space<vmem>>, vector<1x64x32xf32>
    %334 = vector.shape_cast %333 : vector<1x64x32xf32> to vector<64x32xf32>
    %cst_133 = arith.constant dense<0.000000e+00> : vector<16x32xf32>
    %335 = tpu.matmul %332, %334, %cst_133 {dimension_numbers = #tpu.dot_dimension_numbers<[1], [0], [0], [1], [0, 0, 1, 1], [], []>} : vector<16x64xf32>, vector<64x32xf32>, vector<16x32xf32> -> vector<16x32xf32>
    %c1_134 = arith.constant 1 : index
    %c0_135 = arith.constant 0 : index
    %c0_136 = arith.constant 0 : index
    %336 = vector.load %arg11[%c1_134, %c0_135, %c0_136] : memref<2x1x32xf32, #tpu.memory_space<vmem>>, vector<1x1x32xf32>
    %337 = vector.shape_cast %336 : vector<1x1x32xf32> to vector<1x32xf32>
    %338 = vector.broadcast %337 : vector<1x32xf32> to vector<16x32xf32>
    %339 = arith.addf %335, %338 : vector<16x32xf32>
    %c1_137 = arith.constant 1 : index
    %c0_138 = arith.constant 0 : index
    %c0_139 = arith.constant 0 : index
    %340 = vector.load %arg12[%c1_137, %c0_138, %c0_139] : memref<2x2x32xf32, #tpu.memory_space<vmem>>, vector<1x2x32xf32>
    %341 = vector.shape_cast %340 : vector<1x2x32xf32> to vector<2x32xf32>
    %342 = arith.addf %312, %339 : vector<16x32xf32>
    %343 = vector.extract_strided_slice %341 {offsets = [0, 0], sizes = [1, 32], strides = [1, 1]} : vector<2x32xf32> to vector<1x32xf32>
    %344 = vector.extract_strided_slice %341 {offsets = [1, 0], sizes = [1, 32], strides = [1, 1]} : vector<2x32xf32> to vector<1x32xf32>
    %cst_140 = arith.constant dense<0.000000e+00> : vector<16xf32>
    %345 = vector.multi_reduction <add>, %342, %cst_140 [1] : vector<16x32xf32> to vector<16xf32>
    %346 = vector.shape_cast %345 : vector<16xf32> to vector<16x1xf32>
    %cst_141 = arith.constant 3.200000e+01 : f32
    %347 = vector.broadcast %cst_141 : f32 to vector<16x1xf32>
    %348 = arith.divf %346, %347 : vector<16x1xf32>
    %349 = vector.broadcast %348 : vector<16x1xf32> to vector<16x32xf32>
    %350 = arith.subf %342, %349 : vector<16x32xf32>
    %351 = arith.mulf %350, %350 : vector<16x32xf32>
    %cst_142 = arith.constant dense<0.000000e+00> : vector<16xf32>
    %352 = vector.multi_reduction <add>, %351, %cst_142 [1] : vector<16x32xf32> to vector<16xf32>
    %353 = vector.shape_cast %352 : vector<16xf32> to vector<16x1xf32>
    %cst_143 = arith.constant 3.200000e+01 : f32
    %354 = vector.broadcast %cst_143 : f32 to vector<16x1xf32>
    %355 = arith.divf %353, %354 : vector<16x1xf32>
    %356 = vector.broadcast %348 : vector<16x1xf32> to vector<16x32xf32>
    %357 = arith.subf %342, %356 : vector<16x32xf32>
    %cst_144 = arith.constant 9.99999974E-6 : f32
    %358 = vector.broadcast %cst_144 : f32 to vector<16x1xf32>
    %359 = arith.addf %355, %358 : vector<16x1xf32>
    %360 = math.rsqrt %359 : vector<16x1xf32>
    %361 = vector.broadcast %360 : vector<16x1xf32> to vector<16x32xf32>
    %362 = arith.mulf %357, %361 : vector<16x32xf32>
    %363 = vector.broadcast %343 : vector<1x32xf32> to vector<16x32xf32>
    %364 = arith.mulf %362, %363 : vector<16x32xf32>
    %365 = vector.broadcast %344 : vector<1x32xf32> to vector<16x32xf32>
    %366 = arith.addf %364, %365 : vector<16x32xf32>
    %367 = vector.extract_strided_slice %366 {offsets = [0, 0], sizes = [1, 32], strides = [1, 1]} : vector<16x32xf32> to vector<1x32xf32>
    %368 = vector.extract_strided_slice %366 {offsets = [8, 0], sizes = [1, 32], strides = [1, 1]} : vector<16x32xf32> to vector<1x32xf32>
    %369 = tpu.concatenate %367, %368 in 0 : vector<1x32xf32>, vector<1x32xf32> -> vector<2x32xf32>
    %c0_145 = arith.constant 0 : index
    %c0_146 = arith.constant 0 : index
    %370 = vector.load %arg13[%c0_145, %c0_146] : memref<32x32xf32, #tpu.memory_space<vmem>>, vector<32x32xf32>
    %cst_147 = arith.constant dense<0.000000e+00> : vector<2x32xf32>
    %371 = tpu.matmul %369, %370, %cst_147 {dimension_numbers = #tpu.dot_dimension_numbers<[1], [0], [0], [1], [0, 0, 1, 1], [], []>} : vector<2x32xf32>, vector<32x32xf32>, vector<2x32xf32> -> vector<2x32xf32>
    %c0_148 = arith.constant 0 : index
    %c0_149 = arith.constant 0 : index
    %372 = vector.load %arg14[%c0_148, %c0_149] : memref<1x32xf32, #tpu.memory_space<vmem>>, vector<1x32xf32>
    %373 = vector.broadcast %372 : vector<1x32xf32> to vector<2x32xf32>
    %374 = arith.addf %371, %373 : vector<2x32xf32>
    %375 = math.tanh %374 : vector<2x32xf32>
    %c0_150 = arith.constant 0 : index
    %c0_151 = arith.constant 0 : index
    %376 = vector.load %arg17[%c0_150, %c0_151] : memref<4x256xf32, #tpu.memory_space<vmem>>, vector<4x256xf32>
    %c0_152 = arith.constant 0 : index
    %c0_153 = arith.constant 0 : index
    %377 = vector.load %arg15[%c0_152, %c0_153] : memref<32x256xf32, #tpu.memory_space<vmem>>, vector<32x256xf32>
    %cst_154 = arith.constant dense<0.000000e+00> : vector<2x256xf32>
    %378 = tpu.matmul %375, %377, %cst_154 {dimension_numbers = #tpu.dot_dimension_numbers<[1], [0], [0], [1], [0, 0, 1, 1], [], []>} : vector<2x32xf32>, vector<32x256xf32>, vector<2x256xf32> -> vector<2x256xf32>
    %c0_155 = arith.constant 0 : index
    %c0_156 = arith.constant 0 : index
    %379 = vector.load %arg16[%c0_155, %c0_156] : memref<1x256xf32, #tpu.memory_space<vmem>>, vector<1x256xf32>
    %380 = vector.broadcast %379 : vector<1x256xf32> to vector<2x256xf32>
    %381 = arith.addf %378, %380 : vector<2x256xf32>
    %cst_157 = arith.constant 0.000000e+00 : f32
    %382 = vector.broadcast %cst_157 : f32 to vector<2x256xf32>
    %383 = arith.maximumf %381, %382 : vector<2x256xf32>
    %384 = math.absf %381 : vector<2x256xf32>
    %cst_158 = arith.constant 0.000000e+00 : f32
    %385 = vector.broadcast %cst_158 : f32 to vector<2x256xf32>
    %386 = arith.subf %385, %384 : vector<2x256xf32>
    %387 = math.exp %386 : vector<2x256xf32>
    %cst_159 = arith.constant 1.000000e+00 : f32
    %388 = vector.broadcast %cst_159 : f32 to vector<2x256xf32>
    %389 = arith.addf %388, %387 : vector<2x256xf32>
    %390 = math.log %389 : vector<2x256xf32>
    %391 = arith.addf %383, %390 : vector<2x256xf32>
    %392 = math.tanh %391 : vector<2x256xf32>
    %393 = arith.mulf %381, %392 : vector<2x256xf32>
    %394 = vector.extract_strided_slice %376 {offsets = [2, 0], sizes = [1, 256], strides = [1, 1]} : vector<4x256xf32> to vector<1x256xf32>
    %395 = vector.broadcast %394 : vector<1x256xf32> to vector<2x256xf32>
    %396 = arith.subf %393, %395 : vector<2x256xf32>
    %397 = vector.extract_strided_slice %376 {offsets = [3, 0], sizes = [1, 256], strides = [1, 1]} : vector<4x256xf32> to vector<1x256xf32>
    %cst_160 = arith.constant 9.99999974E-6 : f32
    %398 = vector.broadcast %cst_160 : f32 to vector<1x256xf32>
    %399 = arith.addf %397, %398 : vector<1x256xf32>
    %400 = math.rsqrt %399 : vector<1x256xf32>
    %401 = vector.broadcast %400 : vector<1x256xf32> to vector<2x256xf32>
    %402 = arith.mulf %396, %401 : vector<2x256xf32>
    %403 = vector.extract_strided_slice %376 {offsets = [0, 0], sizes = [1, 256], strides = [1, 1]} : vector<4x256xf32> to vector<1x256xf32>
    %404 = vector.broadcast %403 : vector<1x256xf32> to vector<2x256xf32>
    %405 = arith.mulf %402, %404 : vector<2x256xf32>
    %406 = vector.extract_strided_slice %376 {offsets = [1, 0], sizes = [1, 256], strides = [1, 1]} : vector<4x256xf32> to vector<1x256xf32>
    %407 = vector.broadcast %406 : vector<1x256xf32> to vector<2x256xf32>
    %408 = arith.addf %405, %407 : vector<2x256xf32>
    %c0_161 = arith.constant 0 : index
    %c0_162 = arith.constant 0 : index
    %409 = vector.load %arg20[%c0_161, %c0_162] : memref<4x64xf32, #tpu.memory_space<vmem>>, vector<4x64xf32>
    %c0_163 = arith.constant 0 : index
    %c0_164 = arith.constant 0 : index
    %410 = vector.load %arg18[%c0_163, %c0_164] : memref<256x64xf32, #tpu.memory_space<vmem>>, vector<256x64xf32>
    %cst_165 = arith.constant dense<0.000000e+00> : vector<2x64xf32>
    %411 = tpu.matmul %408, %410, %cst_165 {dimension_numbers = #tpu.dot_dimension_numbers<[1], [0], [0], [1], [0, 0, 1, 1], [], []>} : vector<2x256xf32>, vector<256x64xf32>, vector<2x64xf32> -> vector<2x64xf32>
    %c0_166 = arith.constant 0 : index
    %c0_167 = arith.constant 0 : index
    %412 = vector.load %arg19[%c0_166, %c0_167] : memref<1x64xf32, #tpu.memory_space<vmem>>, vector<1x64xf32>
    %413 = vector.broadcast %412 : vector<1x64xf32> to vector<2x64xf32>
    %414 = arith.addf %411, %413 : vector<2x64xf32>
    %cst_168 = arith.constant 0.000000e+00 : f32
    %415 = vector.broadcast %cst_168 : f32 to vector<2x64xf32>
    %416 = arith.maximumf %414, %415 : vector<2x64xf32>
    %417 = math.absf %414 : vector<2x64xf32>
    %cst_169 = arith.constant 0.000000e+00 : f32
    %418 = vector.broadcast %cst_169 : f32 to vector<2x64xf32>
    %419 = arith.subf %418, %417 : vector<2x64xf32>
    %420 = math.exp %419 : vector<2x64xf32>
    %cst_170 = arith.constant 1.000000e+00 : f32
    %421 = vector.broadcast %cst_170 : f32 to vector<2x64xf32>
    %422 = arith.addf %421, %420 : vector<2x64xf32>
    %423 = math.log %422 : vector<2x64xf32>
    %424 = arith.addf %416, %423 : vector<2x64xf32>
    %425 = math.tanh %424 : vector<2x64xf32>
    %426 = arith.mulf %414, %425 : vector<2x64xf32>
    %427 = vector.extract_strided_slice %409 {offsets = [2, 0], sizes = [1, 64], strides = [1, 1]} : vector<4x64xf32> to vector<1x64xf32>
    %428 = vector.broadcast %427 : vector<1x64xf32> to vector<2x64xf32>
    %429 = arith.subf %426, %428 : vector<2x64xf32>
    %430 = vector.extract_strided_slice %409 {offsets = [3, 0], sizes = [1, 64], strides = [1, 1]} : vector<4x64xf32> to vector<1x64xf32>
    %cst_171 = arith.constant 9.99999974E-6 : f32
    %431 = vector.broadcast %cst_171 : f32 to vector<1x64xf32>
    %432 = arith.addf %430, %431 : vector<1x64xf32>
    %433 = math.rsqrt %432 : vector<1x64xf32>
    %434 = vector.broadcast %433 : vector<1x64xf32> to vector<2x64xf32>
    %435 = arith.mulf %429, %434 : vector<2x64xf32>
    %436 = vector.extract_strided_slice %409 {offsets = [0, 0], sizes = [1, 64], strides = [1, 1]} : vector<4x64xf32> to vector<1x64xf32>
    %437 = vector.broadcast %436 : vector<1x64xf32> to vector<2x64xf32>
    %438 = arith.mulf %435, %437 : vector<2x64xf32>
    %439 = vector.extract_strided_slice %409 {offsets = [1, 0], sizes = [1, 64], strides = [1, 1]} : vector<4x64xf32> to vector<1x64xf32>
    %440 = vector.broadcast %439 : vector<1x64xf32> to vector<2x64xf32>
    %441 = arith.addf %438, %440 : vector<2x64xf32>
    %c0_172 = arith.constant 0 : index
    %c0_173 = arith.constant 0 : index
    %442 = vector.load %arg21[%c0_172, %c0_173] : memref<64x128xf32, #tpu.memory_space<vmem>>, vector<64x128xf32>
    %cst_174 = arith.constant dense<0.000000e+00> : vector<2x128xf32>
    %443 = tpu.matmul %441, %442, %cst_174 {dimension_numbers = #tpu.dot_dimension_numbers<[1], [0], [0], [1], [0, 0, 1, 1], [], []>} : vector<2x64xf32>, vector<64x128xf32>, vector<2x128xf32> -> vector<2x128xf32>
    %c0_175 = arith.constant 0 : index
    %c0_176 = arith.constant 0 : index
    %444 = vector.load %arg22[%c0_175, %c0_176] : memref<1x128xf32, #tpu.memory_space<vmem>>, vector<1x128xf32>
    %445 = vector.broadcast %444 : vector<1x128xf32> to vector<2x128xf32>
    %446 = arith.addf %443, %445 : vector<2x128xf32>
    %c0_177 = arith.constant 0 : index
    %c0_178 = arith.constant 0 : index
    %447 = vector.load %arg23[%c0_177, %c0_178] : memref<2x128xf32, #tpu.memory_space<vmem>>, vector<2x128xf32>
    tpu.vector_store %arg23[%c0_177, %c0_178], %446 {strides = array<i32>} : memref<2x128xf32, #tpu.memory_space<vmem>>, vector<2x128xf32>,
    return
  }
}

</mosaic_0001>

<llo_original>
// kernel: mybert_forward.1
$region0: #{mybert_forward.1}
  #allocation0 [shape = 'u32[]', space=smem, size = 0x4, offset = 0x4, fixed_abs, tag = 'smem constant byte address 0x4 - core index']
  #allocation1 [shape = 'u32[144,128]{1,0:T(1,128)}', space=vmem, size = 0x12000, scoped, tag = 'internal scratch']
  %s0 = inlined_call_operand.vmem [shape: f32[16,32], index: 0, kind: input, shape index: {}]
  %s1 = inlined_call_operand.vmem [shape: f32[2,1,8], index: 1, kind: input, shape index: {}]
  %s2 = inlined_call_operand.vmem [shape: f32[2,32], index: 2, kind: input, shape index: {}]
  %s3 = inlined_call_operand.vmem [shape: f32[2,32,96], index: 3, kind: input, shape index: {}]
  %s4 = inlined_call_operand.vmem [shape: f32[2,1,96], index: 4, kind: input, shape index: {}]
  %s5 = inlined_call_operand.vmem [shape: f32[2,32,32], index: 5, kind: input, shape index: {}]
  %s6 = inlined_call_operand.vmem [shape: f32[2,1,32], index: 6, kind: input, shape index: {}]
  %s7 = inlined_call_operand.vmem [shape: f32[2,2,32], index: 7, kind: input, shape index: {}]
  %s8 = inlined_call_operand.vmem [shape: f32[2,32,64], index: 8, kind: input, shape index: {}]
  %s9 = inlined_call_operand.vmem [shape: f32[2,1,64], index: 9, kind: input, shape index: {}]
  %s10 = inlined_call_operand.vmem [shape: f32[2,64,32], index: 10, kind: input, shape index: {}]
  %s11 = inlined_call_operand.vmem [shape: f32[2,1,32], index: 11, kind: input, shape index: {}]
  %s12 = inlined_call_operand.vmem [shape: f32[2,2,32], index: 12, kind: input, shape index: {}]
  %s13 = inlined_call_operand.vmem [shape: f32[32,32], index: 13, kind: input, shape index: {}]
  %s14 = inlined_call_operand.vmem [shape: f32[1,32], index: 14, kind: input, shape index: {}]
  %s15 = inlined_call_operand.vmem [shape: f32[32,256], index: 15, kind: input, shape index: {}]
  %s16 = inlined_call_operand.vmem [shape: f32[1,256], index: 16, kind: input, shape index: {}]
  %s17 = inlined_call_operand.vmem [shape: f32[4,256], index: 17, kind: input, shape index: {}]
  %s18 = inlined_call_operand.vmem [shape: f32[256,64], index: 18, kind: input, shape index: {}]
  %s19 = inlined_call_operand.vmem [shape: f32[1,64], index: 19, kind: input, shape index: {}]
  %s20 = inlined_call_operand.vmem [shape: f32[4,64], index: 20, kind: input, shape index: {}]
  %s21 = inlined_call_operand.vmem [shape: f32[64,128], index: 21, kind: input, shape index: {}]
  %s22 = inlined_call_operand.vmem [shape: f32[1,128], index: 22, kind: input, shape index: {}]
  %s23 = inlined_call_operand.hbm [shape: f32[2,128], index: 23, kind: output, shape index: {}]
  %s24 = sld [smem:[#allocation0]]
  $region102: #{mybert_forward.1} parent=0
    _
  %s26 = ssub.s32 1, %s24
  %s27 = scalar_select 0, %s26, %s24
  $region1: #{mybert_forward.1} parent=0
    #allocation2 [shape = 'u8[1024]{0}', space=vmem, size = 0x400, scoped, tag = 'output window, operand 0, single buffered']
    #allocation3 [shape = 's32[1]{0}', space=sflag, size = 0x4, scoped, tag = 'scoped memory for mybert_forward.1']
    %28 = vsyncpa [#allocation3], 0
    // Predicated region
    $region2: #{mybert_forward.1} parent=1 // pred_check
      _
    $region3: #{mybert_forward.1} parent=1 // pred_check_branch
      %30 = sbr.rel (0) target = $region5
    $region4: #{mybert_forward.1} parent=1 // pred_region
      _
    $region5: #{mybert_forward.1} parent=1 // pred_fallthru
      _
    // Predicated region
    $region6: #{mybert_forward.1} parent=1 // pred_check
      _
    $region7: #{mybert_forward.1} parent=1 // pred_check_branch
      %32 = sbr.rel (0) target = $region9
    $region8: #{mybert_forward.1} parent=1 // pred_region
      _
    $region9: #{mybert_forward.1} parent=1 // pred_fallthru
      _
    // Predicated region
    $region10: #{mybert_forward.1} parent=1 // pred_check
      _
    $region11: #{mybert_forward.1} parent=1 // pred_check_branch
      %34 = sbr.rel (0) target = $region13
    $region12: #{mybert_forward.1} parent=1 // pred_region
      _
    $region13: #{mybert_forward.1} parent=1 // pred_fallthru
      _
    // Predicated region
    $region14: #{mybert_forward.1} parent=1 // pred_check
      _
    $region15: #{mybert_forward.1} parent=1 // pred_check_branch
      %36 = sbr.rel (0) target = $region17
    $region16: #{mybert_forward.1} parent=1 // pred_region
      _
    $region17: #{mybert_forward.1} parent=1 // pred_fallthru
      _
    // Predicated region
    $region18: #{mybert_forward.1} parent=1 // pred_check
      _
    $region19: #{mybert_forward.1} parent=1 // pred_check_branch
      %38 = sbr.rel (0) target = $region21
    $region20: #{mybert_forward.1} parent=1 // pred_region
      _
    $region21: #{mybert_forward.1} parent=1 // pred_fallthru
      _
    // Predicated region
    $region22: #{mybert_forward.1} parent=1 // pred_check
      _
    $region23: #{mybert_forward.1} parent=1 // pred_check_branch
      %40 = sbr.rel (0) target = $region25
    $region24: #{mybert_forward.1} parent=1 // pred_region
      _
    $region25: #{mybert_forward.1} parent=1 // pred_fallthru
      _
    // Predicated region
    $region26: #{mybert_forward.1} parent=1 // pred_check
      _
    $region27: #{mybert_forward.1} parent=1 // pred_check_branch
      %42 = sbr.rel (0) target = $region29
    $region28: #{mybert_forward.1} parent=1 // pred_region
      _
    $region29: #{mybert_forward.1} parent=1 // pred_fallthru
      _
    // Predicated region
    $region30: #{mybert_forward.1} parent=1 // pred_check
      _
    $region31: #{mybert_forward.1} parent=1 // pred_check_branch
      %44 = sbr.rel (0) target = $region33
    $region32: #{mybert_forward.1} parent=1 // pred_region
      _
    $region33: #{mybert_forward.1} parent=1 // pred_fallthru
      _
    // Predicated region
    $region34: #{mybert_forward.1} parent=1 // pred_check
      _
    $region35: #{mybert_forward.1} parent=1 // pred_check_branch
      %46 = sbr.rel (0) target = $region37
    $region36: #{mybert_forward.1} parent=1 // pred_region
      _
    $region37: #{mybert_forward.1} parent=1 // pred_fallthru
      _
    // Predicated region
    $region38: #{mybert_forward.1} parent=1 // pred_check
      _
    $region39: #{mybert_forward.1} parent=1 // pred_check_branch
      %48 = sbr.rel (0) target = $region41
    $region40: #{mybert_forward.1} parent=1 // pred_region
      _
    $region41: #{mybert_forward.1} parent=1 // pred_fallthru
      _
    // Predicated region
    $region42: #{mybert_forward.1} parent=1 // pred_check
      _
    $region43: #{mybert_forward.1} parent=1 // pred_check_branch
      %50 = sbr.rel (0) target = $region45
    $region44: #{mybert_forward.1} parent=1 // pred_region
      _
    $region45: #{mybert_forward.1} parent=1 // pred_fallthru
      _
    // Predicated region
    $region46: #{mybert_forward.1} parent=1 // pred_check
      _
    $region47: #{mybert_forward.1} parent=1 // pred_check_branch
      %52 = sbr.rel (0) target = $region49
    $region48: #{mybert_forward.1} parent=1 // pred_region
      _
    $region49: #{mybert_forward.1} parent=1 // pred_fallthru
      _
    // Predicated region
    $region50: #{mybert_forward.1} parent=1 // pred_check
      _
    $region51: #{mybert_forward.1} parent=1 // pred_check_branch
      %54 = sbr.rel (0) target = $region53
    $region52: #{mybert_forward.1} parent=1 // pred_region
      _
    $region53: #{mybert_forward.1} parent=1 // pred_fallthru
      _
    // Predicated region
    $region54: #{mybert_forward.1} parent=1 // pred_check
      _
    $region55: #{mybert_forward.1} parent=1 // pred_check_branch
      %56 = sbr.rel (0) target = $region57
    $region56: #{mybert_forward.1} parent=1 // pred_region
      _
    $region57: #{mybert_forward.1} parent=1 // pred_fallthru
      _
    // Predicated region
    $region58: #{mybert_forward.1} parent=1 // pred_check
      _
    $region59: #{mybert_forward.1} parent=1 // pred_check_branch
      %58 = sbr.rel (0) target = $region61
    $region60: #{mybert_forward.1} parent=1 // pred_region
      _
    $region61: #{mybert_forward.1} parent=1 // pred_fallthru
      _
    // Predicated region
    $region62: #{mybert_forward.1} parent=1 // pred_check
      _
    $region63: #{mybert_forward.1} parent=1 // pred_check_branch
      %60 = sbr.rel (0) target = $region65
    $region64: #{mybert_forward.1} parent=1 // pred_region
      _
    $region65: #{mybert_forward.1} parent=1 // pred_fallthru
      _
    // Predicated region
    $region66: #{mybert_forward.1} parent=1 // pred_check
      _
    $region67: #{mybert_forward.1} parent=1 // pred_check_branch
      %62 = sbr.rel (0) target = $region69
    $region68: #{mybert_forward.1} parent=1 // pred_region
      _
    $region69: #{mybert_forward.1} parent=1 // pred_fallthru
      _
    // Predicated region
    $region70: #{mybert_forward.1} parent=1 // pred_check
      _
    $region71: #{mybert_forward.1} parent=1 // pred_check_branch
      %64 = sbr.rel (0) target = $region73
    $region72: #{mybert_forward.1} parent=1 // pred_region
      _
    $region73: #{mybert_forward.1} parent=1 // pred_fallthru
      _
    // Predicated region
    $region74: #{mybert_forward.1} parent=1 // pred_check
      _
    $region75: #{mybert_forward.1} parent=1 // pred_check_branch
      %66 = sbr.rel (0) target = $region77
    $region76: #{mybert_forward.1} parent=1 // pred_region
      _
    $region77: #{mybert_forward.1} parent=1 // pred_fallthru
      _
    // Predicated region
    $region78: #{mybert_forward.1} parent=1 // pred_check
      _
    $region79: #{mybert_forward.1} parent=1 // pred_check_branch
      %68 = sbr.rel (0) target = $region81
    $region80: #{mybert_forward.1} parent=1 // pred_region
      _
    $region81: #{mybert_forward.1} parent=1 // pred_fallthru
      _
    // Predicated region
    $region82: #{mybert_forward.1} parent=1 // pred_check
      _
    $region83: #{mybert_forward.1} parent=1 // pred_check_branch
      %70 = sbr.rel (0) target = $region85
    $region84: #{mybert_forward.1} parent=1 // pred_region
      _
    $region85: #{mybert_forward.1} parent=1 // pred_fallthru
      _
    // Predicated region
    $region86: #{mybert_forward.1} parent=1 // pred_check
      _
    $region87: #{mybert_forward.1} parent=1 // pred_check_branch
      %72 = sbr.rel (0) target = $region89
    $region88: #{mybert_forward.1} parent=1 // pred_region
      _
    $region89: #{mybert_forward.1} parent=1 // pred_fallthru
      _
    // Predicated region
    $region90: #{mybert_forward.1} parent=1 // pred_check
      _
    $region91: #{mybert_forward.1} parent=1 // pred_check_branch
      %74 = sbr.rel (0) target = $region93
    $region92: #{mybert_forward.1} parent=1 // pred_region
      _
    $region93: #{mybert_forward.1} parent=1 // pred_fallthru
      _
    %v75 = vld [vmem:[%s2] sm:$0x3]
    %v76 = vld [vmem:[%s0] sm:$0xff]
    %v77 = vld [vmem:[%s0 + $0x8] sm:$0xff]
    %vm78 = vcmask 261120
    %v79 = vsel %vm78, %v76, 0.0
    %80 = vadd.xlane.f32.xlu0 %v79
    %v81 = vpop.xlane.xlu0 %80
    %v82 = vsel %vm78, %v77, 0.0
    %83 = vadd.xlane.f32.xlu0 %v82
    %v84 = vpop.xlane.xlu0 %83
    %v85 = vrcp.pop 32.0
    %v86 = vmul.f32 %v81, %v85
    %v87 = vmul.f32 %v84, %v85
    %v88 = vsub.f32 %v76, %v86
    %v89 = vsub.f32 %v77, %v87
    %v90 = vmul.f32 %v88, %v88
    %v91 = vmul.f32 %v89, %v89
    %v92 = vsel %vm78, %v90, 0.0
    %93 = vadd.xlane.f32.xlu0 %v92
    %v94 = vpop.xlane.xlu0 %93
    %v95 = vsel %vm78, %v91, 0.0
    %96 = vadd.xlane.f32.xlu0 %v95
    %v97 = vpop.xlane.xlu0 %96
    %v98 = vmul.f32 %v94, %v85
    %v99 = vmul.f32 %v97, %v85
    %v100 = vadd.f32 %v98, 1e-05
    %v101 = vadd.f32 %v99, 1e-05
    %v102 = vrsqrt.pop %v100
    %v103 = vrsqrt.pop %v101
    %v104 = vmul.f32 %v88, %v102
    %v105 = vmul.f32 %v89, %v103
    %v106 = vlaneseq
    %v107 = vshrl.u32 %v106, 7
    %v108 = vsub.s32 0, %v107
    %v109 = vrot.slane %v75, %v108
    %v110 = vmul.f32 %v104, %v109
    %v111 = vmul.f32 %v105, %v109
    %v112 = vlaneseq
    %v113 = vshrl.u32 %v112, 7
    %v114 = vsub.s32 1, %v113
    %v115 = vrot.slane %v75, %v114
    %v116 = vadd.f32 %v110, %v115
    %v117 = vadd.f32 %v111, %v115
    %v118 = vld [vmem:[%s1] sm:$0x1]
    %v119 = vld [vmem:[%s1 + $0x1] sm:$0x1]
    %v120 = vld [vmem:[%s3] sm:$0xff]
    %v121 = vld [vmem:[%s3 + $0x8] sm:$0xff]
    %v122 = vld [vmem:[%s3 + $0x10] sm:$0xff]
    %v123 = vld [vmem:[%s3 + $0x18] sm:$0xff]
    %v124 = vld [vmem:[%s4] sm:$0x1]
    %v126 = vlaneseq
    %v127 = vshrl.u32 %v126, 7
    %v128 = vsub.s32 0, %v127
    %v129 = vrot.slane %v124, %v128
    %v132 = vsel %vm78, %v116, 0
    %v135 = vsel %vm78, %v117, 0
    %137 = vmatprep.subr.mxu0 0.0
    %138 = vmatpush1.msra.mxu0 0.0
    %139 = vmatprep.subr.mxu0 0.0
    %140 = vmatpush1.msra.mxu0 0.0
    %141 = vmatprep.subr.mxu0 0.0
    %142 = vmatpush1.msra.mxu0 0.0
    %143 = vmatprep.subr.mxu0 0.0
    %144 = vmatpush1.msra.mxu0 0.0
    %145 = vmatprep.subr.mxu0 0.0
    %146 = vmatpush1.msra.mxu0 0.0
    %147 = vmatprep.subr.mxu0 0.0
    %148 = vmatpush1.msra.mxu0 0.0
    %149 = vmatprep.subr.mxu0 0.0
    %150 = vmatpush1.msra.mxu0 0.0
    %151 = vmatprep.subr.mxu0 0.0
    %152 = vmatpush1.msra.mxu0 0.0
    %153 = vmatprep.subr.mxu0 0.0
    %154 = vmatpush1.msra.mxu0 0.0
    %155 = vmatprep.subr.mxu0 0.0
    %156 = vmatpush1.msra.mxu0 0.0
    %157 = vmatprep.subr.mxu0 0.0
    %158 = vmatpush1.msra.mxu0 0.0
    %159 = vmatprep.subr.mxu0 0.0
    %160 = vmatpush1.msra.mxu0 0.0
    %161 = vmatprep.subr.mxu0 0.0
    %162 = vmatpush1.msra.mxu0 %v123
    %163 = vmatprep.subr.mxu0 0.0
    %164 = vmatpush1.msra.mxu0 %v122
    %165 = vmatprep.subr.mxu0 0.0
    %166 = vmatpush1.msra.mxu0 %v121
    %167 = vmatprep.subr.mxu0 0.0
    %168 = vmatpush1.msra.mxu0 %v120
    %169 = vmatprep.subr.mxu0 0.0
    %170 = vmatpush2.msra.mxu0 0.0
    %171 = vmatprep.subr.mxu0 0.0
    %172 = vmatpush2.msra.mxu0 0.0
    %173 = vmatprep.subr.mxu0 0.0
    %174 = vmatpush2.msra.mxu0 0.0
    %175 = vmatprep.subr.mxu0 0.0
    %176 = vmatpush2.msra.mxu0 0.0
    %177 = vmatprep.subr.mxu0 0.0
    %178 = vmatpush2.msra.mxu0 0.0
    %179 = vmatprep.subr.mxu0 0.0
    %180 = vmatpush2.msra.mxu0 0.0
    %181 = vmatprep.subr.mxu0 0.0
    %182 = vmatpush2.msra.mxu0 0.0
    %183 = vmatprep.subr.mxu0 0.0
    %184 = vmatpush2.msra.mxu0 0.0
    %185 = vmatprep.subr.mxu0 0.0
    %186 = vmatpush2.msra.mxu0 0.0
    %187 = vmatprep.subr.mxu0 0.0
    %188 = vmatpush2.msra.mxu0 0.0
    %189 = vmatprep.subr.mxu0 0.0
    %190 = vmatpush2.msra.mxu0 0.0
    %191 = vmatprep.subr.mxu0 0.0
    %192 = vmatpush2.msra.mxu0 0.0
    %193 = vmatprep.subr.mxu0 0.0
    %194 = vmatpush2.msra.mxu0 0.0
    %195 = vmatprep.subr.mxu0 0.0
    %196 = vmatpush2.msra.mxu0 0.0
    %197 = vmatprep.subr.mxu0 0.0
    %198 = vmatpush2.msra.mxu0 0.0
    %199 = vmatprep.subr.mxu0 0.0
    %200 = vmatpush2.msra.mxu0 0.0
    %201 = vmatprep.mubr.f32.mxu0 0.0
    %202 = vmatmul.mubr.f32.gmra.mxu0 %v132
    %v203 = vpop.f32.mrf.mxu0
    %v204 = vadd.f32 %v129, %v203
    %v205 = vpop.f32.mrf.mxu0
    %206 = vmatprep.mubr.f32.mxu0 0.0
    %207 = vmatmul.mubr.f32.gmra.mxu0 %v135
    %v208 = vpop.f32.mrf.mxu0
    %v209 = vadd.f32 %v129, %v208
    %v210 = vpop.f32.mrf.mxu0
    %211 = vdwg.mxu0
    %213 = vrot.lane.b32.xlu0 %v204, 96
    %v214 = vpop.permute.xlu0 %213
    %vm215 = vcmask 64512
    %v216 = vsel %vm215, %v204, 0
    %v218 = vsel %vm215, %v214, 0
    %220 = vmatprep.subr.mxu0 0.0
    %221 = vmatpush1.xpose.msra.mxu0 0.0
    %222 = vmatprep.subr.mxu0 0.0
    %223 = vmatpush1.xpose.msra.mxu0 0.0
    %224 = vmatprep.subr.mxu0 0.0
    %225 = vmatpush1.xpose.msra.mxu0 0.0
    %226 = vmatprep.subr.mxu0 0.0
    %227 = vmatpush1.xpose.msra.mxu0 0.0
    %228 = vmatprep.subr.mxu0 0.0
    %229 = vmatpush1.xpose.msra.mxu0 0.0
    %230 = vmatprep.subr.mxu0 0.0
    %231 = vmatpush1.xpose.msra.mxu0 0.0
    %232 = vmatprep.subr.mxu0 0.0
    %233 = vmatpush1.xpose.msra.mxu0 0.0
    %234 = vmatprep.subr.mxu0 0.0
    %235 = vmatpush1.xpose.msra.mxu0 0.0
    %236 = vmatprep.subr.mxu0 0.0
    %237 = vmatpush1.xpose.msra.mxu0 0.0
    %238 = vmatprep.subr.mxu0 0.0
    %239 = vmatpush1.xpose.msra.mxu0 0.0
    %240 = vmatprep.subr.mxu0 0.0
    %241 = vmatpush1.xpose.msra.mxu0 0.0
    %242 = vmatprep.subr.mxu0 0.0
    %243 = vmatpush1.xpose.msra.mxu0 0.0
    %244 = vmatprep.subr.mxu0 0.0
    %245 = vmatpush1.xpose.msra.mxu0 0.0
    %246 = vmatprep.subr.mxu0 0.0
    %247 = vmatpush1.xpose.msra.mxu0 0.0
    %248 = vmatprep.subr.mxu0 0.0
    %249 = vmatpush1.xpose.msra.mxu0 0.0
    %250 = vmatprep.subr.mxu0 0.0
    %251 = vmatpush1.xpose.msra.mxu0 %v218
    %252 = vmatprep.subr.mxu0 0.0
    %253 = vmatpush2.xpose.msra.mxu0 0.0
    %254 = vmatprep.subr.mxu0 0.0
    %255 = vmatpush2.xpose.msra.mxu0 0.0
    %256 = vmatprep.subr.mxu0 0.0
    %257 = vmatpush2.xpose.msra.mxu0 0.0
    %258 = vmatprep.subr.mxu0 0.0
    %259 = vmatpush2.xpose.msra.mxu0 0.0
    %260 = vmatprep.subr.mxu0 0.0
    %261 = vmatpush2.xpose.msra.mxu0 0.0
    %262 = vmatprep.subr.mxu0 0.0
    %263 = vmatpush2.xpose.msra.mxu0 0.0
    %264 = vmatprep.subr.mxu0 0.0
    %265 = vmatpush2.xpose.msra.mxu0 0.0
    %266 = vmatprep.subr.mxu0 0.0
    %267 = vmatpush2.xpose.msra.mxu0 0.0
    %268 = vmatprep.subr.mxu0 0.0
    %269 = vmatpush2.xpose.msra.mxu0 0.0
    %270 = vmatprep.subr.mxu0 0.0
    %271 = vmatpush2.xpose.msra.mxu0 0.0
    %272 = vmatprep.subr.mxu0 0.0
    %273 = vmatpush2.xpose.msra.mxu0 0.0
    %274 = vmatprep.subr.mxu0 0.0
    %275 = vmatpush2.xpose.msra.mxu0 0.0
    %276 = vmatprep.subr.mxu0 0.0
    %277 = vmatpush2.xpose.msra.mxu0 0.0
    %278 = vmatprep.subr.mxu0 0.0
    %279 = vmatpush2.xpose.msra.mxu0 0.0
    %280 = vmatprep.subr.mxu0 0.0
    %281 = vmatpush2.xpose.msra.mxu0 0.0
    %282 = vmatprep.subr.mxu0 0.0
    %283 = vmatpush2.xpose.msra.mxu0 0.0
    %284 = vmatprep.mubr.f32.mxu0 0.0
    %285 = vmatmul.mubr.f32.gmra.mxu0 %v216
    %v286 = vpop.f32.mrf.mxu0
    %v287 = vadd.f32 0.0, %v286
    %v288 = vpop.f32.mrf.mxu0
    %289 = vdwg.mxu0
    %291 = vrot.lane.b32.xlu0 %v209, 96
    %v292 = vpop.permute.xlu0 %291
    %v293 = vsel %vm215, %v209, 0
    %v295 = vsel %vm215, %v292, 0
    %297 = vmatprep.subr.mxu0 0.0
    %298 = vmatpush1.xpose.msra.mxu0 0.0
    %299 = vmatprep.subr.mxu0 0.0
    %300 = vmatpush1.xpose.msra.mxu0 0.0
    %301 = vmatprep.subr.mxu0 0.0
    %302 = vmatpush1.xpose.msra.mxu0 0.0
    %303 = vmatprep.subr.mxu0 0.0
    %304 = vmatpush1.xpose.msra.mxu0 0.0
    %305 = vmatprep.subr.mxu0 0.0
    %306 = vmatpush1.xpose.msra.mxu0 0.0
    %307 = vmatprep.subr.mxu0 0.0
    %308 = vmatpush1.xpose.msra.mxu0 0.0
    %309 = vmatprep.subr.mxu0 0.0
    %310 = vmatpush1.xpose.msra.mxu0 0.0
    %311 = vmatprep.subr.mxu0 0.0
    %312 = vmatpush1.xpose.msra.mxu0 0.0
    %313 = vmatprep.subr.mxu0 0.0
    %314 = vmatpush1.xpose.msra.mxu0 0.0
    %315 = vmatprep.subr.mxu0 0.0
    %316 = vmatpush1.xpose.msra.mxu0 0.0
    %317 = vmatprep.subr.mxu0 0.0
    %318 = vmatpush1.xpose.msra.mxu0 0.0
    %319 = vmatprep.subr.mxu0 0.0
    %320 = vmatpush1.xpose.msra.mxu0 0.0
    %321 = vmatprep.subr.mxu0 0.0
    %322 = vmatpush1.xpose.msra.mxu0 0.0
    %323 = vmatprep.subr.mxu0 0.0
    %324 = vmatpush1.xpose.msra.mxu0 0.0
    %325 = vmatprep.subr.mxu0 0.0
    %326 = vmatpush1.xpose.msra.mxu0 0.0
    %327 = vmatprep.subr.mxu0 0.0
    %328 = vmatpush1.xpose.msra.mxu0 %v295
    %329 = vmatprep.subr.mxu0 0.0
    %330 = vmatpush2.xpose.msra.mxu0 0.0
    %331 = vmatprep.subr.mxu0 0.0
    %332 = vmatpush2.xpose.msra.mxu0 0.0
    %333 = vmatprep.subr.mxu0 0.0
    %334 = vmatpush2.xpose.msra.mxu0 0.0
    %335 = vmatprep.subr.mxu0 0.0
    %336 = vmatpush2.xpose.msra.mxu0 0.0
    %337 = vmatprep.subr.mxu0 0.0
    %338 = vmatpush2.xpose.msra.mxu0 0.0
    %339 = vmatprep.subr.mxu0 0.0
    %340 = vmatpush2.xpose.msra.mxu0 0.0
    %341 = vmatprep.subr.mxu0 0.0
    %342 = vmatpush2.xpose.msra.mxu0 0.0
    %343 = vmatprep.subr.mxu0 0.0
    %344 = vmatpush2.xpose.msra.mxu0 0.0
    %345 = vmatprep.subr.mxu0 0.0
    %346 = vmatpush2.xpose.msra.mxu0 0.0
    %347 = vmatprep.subr.mxu0 0.0
    %348 = vmatpush2.xpose.msra.mxu0 0.0
    %349 = vmatprep.subr.mxu0 0.0
    %350 = vmatpush2.xpose.msra.mxu0 0.0
    %351 = vmatprep.subr.mxu0 0.0
    %352 = vmatpush2.xpose.msra.mxu0 0.0
    %353 = vmatprep.subr.mxu0 0.0
    %354 = vmatpush2.xpose.msra.mxu0 0.0
    %355 = vmatprep.subr.mxu0 0.0
    %356 = vmatpush2.xpose.msra.mxu0 0.0
    %357 = vmatprep.subr.mxu0 0.0
    %358 = vmatpush2.xpose.msra.mxu0 0.0
    %359 = vmatprep.subr.mxu0 0.0
    %360 = vmatpush2.xpose.msra.mxu0 0.0
    %361 = vmatprep.mubr.f32.mxu0 0.0
    %362 = vmatmul.mubr.f32.gmra.mxu0 %v293
    %v363 = vpop.f32.mrf.mxu0
    %v364 = vadd.f32 0.0, %v363
    %v365 = vpop.f32.mrf.mxu0
    %366 = vdwg.mxu0
    %v367 = vmul.f32 %v287, 0.35355338
    %v368 = vmul.f32 %v364, 0.35355338
    %v371 = vlaneseq
    %v372 = vshrl.u32 %v371, 7
    %v373 = vsub.s32 0, %v372
    %v374 = vrot.slane %v118, %v373
    %v375 = vlaneseq
    %v376 = vshrl.u32 %v375, 7
    %v377 = vsub.s32 0, %v376
    %v378 = vrot.slane %v119, %v377
    %v381 = vadd.f32 %v367, %v374
    %v382 = vadd.f32 %v368, %v378
    %v383 = vsel %vm215, %v381, -inf
    %384 = vmax.xlane.f32.xlu0 %v383
    %v385 = vpop.xlane.xlu0 %384
    %v386 = vsel %vm215, %v382, -inf
    %387 = vmax.xlane.f32.xlu0 %v386
    %v388 = vpop.xlane.xlu0 %387
    %v389 = vsub.f32 %v381, %v385
    %v390 = vsub.f32 %v382, %v388
    %v391 = vmul.f32 %v389, 1.442695
    %v392 = vpow.pop %v391
    %v393 = vmul.f32 %v390, 1.442695
    %v394 = vpow.pop %v393
    %v395 = vsel %vm215, %v392, 0.0
    %396 = vadd.xlane.f32.xlu0 %v395
    %v397 = vpop.xlane.xlu0 %396
    %v398 = vsel %vm215, %v394, 0.0
    %399 = vadd.xlane.f32.xlu0 %v398
    %v400 = vpop.xlane.xlu0 %399
    %v401 = vrcp.pop %v397
    %v402 = vmul.f32 %v392, %v401
    %v403 = vrcp.pop %v400
    %v404 = vmul.f32 %v394, %v403
    %405 = vrot.lane.b32.xlu0 %v204, 64
    %v406 = vpop.permute.xlu0 %405
    %v409 = vsel %vm215, %v402, 0
    %411 = vmatprep.subr.mxu0 0.0
    %412 = vmatpush1.msra.mxu0 0.0
    %413 = vmatprep.subr.mxu0 0.0
    %414 = vmatpush1.msra.mxu0 0.0
    %415 = vmatprep.subr.mxu0 0.0
    %416 = vmatpush1.msra.mxu0 0.0
    %417 = vmatprep.subr.mxu0 0.0
    %418 = vmatpush1.msra.mxu0 0.0
    %419 = vmatprep.subr.mxu0 0.0
    %420 = vmatpush1.msra.mxu0 0.0
    %421 = vmatprep.subr.mxu0 0.0
    %422 = vmatpush1.msra.mxu0 0.0
    %423 = vmatprep.subr.mxu0 0.0
    %424 = vmatpush1.msra.mxu0 0.0
    %425 = vmatprep.subr.mxu0 0.0
    %426 = vmatpush1.msra.mxu0 0.0
    %427 = vmatprep.subr.mxu0 0.0
    %428 = vmatpush1.msra.mxu0 0.0
    %429 = vmatprep.subr.mxu0 0.0
    %430 = vmatpush1.msra.mxu0 0.0
    %431 = vmatprep.subr.mxu0 0.0
    %432 = vmatpush1.msra.mxu0 0.0
    %433 = vmatprep.subr.mxu0 0.0
    %434 = vmatpush1.msra.mxu0 0.0
    %435 = vmatprep.subr.mxu0 0.0
    %436 = vmatpush1.msra.mxu0 0.0
    %437 = vmatprep.subr.mxu0 0.0
    %438 = vmatpush1.msra.mxu0 0.0
    %439 = vmatprep.subr.mxu0 0.0
    %440 = vmatpush1.msra.mxu0 0.0
    %441 = vmatprep.subr.mxu0 0.0
    %442 = vmatpush1.msra.mxu0 %v406
    %443 = vmatprep.subr.mxu0 0.0
    %444 = vmatpush2.msra.mxu0 0.0
    %445 = vmatprep.subr.mxu0 0.0
    %446 = vmatpush2.msra.mxu0 0.0
    %447 = vmatprep.subr.mxu0 0.0
    %448 = vmatpush2.msra.mxu0 0.0
    %449 = vmatprep.subr.mxu0 0.0
    %450 = vmatpush2.msra.mxu0 0.0
    %451 = vmatprep.subr.mxu0 0.0
    %452 = vmatpush2.msra.mxu0 0.0
    %453 = vmatprep.subr.mxu0 0.0
    %454 = vmatpush2.msra.mxu0 0.0
    %455 = vmatprep.subr.mxu0 0.0
    %456 = vmatpush2.msra.mxu0 0.0
    %457 = vmatprep.subr.mxu0 0.0
    %458 = vmatpush2.msra.mxu0 0.0
    %459 = vmatprep.subr.mxu0 0.0
    %460 = vmatpush2.msra.mxu0 0.0
    %461 = vmatprep.subr.mxu0 0.0
    %462 = vmatpush2.msra.mxu0 0.0
    %463 = vmatprep.subr.mxu0 0.0
    %464 = vmatpush2.msra.mxu0 0.0
    %465 = vmatprep.subr.mxu0 0.0
    %466 = vmatpush2.msra.mxu0 0.0
    %467 = vmatprep.subr.mxu0 0.0
    %468 = vmatpush2.msra.mxu0 0.0
    %469 = vmatprep.subr.mxu0 0.0
    %470 = vmatpush2.msra.mxu0 0.0
    %471 = vmatprep.subr.mxu0 0.0
    %472 = vmatpush2.msra.mxu0 0.0
    %473 = vmatprep.subr.mxu0 0.0
    %474 = vmatpush2.msra.mxu0 0.0
    %475 = vmatprep.mubr.f32.mxu0 0.0
    %476 = vmatmul.mubr.f32.gmra.mxu0 %v409
    %v477 = vpop.f32.mrf.mxu0
    %v478 = vadd.f32 0.0, %v477
    %v479 = vpop.f32.mrf.mxu0
    %480 = vdwg.mxu0
    %481 = vrot.lane.b32.xlu0 %v209, 64
    %v482 = vpop.permute.xlu0 %481
    %v485 = vsel %vm215, %v404, 0
    %487 = vmatprep.subr.mxu0 0.0
    %488 = vmatpush1.msra.mxu0 0.0
    %489 = vmatprep.subr.mxu0 0.0
    %490 = vmatpush1.msra.mxu0 0.0
    %491 = vmatprep.subr.mxu0 0.0
    %492 = vmatpush1.msra.mxu0 0.0
    %493 = vmatprep.subr.mxu0 0.0
    %494 = vmatpush1.msra.mxu0 0.0
    %495 = vmatprep.subr.mxu0 0.0
    %496 = vmatpush1.msra.mxu0 0.0
    %497 = vmatprep.subr.mxu0 0.0
    %498 = vmatpush1.msra.mxu0 0.0
    %499 = vmatprep.subr.mxu0 0.0
    %500 = vmatpush1.msra.mxu0 0.0
    %501 = vmatprep.subr.mxu0 0.0
    %502 = vmatpush1.msra.mxu0 0.0
    %503 = vmatprep.subr.mxu0 0.0
    %504 = vmatpush1.msra.mxu0 0.0
    %505 = vmatprep.subr.mxu0 0.0
    %506 = vmatpush1.msra.mxu0 0.0
    %507 = vmatprep.subr.mxu0 0.0
    %508 = vmatpush1.msra.mxu0 0.0
    %509 = vmatprep.subr.mxu0 0.0
    %510 = vmatpush1.msra.mxu0 0.0
    %511 = vmatprep.subr.mxu0 0.0
    %512 = vmatpush1.msra.mxu0 0.0
    %513 = vmatprep.subr.mxu0 0.0
    %514 = vmatpush1.msra.mxu0 0.0
    %515 = vmatprep.subr.mxu0 0.0
    %516 = vmatpush1.msra.mxu0 0.0
    %517 = vmatprep.subr.mxu0 0.0
    %518 = vmatpush1.msra.mxu0 %v482
    %519 = vmatprep.subr.mxu0 0.0
    %520 = vmatpush2.msra.mxu0 0.0
    %521 = vmatprep.subr.mxu0 0.0
    %522 = vmatpush2.msra.mxu0 0.0
    %523 = vmatprep.subr.mxu0 0.0
    %524 = vmatpush2.msra.mxu0 0.0
    %525 = vmatprep.subr.mxu0 0.0
    %526 = vmatpush2.msra.mxu0 0.0
    %527 = vmatprep.subr.mxu0 0.0
    %528 = vmatpush2.msra.mxu0 0.0
    %529 = vmatprep.subr.mxu0 0.0
    %530 = vmatpush2.msra.mxu0 0.0
    %531 = vmatprep.subr.mxu0 0.0
    %532 = vmatpush2.msra.mxu0 0.0
    %533 = vmatprep.subr.mxu0 0.0
    %534 = vmatpush2.msra.mxu0 0.0
    %535 = vmatprep.subr.mxu0 0.0
    %536 = vmatpush2.msra.mxu0 0.0
    %537 = vmatprep.subr.mxu0 0.0
    %538 = vmatpush2.msra.mxu0 0.0
    %539 = vmatprep.subr.mxu0 0.0
    %540 = vmatpush2.msra.mxu0 0.0
    %541 = vmatprep.subr.mxu0 0.0
    %542 = vmatpush2.msra.mxu0 0.0
    %543 = vmatprep.subr.mxu0 0.0
    %544 = vmatpush2.msra.mxu0 0.0
    %545 = vmatprep.subr.mxu0 0.0
    %546 = vmatpush2.msra.mxu0 0.0
    %547 = vmatprep.subr.mxu0 0.0
    %548 = vmatpush2.msra.mxu0 0.0
    %549 = vmatprep.subr.mxu0 0.0
    %550 = vmatpush2.msra.mxu0 0.0
    %551 = vmatprep.mubr.f32.mxu0 0.0
    %552 = vmatmul.mubr.f32.gmra.mxu0 %v485
    %v553 = vpop.f32.mrf.mxu0
    %v554 = vadd.f32 0.0, %v553
    %v555 = vpop.f32.mrf.mxu0
    %556 = vdwg.mxu0
    %557 = vrot.lane.b32.xlu0 %v204, 120
    %v558 = vpop.permute.xlu0 %557
    %559 = vrot.lane.b32.xlu0 %v204, 88
    %v560 = vpop.permute.xlu0 %559
    %v561 = vsel %vm215, %v558, 0
    %v563 = vsel %vm215, %v560, 0
    %565 = vmatprep.subr.mxu0 0.0
    %566 = vmatpush1.xpose.msra.mxu0 0.0
    %567 = vmatprep.subr.mxu0 0.0
    %568 = vmatpush1.xpose.msra.mxu0 0.0
    %569 = vmatprep.subr.mxu0 0.0
    %570 = vmatpush1.xpose.msra.mxu0 0.0
    %571 = vmatprep.subr.mxu0 0.0
    %572 = vmatpush1.xpose.msra.mxu0 0.0
    %573 = vmatprep.subr.mxu0 0.0
    %574 = vmatpush1.xpose.msra.mxu0 0.0
    %575 = vmatprep.subr.mxu0 0.0
    %576 = vmatpush1.xpose.msra.mxu0 0.0
    %577 = vmatprep.subr.mxu0 0.0
    %578 = vmatpush1.xpose.msra.mxu0 0.0
    %579 = vmatprep.subr.mxu0 0.0
    %580 = vmatpush1.xpose.msra.mxu0 0.0
    %581 = vmatprep.subr.mxu0 0.0
    %582 = vmatpush1.xpose.msra.mxu0 0.0
    %583 = vmatprep.subr.mxu0 0.0
    %584 = vmatpush1.xpose.msra.mxu0 0.0
    %585 = vmatprep.subr.mxu0 0.0
    %586 = vmatpush1.xpose.msra.mxu0 0.0
    %587 = vmatprep.subr.mxu0 0.0
    %588 = vmatpush1.xpose.msra.mxu0 0.0
    %589 = vmatprep.subr.mxu0 0.0
    %590 = vmatpush1.xpose.msra.mxu0 0.0
    %591 = vmatprep.subr.mxu0 0.0
    %592 = vmatpush1.xpose.msra.mxu0 0.0
    %593 = vmatprep.subr.mxu0 0.0
    %594 = vmatpush1.xpose.msra.mxu0 0.0
    %595 = vmatprep.subr.mxu0 0.0
    %596 = vmatpush1.xpose.msra.mxu0 %v563
    %597 = vmatprep.subr.mxu0 0.0
    %598 = vmatpush2.xpose.msra.mxu0 0.0
    %599 = vmatprep.subr.mxu0 0.0
    %600 = vmatpush2.xpose.msra.mxu0 0.0
    %601 = vmatprep.subr.mxu0 0.0
    %602 = vmatpush2.xpose.msra.mxu0 0.0
    %603 = vmatprep.subr.mxu0 0.0
    %604 = vmatpush2.xpose.msra.mxu0 0.0
    %605 = vmatprep.subr.mxu0 0.0
    %606 = vmatpush2.xpose.msra.mxu0 0.0
    %607 = vmatprep.subr.mxu0 0.0
    %608 = vmatpush2.xpose.msra.mxu0 0.0
    %609 = vmatprep.subr.mxu0 0.0
    %610 = vmatpush2.xpose.msra.mxu0 0.0
    %611 = vmatprep.subr.mxu0 0.0
    %612 = vmatpush2.xpose.msra.mxu0 0.0
    %613 = vmatprep.subr.mxu0 0.0
    %614 = vmatpush2.xpose.msra.mxu0 0.0
    %615 = vmatprep.subr.mxu0 0.0
    %616 = vmatpush2.xpose.msra.mxu0 0.0
    %617 = vmatprep.subr.mxu0 0.0
    %618 = vmatpush2.xpose.msra.mxu0 0.0
    %619 = vmatprep.subr.mxu0 0.0
    %620 = vmatpush2.xpose.msra.mxu0 0.0
    %621 = vmatprep.subr.mxu0 0.0
    %622 = vmatpush2.xpose.msra.mxu0 0.0
    %623 = vmatprep.subr.mxu0 0.0
    %624 = vmatpush2.xpose.msra.mxu0 0.0
    %625 = vmatprep.subr.mxu0 0.0
    %626 = vmatpush2.xpose.msra.mxu0 0.0
    %627 = vmatprep.subr.mxu0 0.0
    %628 = vmatpush2.xpose.msra.mxu0 0.0
    %629 = vmatprep.mubr.f32.mxu0 0.0
    %630 = vmatmul.mubr.f32.gmra.mxu0 %v561
    %v631 = vpop.f32.mrf.mxu0
    %v632 = vadd.f32 0.0, %v631
    %v633 = vpop.f32.mrf.mxu0
    %634 = vdwg.mxu0
    %635 = vrot.lane.b32.xlu0 %v209, 120
    %v636 = vpop.permute.xlu0 %635
    %637 = vrot.lane.b32.xlu0 %v209, 88
    %v638 = vpop.permute.xlu0 %637
    %v639 = vsel %vm215, %v636, 0
    %v641 = vsel %vm215, %v638, 0
    %643 = vmatprep.subr.mxu0 0.0
    %644 = vmatpush1.xpose.msra.mxu0 0.0
    %645 = vmatprep.subr.mxu0 0.0
    %646 = vmatpush1.xpose.msra.mxu0 0.0
    %647 = vmatprep.subr.mxu0 0.0
    %648 = vmatpush1.xpose.msra.mxu0 0.0
    %649 = vmatprep.subr.mxu0 0.0
    %650 = vmatpush1.xpose.msra.mxu0 0.0
    %651 = vmatprep.subr.mxu0 0.0
    %652 = vmatpush1.xpose.msra.mxu0 0.0
    %653 = vmatprep.subr.mxu0 0.0
    %654 = vmatpush1.xpose.msra.mxu0 0.0
    %655 = vmatprep.subr.mxu0 0.0
    %656 = vmatpush1.xpose.msra.mxu0 0.0
    %657 = vmatprep.subr.mxu0 0.0
    %658 = vmatpush1.xpose.msra.mxu0 0.0
    %659 = vmatprep.subr.mxu0 0.0
    %660 = vmatpush1.xpose.msra.mxu0 0.0
    %661 = vmatprep.subr.mxu0 0.0
    %662 = vmatpush1.xpose.msra.mxu0 0.0
    %663 = vmatprep.subr.mxu0 0.0
    %664 = vmatpush1.xpose.msra.mxu0 0.0
    %665 = vmatprep.subr.mxu0 0.0
    %666 = vmatpush1.xpose.msra.mxu0 0.0
    %667 = vmatprep.subr.mxu0 0.0
    %668 = vmatpush1.xpose.msra.mxu0 0.0
    %669 = vmatprep.subr.mxu0 0.0
    %670 = vmatpush1.xpose.msra.mxu0 0.0
    %671 = vmatprep.subr.mxu0 0.0
    %672 = vmatpush1.xpose.msra.mxu0 0.0
    %673 = vmatprep.subr.mxu0 0.0
    %674 = vmatpush1.xpose.msra.mxu0 %v641
    %675 = vmatprep.subr.mxu0 0.0
    %676 = vmatpush2.xpose.msra.mxu0 0.0
    %677 = vmatprep.subr.mxu0 0.0
    %678 = vmatpush2.xpose.msra.mxu0 0.0
    %679 = vmatprep.subr.mxu0 0.0
    %680 = vmatpush2.xpose.msra.mxu0 0.0
    %681 = vmatprep.subr.mxu0 0.0
    %682 = vmatpush2.xpose.msra.mxu0 0.0
    %683 = vmatprep.subr.mxu0 0.0
    %684 = vmatpush2.xpose.msra.mxu0 0.0
    %685 = vmatprep.subr.mxu0 0.0
    %686 = vmatpush2.xpose.msra.mxu0 0.0
    %687 = vmatprep.subr.mxu0 0.0
    %688 = vmatpush2.xpose.msra.mxu0 0.0
    %689 = vmatprep.subr.mxu0 0.0
    %690 = vmatpush2.xpose.msra.mxu0 0.0
    %691 = vmatprep.subr.mxu0 0.0
    %692 = vmatpush2.xpose.msra.mxu0 0.0
    %693 = vmatprep.subr.mxu0 0.0
    %694 = vmatpush2.xpose.msra.mxu0 0.0
    %695 = vmatprep.subr.mxu0 0.0
    %696 = vmatpush2.xpose.msra.mxu0 0.0
    %697 = vmatprep.subr.mxu0 0.0
    %698 = vmatpush2.xpose.msra.mxu0 0.0
    %699 = vmatprep.subr.mxu0 0.0
    %700 = vmatpush2.xpose.msra.mxu0 0.0
    %701 = vmatprep.subr.mxu0 0.0
    %702 = vmatpush2.xpose.msra.mxu0 0.0
    %703 = vmatprep.subr.mxu0 0.0
    %704 = vmatpush2.xpose.msra.mxu0 0.0
    %705 = vmatprep.subr.mxu0 0.0
    %706 = vmatpush2.xpose.msra.mxu0 0.0
    %707 = vmatprep.mubr.f32.mxu0 0.0
    %708 = vmatmul.mubr.f32.gmra.mxu0 %v639
    %v709 = vpop.f32.mrf.mxu0
    %v710 = vadd.f32 0.0, %v709
    %v711 = vpop.f32.mrf.mxu0
    %712 = vdwg.mxu0
    %v713 = vmul.f32 %v632, 0.35355338
    %v714 = vmul.f32 %v710, 0.35355338
    %v715 = vadd.f32 %v713, %v374
    %v716 = vadd.f32 %v714, %v378
    %v717 = vsel %vm215, %v715, -inf
    %718 = vmax.xlane.f32.xlu0 %v717
    %v719 = vpop.xlane.xlu0 %718
    %v720 = vsel %vm215, %v716, -inf
    %721 = vmax.xlane.f32.xlu0 %v720
    %v722 = vpop.xlane.xlu0 %721
    %v723 = vsub.f32 %v715, %v719
    %v724 = vsub.f32 %v716, %v722
    %v725 = vmul.f32 %v723, 1.442695
    %v726 = vpow.pop %v725
    %v727 = vmul.f32 %v724, 1.442695
    %v728 = vpow.pop %v727
    %v729 = vsel %vm215, %v726, 0.0
    %730 = vadd.xlane.f32.xlu0 %v729
    %v731 = vpop.xlane.xlu0 %730
    %v732 = vsel %vm215, %v728, 0.0
    %733 = vadd.xlane.f32.xlu0 %v732
    %v734 = vpop.xlane.xlu0 %733
    %v735 = vrcp.pop %v731
    %v736 = vmul.f32 %v726, %v735
    %v737 = vrcp.pop %v734
    %v738 = vmul.f32 %v728, %v737
    %739 = vrot.lane.b32.xlu0 %v204, 56
    %v740 = vpop.permute.xlu0 %739
    %v743 = vsel %vm215, %v736, 0
    %745 = vmatprep.subr.mxu0 0.0
    %746 = vmatpush1.msra.mxu0 0.0
    %747 = vmatprep.subr.mxu0 0.0
    %748 = vmatpush1.msra.mxu0 0.0
    %749 = vmatprep.subr.mxu0 0.0
    %750 = vmatpush1.msra.mxu0 0.0
    %751 = vmatprep.subr.mxu0 0.0
    %752 = vmatpush1.msra.mxu0 0.0
    %753 = vmatprep.subr.mxu0 0.0
    %754 = vmatpush1.msra.mxu0 0.0
    %755 = vmatprep.subr.mxu0 0.0
    %756 = vmatpush1.msra.mxu0 0.0
    %757 = vmatprep.subr.mxu0 0.0
    %758 = vmatpush1.msra.mxu0 0.0
    %759 = vmatprep.subr.mxu0 0.0
    %760 = vmatpush1.msra.mxu0 0.0
    %761 = vmatprep.subr.mxu0 0.0
    %762 = vmatpush1.msra.mxu0 0.0
    %763 = vmatprep.subr.mxu0 0.0
    %764 = vmatpush1.msra.mxu0 0.0
    %765 = vmatprep.subr.mxu0 0.0
    %766 = vmatpush1.msra.mxu0 0.0
    %767 = vmatprep.subr.mxu0 0.0
    %768 = vmatpush1.msra.mxu0 0.0
    %769 = vmatprep.subr.mxu0 0.0
    %770 = vmatpush1.msra.mxu0 0.0
    %771 = vmatprep.subr.mxu0 0.0
    %772 = vmatpush1.msra.mxu0 0.0
    %773 = vmatprep.subr.mxu0 0.0
    %774 = vmatpush1.msra.mxu0 0.0
    %775 = vmatprep.subr.mxu0 0.0
    %776 = vmatpush1.msra.mxu0 %v740
    %777 = vmatprep.subr.mxu0 0.0
    %778 = vmatpush2.msra.mxu0 0.0
    %779 = vmatprep.subr.mxu0 0.0
    %780 = vmatpush2.msra.mxu0 0.0
    %781 = vmatprep.subr.mxu0 0.0
    %782 = vmatpush2.msra.mxu0 0.0
    %783 = vmatprep.subr.mxu0 0.0
    %784 = vmatpush2.msra.mxu0 0.0
    %785 = vmatprep.subr.mxu0 0.0
    %786 = vmatpush2.msra.mxu0 0.0
    %787 = vmatprep.subr.mxu0 0.0
    %788 = vmatpush2.msra.mxu0 0.0
    %789 = vmatprep.subr.mxu0 0.0
    %790 = vmatpush2.msra.mxu0 0.0
    %791 = vmatprep.subr.mxu0 0.0
    %792 = vmatpush2.msra.mxu0 0.0
    %793 = vmatprep.subr.mxu0 0.0
    %794 = vmatpush2.msra.mxu0 0.0
    %795 = vmatprep.subr.mxu0 0.0
    %796 = vmatpush2.msra.mxu0 0.0
    %797 = vmatprep.subr.mxu0 0.0
    %798 = vmatpush2.msra.mxu0 0.0
    %799 = vmatprep.subr.mxu0 0.0
    %800 = vmatpush2.msra.mxu0 0.0
    %801 = vmatprep.subr.mxu0 0.0
    %802 = vmatpush2.msra.mxu0 0.0
    %803 = vmatprep.subr.mxu0 0.0
    %804 = vmatpush2.msra.mxu0 0.0
    %805 = vmatprep.subr.mxu0 0.0
    %806 = vmatpush2.msra.mxu0 0.0
    %807 = vmatprep.subr.mxu0 0.0
    %808 = vmatpush2.msra.mxu0 0.0
    %809 = vmatprep.mubr.f32.mxu0 0.0
    %810 = vmatmul.mubr.f32.gmra.mxu0 %v743
    %v811 = vpop.f32.mrf.mxu0
    %v812 = vadd.f32 0.0, %v811
    %v813 = vpop.f32.mrf.mxu0
    %814 = vdwg.mxu0
    %815 = vrot.lane.b32.xlu0 %v209, 56
    %v816 = vpop.permute.xlu0 %815
    %v819 = vsel %vm215, %v738, 0
    %821 = vmatprep.subr.mxu0 0.0
    %822 = vmatpush1.msra.mxu0 0.0
    %823 = vmatprep.subr.mxu0 0.0
    %824 = vmatpush1.msra.mxu0 0.0
    %825 = vmatprep.subr.mxu0 0.0
    %826 = vmatpush1.msra.mxu0 0.0
    %827 = vmatprep.subr.mxu0 0.0
    %828 = vmatpush1.msra.mxu0 0.0
    %829 = vmatprep.subr.mxu0 0.0
    %830 = vmatpush1.msra.mxu0 0.0
    %831 = vmatprep.subr.mxu0 0.0
    %832 = vmatpush1.msra.mxu0 0.0
    %833 = vmatprep.subr.mxu0 0.0
    %834 = vmatpush1.msra.mxu0 0.0
    %835 = vmatprep.subr.mxu0 0.0
    %836 = vmatpush1.msra.mxu0 0.0
    %837 = vmatprep.subr.mxu0 0.0
    %838 = vmatpush1.msra.mxu0 0.0
    %839 = vmatprep.subr.mxu0 0.0
    %840 = vmatpush1.msra.mxu0 0.0
    %841 = vmatprep.subr.mxu0 0.0
    %842 = vmatpush1.msra.mxu0 0.0
    %843 = vmatprep.subr.mxu0 0.0
    %844 = vmatpush1.msra.mxu0 0.0
    %845 = vmatprep.subr.mxu0 0.0
    %846 = vmatpush1.msra.mxu0 0.0
    %847 = vmatprep.subr.mxu0 0.0
    %848 = vmatpush1.msra.mxu0 0.0
    %849 = vmatprep.subr.mxu0 0.0
    %850 = vmatpush1.msra.mxu0 0.0
    %851 = vmatprep.subr.mxu0 0.0
    %852 = vmatpush1.msra.mxu0 %v816
    %853 = vmatprep.subr.mxu0 0.0
    %854 = vmatpush2.msra.mxu0 0.0
    %855 = vmatprep.subr.mxu0 0.0
    %856 = vmatpush2.msra.mxu0 0.0
    %857 = vmatprep.subr.mxu0 0.0
    %858 = vmatpush2.msra.mxu0 0.0
    %859 = vmatprep.subr.mxu0 0.0
    %860 = vmatpush2.msra.mxu0 0.0
    %861 = vmatprep.subr.mxu0 0.0
    %862 = vmatpush2.msra.mxu0 0.0
    %863 = vmatprep.subr.mxu0 0.0
    %864 = vmatpush2.msra.mxu0 0.0
    %865 = vmatprep.subr.mxu0 0.0
    %866 = vmatpush2.msra.mxu0 0.0
    %867 = vmatprep.subr.mxu0 0.0
    %868 = vmatpush2.msra.mxu0 0.0
    %869 = vmatprep.subr.mxu0 0.0
    %870 = vmatpush2.msra.mxu0 0.0
    %871 = vmatprep.subr.mxu0 0.0
    %872 = vmatpush2.msra.mxu0 0.0
    %873 = vmatprep.subr.mxu0 0.0
    %874 = vmatpush2.msra.mxu0 0.0
    %875 = vmatprep.subr.mxu0 0.0
    %876 = vmatpush2.msra.mxu0 0.0
    %877 = vmatprep.subr.mxu0 0.0
    %878 = vmatpush2.msra.mxu0 0.0
    %879 = vmatprep.subr.mxu0 0.0
    %880 = vmatpush2.msra.mxu0 0.0
    %881 = vmatprep.subr.mxu0 0.0
    %882 = vmatpush2.msra.mxu0 0.0
    %883 = vmatprep.subr.mxu0 0.0
    %884 = vmatpush2.msra.mxu0 0.0
    %885 = vmatprep.mubr.f32.mxu0 0.0
    %886 = vmatmul.mubr.f32.gmra.mxu0 %v819
    %v887 = vpop.f32.mrf.mxu0
    %v888 = vadd.f32 0.0, %v887
    %v889 = vpop.f32.mrf.mxu0
    %890 = vdwg.mxu0
    %891 = vrot.lane.b32.xlu0 %v204, 112
    %v892 = vpop.permute.xlu0 %891
    %893 = vrot.lane.b32.xlu0 %v204, 80
    %v894 = vpop.permute.xlu0 %893
    %v895 = vsel %vm215, %v892, 0
    %v897 = vsel %vm215, %v894, 0
    %899 = vmatprep.subr.mxu0 0.0
    %900 = vmatpush1.xpose.msra.mxu0 0.0
    %901 = vmatprep.subr.mxu0 0.0
    %902 = vmatpush1.xpose.msra.mxu0 0.0
    %903 = vmatprep.subr.mxu0 0.0
    %904 = vmatpush1.xpose.msra.mxu0 0.0
    %905 = vmatprep.subr.mxu0 0.0
    %906 = vmatpush1.xpose.msra.mxu0 0.0
    %907 = vmatprep.subr.mxu0 0.0
    %908 = vmatpush1.xpose.msra.mxu0 0.0
    %909 = vmatprep.subr.mxu0 0.0
    %910 = vmatpush1.xpose.msra.mxu0 0.0
    %911 = vmatprep.subr.mxu0 0.0
    %912 = vmatpush1.xpose.msra.mxu0 0.0
    %913 = vmatprep.subr.mxu0 0.0
    %914 = vmatpush1.xpose.msra.mxu0 0.0
    %915 = vmatprep.subr.mxu0 0.0
    %916 = vmatpush1.xpose.msra.mxu0 0.0
    %917 = vmatprep.subr.mxu0 0.0
    %918 = vmatpush1.xpose.msra.mxu0 0.0
    %919 = vmatprep.subr.mxu0 0.0
    %920 = vmatpush1.xpose.msra.mxu0 0.0
    %921 = vmatprep.subr.mxu0 0.0
    %922 = vmatpush1.xpose.msra.mxu0 0.0
    %923 = vmatprep.subr.mxu0 0.0
    %924 = vmatpush1.xpose.msra.mxu0 0.0
    %925 = vmatprep.subr.mxu0 0.0
    %926 = vmatpush1.xpose.msra.mxu0 0.0
    %927 = vmatprep.subr.mxu0 0.0
    %928 = vmatpush1.xpose.msra.mxu0 0.0
    %929 = vmatprep.subr.mxu0 0.0
    %930 = vmatpush1.xpose.msra.mxu0 %v897
    %931 = vmatprep.subr.mxu0 0.0
    %932 = vmatpush2.xpose.msra.mxu0 0.0
    %933 = vmatprep.subr.mxu0 0.0
    %934 = vmatpush2.xpose.msra.mxu0 0.0
    %935 = vmatprep.subr.mxu0 0.0
    %936 = vmatpush2.xpose.msra.mxu0 0.0
    %937 = vmatprep.subr.mxu0 0.0
    %938 = vmatpush2.xpose.msra.mxu0 0.0
    %939 = vmatprep.subr.mxu0 0.0
    %940 = vmatpush2.xpose.msra.mxu0 0.0
    %941 = vmatprep.subr.mxu0 0.0
    %942 = vmatpush2.xpose.msra.mxu0 0.0
    %943 = vmatprep.subr.mxu0 0.0
    %944 = vmatpush2.xpose.msra.mxu0 0.0
    %945 = vmatprep.subr.mxu0 0.0
    %946 = vmatpush2.xpose.msra.mxu0 0.0
    %947 = vmatprep.subr.mxu0 0.0
    %948 = vmatpush2.xpose.msra.mxu0 0.0
    %949 = vmatprep.subr.mxu0 0.0
    %950 = vmatpush2.xpose.msra.mxu0 0.0
    %951 = vmatprep.subr.mxu0 0.0
    %952 = vmatpush2.xpose.msra.mxu0 0.0
    %953 = vmatprep.subr.mxu0 0.0
    %954 = vmatpush2.xpose.msra.mxu0 0.0
    %955 = vmatprep.subr.mxu0 0.0
    %956 = vmatpush2.xpose.msra.mxu0 0.0
    %957 = vmatprep.subr.mxu0 0.0
    %958 = vmatpush2.xpose.msra.mxu0 0.0
    %959 = vmatprep.subr.mxu0 0.0
    %960 = vmatpush2.xpose.msra.mxu0 0.0
    %961 = vmatprep.subr.mxu0 0.0
    %962 = vmatpush2.xpose.msra.mxu0 0.0
    %963 = vmatprep.mubr.f32.mxu0 0.0
    %964 = vmatmul.mubr.f32.gmra.mxu0 %v895
    %v965 = vpop.f32.mrf.mxu0
    %v966 = vadd.f32 0.0, %v965
    %v967 = vpop.f32.mrf.mxu0
    %968 = vdwg.mxu0
    %969 = vrot.lane.b32.xlu0 %v209, 112
    %v970 = vpop.permute.xlu0 %969
    %971 = vrot.lane.b32.xlu0 %v209, 80
    %v972 = vpop.permute.xlu0 %971
    %v973 = vsel %vm215, %v970, 0
    %v975 = vsel %vm215, %v972, 0
    %977 = vmatprep.subr.mxu0 0.0
    %978 = vmatpush1.xpose.msra.mxu0 0.0
    %979 = vmatprep.subr.mxu0 0.0
    %980 = vmatpush1.xpose.msra.mxu0 0.0
    %981 = vmatprep.subr.mxu0 0.0
    %982 = vmatpush1.xpose.msra.mxu0 0.0
    %983 = vmatprep.subr.mxu0 0.0
    %984 = vmatpush1.xpose.msra.mxu0 0.0
    %985 = vmatprep.subr.mxu0 0.0
    %986 = vmatpush1.xpose.msra.mxu0 0.0
    %987 = vmatprep.subr.mxu0 0.0
    %988 = vmatpush1.xpose.msra.mxu0 0.0
    %989 = vmatprep.subr.mxu0 0.0
    %990 = vmatpush1.xpose.msra.mxu0 0.0
    %991 = vmatprep.subr.mxu0 0.0
    %992 = vmatpush1.xpose.msra.mxu0 0.0
    %993 = vmatprep.subr.mxu0 0.0
    %994 = vmatpush1.xpose.msra.mxu0 0.0
    %995 = vmatprep.subr.mxu0 0.0
    %996 = vmatpush1.xpose.msra.mxu0 0.0
    %997 = vmatprep.subr.mxu0 0.0
    %998 = vmatpush1.xpose.msra.mxu0 0.0
    %999 = vmatprep.subr.mxu0 0.0
    %1000 = vmatpush1.xpose.msra.mxu0 0.0
    %1001 = vmatprep.subr.mxu0 0.0
    %1002 = vmatpush1.xpose.msra.mxu0 0.0
    %1003 = vmatprep.subr.mxu0 0.0
    %1004 = vmatpush1.xpose.msra.mxu0 0.0
    %1005 = vmatprep.subr.mxu0 0.0
    %1006 = vmatpush1.xpose.msra.mxu0 0.0
    %1007 = vmatprep.subr.mxu0 0.0
    %1008 = vmatpush1.xpose.msra.mxu0 %v975
    %1009 = vmatprep.subr.mxu0 0.0
    %1010 = vmatpush2.xpose.msra.mxu0 0.0
    %1011 = vmatprep.subr.mxu0 0.0
    %1012 = vmatpush2.xpose.msra.mxu0 0.0
    %1013 = vmatprep.subr.mxu0 0.0
    %1014 = vmatpush2.xpose.msra.mxu0 0.0
    %1015 = vmatprep.subr.mxu0 0.0
    %1016 = vmatpush2.xpose.msra.mxu0 0.0
    %1017 = vmatprep.subr.mxu0 0.0
    %1018 = vmatpush2.xpose.msra.mxu0 0.0
    %1019 = vmatprep.subr.mxu0 0.0
    %1020 = vmatpush2.xpose.msra.mxu0 0.0
    %1021 = vmatprep.subr.mxu0 0.0
    %1022 = vmatpush2.xpose.msra.mxu0 0.0
    %1023 = vmatprep.subr.mxu0 0.0
    %1024 = vmatpush2.xpose.msra.mxu0 0.0
    %1025 = vmatprep.subr.mxu0 0.0
    %1026 = vmatpush2.xpose.msra.mxu0 0.0
    %1027 = vmatprep.subr.mxu0 0.0
    %1028 = vmatpush2.xpose.msra.mxu0 0.0
    %1029 = vmatprep.subr.mxu0 0.0
    %1030 = vmatpush2.xpose.msra.mxu0 0.0
    %1031 = vmatprep.subr.mxu0 0.0
    %1032 = vmatpush2.xpose.msra.mxu0 0.0
    %1033 = vmatprep.subr.mxu0 0.0
    %1034 = vmatpush2.xpose.msra.mxu0 0.0
    %1035 = vmatprep.subr.mxu0 0.0
    %1036 = vmatpush2.xpose.msra.mxu0 0.0
    %1037 = vmatprep.subr.mxu0 0.0
    %1038 = vmatpush2.xpose.msra.mxu0 0.0
    %1039 = vmatprep.subr.mxu0 0.0
    %1040 = vmatpush2.xpose.msra.mxu0 0.0
    %1041 = vmatprep.mubr.f32.mxu0 0.0
    %1042 = vmatmul.mubr.f32.gmra.mxu0 %v973
    %v1043 = vpop.f32.mrf.mxu0
    %v1044 = vadd.f32 0.0, %v1043
    %v1045 = vpop.f32.mrf.mxu0
    %1046 = vdwg.mxu0
    %v1047 = vmul.f32 %v966, 0.35355338
    %v1048 = vmul.f32 %v1044, 0.35355338
    %v1049 = vadd.f32 %v1047, %v374
    %v1050 = vadd.f32 %v1048, %v378
    %v1051 = vsel %vm215, %v1049, -inf
    %1052 = vmax.xlane.f32.xlu0 %v1051
    %v1053 = vpop.xlane.xlu0 %1052
    %v1054 = vsel %vm215, %v1050, -inf
    %1055 = vmax.xlane.f32.xlu0 %v1054
    %v1056 = vpop.xlane.xlu0 %1055
    %v1057 = vsub.f32 %v1049, %v1053
    %v1058 = vsub.f32 %v1050, %v1056
    %v1059 = vmul.f32 %v1057, 1.442695
    %v1060 = vpow.pop %v1059
    %v1061 = vmul.f32 %v1058, 1.442695
    %v1062 = vpow.pop %v1061
    %v1063 = vsel %vm215, %v1060, 0.0
    %1064 = vadd.xlane.f32.xlu0 %v1063
    %v1065 = vpop.xlane.xlu0 %1064
    %v1066 = vsel %vm215, %v1062, 0.0
    %1067 = vadd.xlane.f32.xlu0 %v1066
    %v1068 = vpop.xlane.xlu0 %1067
    %v1069 = vrcp.pop %v1065
    %v1070 = vmul.f32 %v1060, %v1069
    %v1071 = vrcp.pop %v1068
    %v1072 = vmul.f32 %v1062, %v1071
    %1073 = vrot.lane.b32.xlu0 %v204, 48
    %v1074 = vpop.permute.xlu0 %1073
    %v1077 = vsel %vm215, %v1070, 0
    %1079 = vmatprep.subr.mxu0 0.0
    %1080 = vmatpush1.msra.mxu0 0.0
    %1081 = vmatprep.subr.mxu0 0.0
    %1082 = vmatpush1.msra.mxu0 0.0
    %1083 = vmatprep.subr.mxu0 0.0
    %1084 = vmatpush1.msra.mxu0 0.0
    %1085 = vmatprep.subr.mxu0 0.0
    %1086 = vmatpush1.msra.mxu0 0.0
    %1087 = vmatprep.subr.mxu0 0.0
    %1088 = vmatpush1.msra.mxu0 0.0
    %1089 = vmatprep.subr.mxu0 0.0
    %1090 = vmatpush1.msra.mxu0 0.0
    %1091 = vmatprep.subr.mxu0 0.0
    %1092 = vmatpush1.msra.mxu0 0.0
    %1093 = vmatprep.subr.mxu0 0.0
    %1094 = vmatpush1.msra.mxu0 0.0
    %1095 = vmatprep.subr.mxu0 0.0
    %1096 = vmatpush1.msra.mxu0 0.0
    %1097 = vmatprep.subr.mxu0 0.0
    %1098 = vmatpush1.msra.mxu0 0.0
    %1099 = vmatprep.subr.mxu0 0.0
    %1100 = vmatpush1.msra.mxu0 0.0
    %1101 = vmatprep.subr.mxu0 0.0
    %1102 = vmatpush1.msra.mxu0 0.0
    %1103 = vmatprep.subr.mxu0 0.0
    %1104 = vmatpush1.msra.mxu0 0.0
    %1105 = vmatprep.subr.mxu0 0.0
    %1106 = vmatpush1.msra.mxu0 0.0
    %1107 = vmatprep.subr.mxu0 0.0
    %1108 = vmatpush1.msra.mxu0 0.0
    %1109 = vmatprep.subr.mxu0 0.0
    %1110 = vmatpush1.msra.mxu0 %v1074
    %1111 = vmatprep.subr.mxu0 0.0
    %1112 = vmatpush2.msra.mxu0 0.0
    %1113 = vmatprep.subr.mxu0 0.0
    %1114 = vmatpush2.msra.mxu0 0.0
    %1115 = vmatprep.subr.mxu0 0.0
    %1116 = vmatpush2.msra.mxu0 0.0
    %1117 = vmatprep.subr.mxu0 0.0
    %1118 = vmatpush2.msra.mxu0 0.0
    %1119 = vmatprep.subr.mxu0 0.0
    %1120 = vmatpush2.msra.mxu0 0.0
    %1121 = vmatprep.subr.mxu0 0.0
    %1122 = vmatpush2.msra.mxu0 0.0
    %1123 = vmatprep.subr.mxu0 0.0
    %1124 = vmatpush2.msra.mxu0 0.0
    %1125 = vmatprep.subr.mxu0 0.0
    %1126 = vmatpush2.msra.mxu0 0.0
    %1127 = vmatprep.subr.mxu0 0.0
    %1128 = vmatpush2.msra.mxu0 0.0
    %1129 = vmatprep.subr.mxu0 0.0
    %1130 = vmatpush2.msra.mxu0 0.0
    %1131 = vmatprep.subr.mxu0 0.0
    %1132 = vmatpush2.msra.mxu0 0.0
    %1133 = vmatprep.subr.mxu0 0.0
    %1134 = vmatpush2.msra.mxu0 0.0
    %1135 = vmatprep.subr.mxu0 0.0
    %1136 = vmatpush2.msra.mxu0 0.0
    %1137 = vmatprep.subr.mxu0 0.0
    %1138 = vmatpush2.msra.mxu0 0.0
    %1139 = vmatprep.subr.mxu0 0.0
    %1140 = vmatpush2.msra.mxu0 0.0
    %1141 = vmatprep.subr.mxu0 0.0
    %1142 = vmatpush2.msra.mxu0 0.0
    %1143 = vmatprep.mubr.f32.mxu0 0.0
    %1144 = vmatmul.mubr.f32.gmra.mxu0 %v1077
    %v1145 = vpop.f32.mrf.mxu0
    %v1146 = vadd.f32 0.0, %v1145
    %v1147 = vpop.f32.mrf.mxu0
    %1148 = vdwg.mxu0
    %1149 = vrot.lane.b32.xlu0 %v209, 48
    %v1150 = vpop.permute.xlu0 %1149
    %v1153 = vsel %vm215, %v1072, 0
    %1155 = vmatprep.subr.mxu0 0.0
    %1156 = vmatpush1.msra.mxu0 0.0
    %1157 = vmatprep.subr.mxu0 0.0
    %1158 = vmatpush1.msra.mxu0 0.0
    %1159 = vmatprep.subr.mxu0 0.0
    %1160 = vmatpush1.msra.mxu0 0.0
    %1161 = vmatprep.subr.mxu0 0.0
    %1162 = vmatpush1.msra.mxu0 0.0
    %1163 = vmatprep.subr.mxu0 0.0
    %1164 = vmatpush1.msra.mxu0 0.0
    %1165 = vmatprep.subr.mxu0 0.0
    %1166 = vmatpush1.msra.mxu0 0.0
    %1167 = vmatprep.subr.mxu0 0.0
    %1168 = vmatpush1.msra.mxu0 0.0
    %1169 = vmatprep.subr.mxu0 0.0
    %1170 = vmatpush1.msra.mxu0 0.0
    %1171 = vmatprep.subr.mxu0 0.0
    %1172 = vmatpush1.msra.mxu0 0.0
    %1173 = vmatprep.subr.mxu0 0.0
    %1174 = vmatpush1.msra.mxu0 0.0
    %1175 = vmatprep.subr.mxu0 0.0
    %1176 = vmatpush1.msra.mxu0 0.0
    %1177 = vmatprep.subr.mxu0 0.0
    %1178 = vmatpush1.msra.mxu0 0.0
    %1179 = vmatprep.subr.mxu0 0.0
    %1180 = vmatpush1.msra.mxu0 0.0
    %1181 = vmatprep.subr.mxu0 0.0
    %1182 = vmatpush1.msra.mxu0 0.0
    %1183 = vmatprep.subr.mxu0 0.0
    %1184 = vmatpush1.msra.mxu0 0.0
    %1185 = vmatprep.subr.mxu0 0.0
    %1186 = vmatpush1.msra.mxu0 %v1150
    %1187 = vmatprep.subr.mxu0 0.0
    %1188 = vmatpush2.msra.mxu0 0.0
    %1189 = vmatprep.subr.mxu0 0.0
    %1190 = vmatpush2.msra.mxu0 0.0
    %1191 = vmatprep.subr.mxu0 0.0
    %1192 = vmatpush2.msra.mxu0 0.0
    %1193 = vmatprep.subr.mxu0 0.0
    %1194 = vmatpush2.msra.mxu0 0.0
    %1195 = vmatprep.subr.mxu0 0.0
    %1196 = vmatpush2.msra.mxu0 0.0
    %1197 = vmatprep.subr.mxu0 0.0
    %1198 = vmatpush2.msra.mxu0 0.0
    %1199 = vmatprep.subr.mxu0 0.0
    %1200 = vmatpush2.msra.mxu0 0.0
    %1201 = vmatprep.subr.mxu0 0.0
    %1202 = vmatpush2.msra.mxu0 0.0
    %1203 = vmatprep.subr.mxu0 0.0
    %1204 = vmatpush2.msra.mxu0 0.0
    %1205 = vmatprep.subr.mxu0 0.0
    %1206 = vmatpush2.msra.mxu0 0.0
    %1207 = vmatprep.subr.mxu0 0.0
    %1208 = vmatpush2.msra.mxu0 0.0
    %1209 = vmatprep.subr.mxu0 0.0
    %1210 = vmatpush2.msra.mxu0 0.0
    %1211 = vmatprep.subr.mxu0 0.0
    %1212 = vmatpush2.msra.mxu0 0.0
    %1213 = vmatprep.subr.mxu0 0.0
    %1214 = vmatpush2.msra.mxu0 0.0
    %1215 = vmatprep.subr.mxu0 0.0
    %1216 = vmatpush2.msra.mxu0 0.0
    %1217 = vmatprep.subr.mxu0 0.0
    %1218 = vmatpush2.msra.mxu0 0.0
    %1219 = vmatprep.mubr.f32.mxu0 0.0
    %1220 = vmatmul.mubr.f32.gmra.mxu0 %v1153
    %v1221 = vpop.f32.mrf.mxu0
    %v1222 = vadd.f32 0.0, %v1221
    %v1223 = vpop.f32.mrf.mxu0
    %1224 = vdwg.mxu0
    %1225 = vrot.lane.b32.xlu0 %v204, 104
    %v1226 = vpop.permute.xlu0 %1225
    %1227 = vrot.lane.b32.xlu0 %v204, 72
    %v1228 = vpop.permute.xlu0 %1227
    %v1229 = vsel %vm215, %v1226, 0
    %v1231 = vsel %vm215, %v1228, 0
    %1233 = vmatprep.subr.mxu0 0.0
    %1234 = vmatpush1.xpose.msra.mxu0 0.0
    %1235 = vmatprep.subr.mxu0 0.0
    %1236 = vmatpush1.xpose.msra.mxu0 0.0
    %1237 = vmatprep.subr.mxu0 0.0
    %1238 = vmatpush1.xpose.msra.mxu0 0.0
    %1239 = vmatprep.subr.mxu0 0.0
    %1240 = vmatpush1.xpose.msra.mxu0 0.0
    %1241 = vmatprep.subr.mxu0 0.0
    %1242 = vmatpush1.xpose.msra.mxu0 0.0
    %1243 = vmatprep.subr.mxu0 0.0
    %1244 = vmatpush1.xpose.msra.mxu0 0.0
    %1245 = vmatprep.subr.mxu0 0.0
    %1246 = vmatpush1.xpose.msra.mxu0 0.0
    %1247 = vmatprep.subr.mxu0 0.0
    %1248 = vmatpush1.xpose.msra.mxu0 0.0
    %1249 = vmatprep.subr.mxu0 0.0
    %1250 = vmatpush1.xpose.msra.mxu0 0.0
    %1251 = vmatprep.subr.mxu0 0.0
    %1252 = vmatpush1.xpose.msra.mxu0 0.0
    %1253 = vmatprep.subr.mxu0 0.0
    %1254 = vmatpush1.xpose.msra.mxu0 0.0
    %1255 = vmatprep.subr.mxu0 0.0
    %1256 = vmatpush1.xpose.msra.mxu0 0.0
    %1257 = vmatprep.subr.mxu0 0.0
    %1258 = vmatpush1.xpose.msra.mxu0 0.0
    %1259 = vmatprep.subr.mxu0 0.0
    %1260 = vmatpush1.xpose.msra.mxu0 0.0
    %1261 = vmatprep.subr.mxu0 0.0
    %1262 = vmatpush1.xpose.msra.mxu0 0.0
    %1263 = vmatprep.subr.mxu0 0.0
    %1264 = vmatpush1.xpose.msra.mxu0 %v1231
    %1265 = vmatprep.subr.mxu0 0.0
    %1266 = vmatpush2.xpose.msra.mxu0 0.0
    %1267 = vmatprep.subr.mxu0 0.0
    %1268 = vmatpush2.xpose.msra.mxu0 0.0
    %1269 = vmatprep.subr.mxu0 0.0
    %1270 = vmatpush2.xpose.msra.mxu0 0.0
    %1271 = vmatprep.subr.mxu0 0.0
    %1272 = vmatpush2.xpose.msra.mxu0 0.0
    %1273 = vmatprep.subr.mxu0 0.0
    %1274 = vmatpush2.xpose.msra.mxu0 0.0
    %1275 = vmatprep.subr.mxu0 0.0
    %1276 = vmatpush2.xpose.msra.mxu0 0.0
    %1277 = vmatprep.subr.mxu0 0.0
    %1278 = vmatpush2.xpose.msra.mxu0 0.0
    %1279 = vmatprep.subr.mxu0 0.0
    %1280 = vmatpush2.xpose.msra.mxu0 0.0
    %1281 = vmatprep.subr.mxu0 0.0
    %1282 = vmatpush2.xpose.msra.mxu0 0.0
    %1283 = vmatprep.subr.mxu0 0.0
    %1284 = vmatpush2.xpose.msra.mxu0 0.0
    %1285 = vmatprep.subr.mxu0 0.0
    %1286 = vmatpush2.xpose.msra.mxu0 0.0
    %1287 = vmatprep.subr.mxu0 0.0
    %1288 = vmatpush2.xpose.msra.mxu0 0.0
    %1289 = vmatprep.subr.mxu0 0.0
    %1290 = vmatpush2.xpose.msra.mxu0 0.0
    %1291 = vmatprep.subr.mxu0 0.0
    %1292 = vmatpush2.xpose.msra.mxu0 0.0
    %1293 = vmatprep.subr.mxu0 0.0
    %1294 = vmatpush2.xpose.msra.mxu0 0.0
    %1295 = vmatprep.subr.mxu0 0.0
    %1296 = vmatpush2.xpose.msra.mxu0 0.0
    %1297 = vmatprep.mubr.f32.mxu0 0.0
    %1298 = vmatmul.mubr.f32.gmra.mxu0 %v1229
    %v1299 = vpop.f32.mrf.mxu0
    %v1300 = vadd.f32 0.0, %v1299
    %v1301 = vpop.f32.mrf.mxu0
    %1302 = vdwg.mxu0
    %1303 = vrot.lane.b32.xlu0 %v209, 104
    %v1304 = vpop.permute.xlu0 %1303
    %1305 = vrot.lane.b32.xlu0 %v209, 72
    %v1306 = vpop.permute.xlu0 %1305
    %v1307 = vsel %vm215, %v1304, 0
    %v1309 = vsel %vm215, %v1306, 0
    %1311 = vmatprep.subr.mxu0 0.0
    %1312 = vmatpush1.xpose.msra.mxu0 0.0
    %1313 = vmatprep.subr.mxu0 0.0
    %1314 = vmatpush1.xpose.msra.mxu0 0.0
    %1315 = vmatprep.subr.mxu0 0.0
    %1316 = vmatpush1.xpose.msra.mxu0 0.0
    %1317 = vmatprep.subr.mxu0 0.0
    %1318 = vmatpush1.xpose.msra.mxu0 0.0
    %1319 = vmatprep.subr.mxu0 0.0
    %1320 = vmatpush1.xpose.msra.mxu0 0.0
    %1321 = vmatprep.subr.mxu0 0.0
    %1322 = vmatpush1.xpose.msra.mxu0 0.0
    %1323 = vmatprep.subr.mxu0 0.0
    %1324 = vmatpush1.xpose.msra.mxu0 0.0
    %1325 = vmatprep.subr.mxu0 0.0
    %1326 = vmatpush1.xpose.msra.mxu0 0.0
    %1327 = vmatprep.subr.mxu0 0.0
    %1328 = vmatpush1.xpose.msra.mxu0 0.0
    %1329 = vmatprep.subr.mxu0 0.0
    %1330 = vmatpush1.xpose.msra.mxu0 0.0
    %1331 = vmatprep.subr.mxu0 0.0
    %1332 = vmatpush1.xpose.msra.mxu0 0.0
    %1333 = vmatprep.subr.mxu0 0.0
    %1334 = vmatpush1.xpose.msra.mxu0 0.0
    %1335 = vmatprep.subr.mxu0 0.0
    %1336 = vmatpush1.xpose.msra.mxu0 0.0
    %1337 = vmatprep.subr.mxu0 0.0
    %1338 = vmatpush1.xpose.msra.mxu0 0.0
    %1339 = vmatprep.subr.mxu0 0.0
    %1340 = vmatpush1.xpose.msra.mxu0 0.0
    %1341 = vmatprep.subr.mxu0 0.0
    %1342 = vmatpush1.xpose.msra.mxu0 %v1309
    %1343 = vmatprep.subr.mxu0 0.0
    %1344 = vmatpush2.xpose.msra.mxu0 0.0
    %1345 = vmatprep.subr.mxu0 0.0
    %1346 = vmatpush2.xpose.msra.mxu0 0.0
    %1347 = vmatprep.subr.mxu0 0.0
    %1348 = vmatpush2.xpose.msra.mxu0 0.0
    %1349 = vmatprep.subr.mxu0 0.0
    %1350 = vmatpush2.xpose.msra.mxu0 0.0
    %1351 = vmatprep.subr.mxu0 0.0
    %1352 = vmatpush2.xpose.msra.mxu0 0.0
    %1353 = vmatprep.subr.mxu0 0.0
    %1354 = vmatpush2.xpose.msra.mxu0 0.0
    %1355 = vmatprep.subr.mxu0 0.0
    %1356 = vmatpush2.xpose.msra.mxu0 0.0
    %1357 = vmatprep.subr.mxu0 0.0
    %1358 = vmatpush2.xpose.msra.mxu0 0.0
    %1359 = vmatprep.subr.mxu0 0.0
    %1360 = vmatpush2.xpose.msra.mxu0 0.0
    %1361 = vmatprep.subr.mxu0 0.0
    %1362 = vmatpush2.xpose.msra.mxu0 0.0
    %1363 = vmatprep.subr.mxu0 0.0
    %1364 = vmatpush2.xpose.msra.mxu0 0.0
    %1365 = vmatprep.subr.mxu0 0.0
    %1366 = vmatpush2.xpose.msra.mxu0 0.0
    %1367 = vmatprep.subr.mxu0 0.0
    %1368 = vmatpush2.xpose.msra.mxu0 0.0
    %1369 = vmatprep.subr.mxu0 0.0
    %1370 = vmatpush2.xpose.msra.mxu0 0.0
    %1371 = vmatprep.subr.mxu0 0.0
    %1372 = vmatpush2.xpose.msra.mxu0 0.0
    %1373 = vmatprep.subr.mxu0 0.0
    %1374 = vmatpush2.xpose.msra.mxu0 0.0
    %1375 = vmatprep.mubr.f32.mxu0 0.0
    %1376 = vmatmul.mubr.f32.gmra.mxu0 %v1307
    %v1377 = vpop.f32.mrf.mxu0
    %v1378 = vadd.f32 0.0, %v1377
    %v1379 = vpop.f32.mrf.mxu0
    %1380 = vdwg.mxu0
    %v1381 = vmul.f32 %v1300, 0.35355338
    %v1382 = vmul.f32 %v1378, 0.35355338
    %v1383 = vadd.f32 %v1381, %v374
    %v1384 = vadd.f32 %v1382, %v378
    %v1385 = vsel %vm215, %v1383, -inf
    %1386 = vmax.xlane.f32.xlu0 %v1385
    %v1387 = vpop.xlane.xlu0 %1386
    %v1388 = vsel %vm215, %v1384, -inf
    %1389 = vmax.xlane.f32.xlu0 %v1388
    %v1390 = vpop.xlane.xlu0 %1389
    %v1391 = vsub.f32 %v1383, %v1387
    %v1392 = vsub.f32 %v1384, %v1390
    %v1393 = vmul.f32 %v1391, 1.442695
    %v1394 = vpow.pop %v1393
    %v1395 = vmul.f32 %v1392, 1.442695
    %v1396 = vpow.pop %v1395
    %v1397 = vsel %vm215, %v1394, 0.0
    %1398 = vadd.xlane.f32.xlu0 %v1397
    %v1399 = vpop.xlane.xlu0 %1398
    %v1400 = vsel %vm215, %v1396, 0.0
    %1401 = vadd.xlane.f32.xlu0 %v1400
    %v1402 = vpop.xlane.xlu0 %1401
    %v1403 = vrcp.pop %v1399
    %v1404 = vmul.f32 %v1394, %v1403
    %v1405 = vrcp.pop %v1402
    %v1406 = vmul.f32 %v1396, %v1405
    %1407 = vrot.lane.b32.xlu0 %v204, 40
    %v1408 = vpop.permute.xlu0 %1407
    %v1411 = vsel %vm215, %v1404, 0
    %1413 = vmatprep.subr.mxu0 0.0
    %1414 = vmatpush1.msra.mxu0 0.0
    %1415 = vmatprep.subr.mxu0 0.0
    %1416 = vmatpush1.msra.mxu0 0.0
    %1417 = vmatprep.subr.mxu0 0.0
    %1418 = vmatpush1.msra.mxu0 0.0
    %1419 = vmatprep.subr.mxu0 0.0
    %1420 = vmatpush1.msra.mxu0 0.0
    %1421 = vmatprep.subr.mxu0 0.0
    %1422 = vmatpush1.msra.mxu0 0.0
    %1423 = vmatprep.subr.mxu0 0.0
    %1424 = vmatpush1.msra.mxu0 0.0
    %1425 = vmatprep.subr.mxu0 0.0
    %1426 = vmatpush1.msra.mxu0 0.0
    %1427 = vmatprep.subr.mxu0 0.0
    %1428 = vmatpush1.msra.mxu0 0.0
    %1429 = vmatprep.subr.mxu0 0.0
    %1430 = vmatpush1.msra.mxu0 0.0
    %1431 = vmatprep.subr.mxu0 0.0
    %1432 = vmatpush1.msra.mxu0 0.0
    %1433 = vmatprep.subr.mxu0 0.0
    %1434 = vmatpush1.msra.mxu0 0.0
    %1435 = vmatprep.subr.mxu0 0.0
    %1436 = vmatpush1.msra.mxu0 0.0
    %1437 = vmatprep.subr.mxu0 0.0
    %1438 = vmatpush1.msra.mxu0 0.0
    %1439 = vmatprep.subr.mxu0 0.0
    %1440 = vmatpush1.msra.mxu0 0.0
    %1441 = vmatprep.subr.mxu0 0.0
    %1442 = vmatpush1.msra.mxu0 0.0
    %1443 = vmatprep.subr.mxu0 0.0
    %1444 = vmatpush1.msra.mxu0 %v1408
    %1445 = vmatprep.subr.mxu0 0.0
    %1446 = vmatpush2.msra.mxu0 0.0
    %1447 = vmatprep.subr.mxu0 0.0
    %1448 = vmatpush2.msra.mxu0 0.0
    %1449 = vmatprep.subr.mxu0 0.0
    %1450 = vmatpush2.msra.mxu0 0.0
    %1451 = vmatprep.subr.mxu0 0.0
    %1452 = vmatpush2.msra.mxu0 0.0
    %1453 = vmatprep.subr.mxu0 0.0
    %1454 = vmatpush2.msra.mxu0 0.0
    %1455 = vmatprep.subr.mxu0 0.0
    %1456 = vmatpush2.msra.mxu0 0.0
    %1457 = vmatprep.subr.mxu0 0.0
    %1458 = vmatpush2.msra.mxu0 0.0
    %1459 = vmatprep.subr.mxu0 0.0
    %1460 = vmatpush2.msra.mxu0 0.0
    %1461 = vmatprep.subr.mxu0 0.0
    %1462 = vmatpush2.msra.mxu0 0.0
    %1463 = vmatprep.subr.mxu0 0.0
    %1464 = vmatpush2.msra.mxu0 0.0
    %1465 = vmatprep.subr.mxu0 0.0
    %1466 = vmatpush2.msra.mxu0 0.0
    %1467 = vmatprep.subr.mxu0 0.0
    %1468 = vmatpush2.msra.mxu0 0.0
    %1469 = vmatprep.subr.mxu0 0.0
    %1470 = vmatpush2.msra.mxu0 0.0
    %1471 = vmatprep.subr.mxu0 0.0
    %1472 = vmatpush2.msra.mxu0 0.0
    %1473 = vmatprep.subr.mxu0 0.0
    %1474 = vmatpush2.msra.mxu0 0.0
    %1475 = vmatprep.subr.mxu0 0.0
    %1476 = vmatpush2.msra.mxu0 0.0
    %1477 = vmatprep.mubr.f32.mxu0 0.0
    %1478 = vmatmul.mubr.f32.gmra.mxu0 %v1411
    %v1479 = vpop.f32.mrf.mxu0
    %v1480 = vadd.f32 0.0, %v1479
    %v1481 = vpop.f32.mrf.mxu0
    %1482 = vdwg.mxu0
    %1483 = vrot.lane.b32.xlu0 %v209, 40
    %v1484 = vpop.permute.xlu0 %1483
    %v1487 = vsel %vm215, %v1406, 0
    %1489 = vmatprep.subr.mxu0 0.0
    %1490 = vmatpush1.msra.mxu0 0.0
    %1491 = vmatprep.subr.mxu0 0.0
    %1492 = vmatpush1.msra.mxu0 0.0
    %1493 = vmatprep.subr.mxu0 0.0
    %1494 = vmatpush1.msra.mxu0 0.0
    %1495 = vmatprep.subr.mxu0 0.0
    %1496 = vmatpush1.msra.mxu0 0.0
    %1497 = vmatprep.subr.mxu0 0.0
    %1498 = vmatpush1.msra.mxu0 0.0
    %1499 = vmatprep.subr.mxu0 0.0
    %1500 = vmatpush1.msra.mxu0 0.0
    %1501 = vmatprep.subr.mxu0 0.0
    %1502 = vmatpush1.msra.mxu0 0.0
    %1503 = vmatprep.subr.mxu0 0.0
    %1504 = vmatpush1.msra.mxu0 0.0
    %1505 = vmatprep.subr.mxu0 0.0
    %1506 = vmatpush1.msra.mxu0 0.0
    %1507 = vmatprep.subr.mxu0 0.0
    %1508 = vmatpush1.msra.mxu0 0.0
    %1509 = vmatprep.subr.mxu0 0.0
    %1510 = vmatpush1.msra.mxu0 0.0
    %1511 = vmatprep.subr.mxu0 0.0
    %1512 = vmatpush1.msra.mxu0 0.0
    %1513 = vmatprep.subr.mxu0 0.0
    %1514 = vmatpush1.msra.mxu0 0.0
    %1515 = vmatprep.subr.mxu0 0.0
    %1516 = vmatpush1.msra.mxu0 0.0
    %1517 = vmatprep.subr.mxu0 0.0
    %1518 = vmatpush1.msra.mxu0 0.0
    %1519 = vmatprep.subr.mxu0 0.0
    %1520 = vmatpush1.msra.mxu0 %v1484
    %1521 = vmatprep.subr.mxu0 0.0
    %1522 = vmatpush2.msra.mxu0 0.0
    %1523 = vmatprep.subr.mxu0 0.0
    %1524 = vmatpush2.msra.mxu0 0.0
    %1525 = vmatprep.subr.mxu0 0.0
    %1526 = vmatpush2.msra.mxu0 0.0
    %1527 = vmatprep.subr.mxu0 0.0
    %1528 = vmatpush2.msra.mxu0 0.0
    %1529 = vmatprep.subr.mxu0 0.0
    %1530 = vmatpush2.msra.mxu0 0.0
    %1531 = vmatprep.subr.mxu0 0.0
    %1532 = vmatpush2.msra.mxu0 0.0
    %1533 = vmatprep.subr.mxu0 0.0
    %1534 = vmatpush2.msra.mxu0 0.0
    %1535 = vmatprep.subr.mxu0 0.0
    %1536 = vmatpush2.msra.mxu0 0.0
    %1537 = vmatprep.subr.mxu0 0.0
    %1538 = vmatpush2.msra.mxu0 0.0
    %1539 = vmatprep.subr.mxu0 0.0
    %1540 = vmatpush2.msra.mxu0 0.0
    %1541 = vmatprep.subr.mxu0 0.0
    %1542 = vmatpush2.msra.mxu0 0.0
    %1543 = vmatprep.subr.mxu0 0.0
    %1544 = vmatpush2.msra.mxu0 0.0
    %1545 = vmatprep.subr.mxu0 0.0
    %1546 = vmatpush2.msra.mxu0 0.0
    %1547 = vmatprep.subr.mxu0 0.0
    %1548 = vmatpush2.msra.mxu0 0.0
    %1549 = vmatprep.subr.mxu0 0.0
    %1550 = vmatpush2.msra.mxu0 0.0
    %1551 = vmatprep.subr.mxu0 0.0
    %1552 = vmatpush2.msra.mxu0 0.0
    %1553 = vmatprep.mubr.f32.mxu0 0.0
    %1554 = vmatmul.mubr.f32.gmra.mxu0 %v1487
    %v1555 = vpop.f32.mrf.mxu0
    %v1556 = vadd.f32 0.0, %v1555
    %v1557 = vpop.f32.mrf.mxu0
    %1558 = vdwg.mxu0
    %1561 = vrot.lane.b32.xlu0 %v812, 8
    %v1562 = vpop.permute.xlu0 %1561
    %1563 = vrot.lane.b32.xlu0 %v888, 8
    %v1564 = vpop.permute.xlu0 %1563
    %1569 = vrot.lane.b32.xlu0 %v1146, 16
    %v1570 = vpop.permute.xlu0 %1569
    %1571 = vrot.lane.b32.xlu0 %v1222, 16
    %v1572 = vpop.permute.xlu0 %1571
    %1577 = vrot.lane.b32.xlu0 %v1480, 24
    %v1578 = vpop.permute.xlu0 %1577
    %1579 = vrot.lane.b32.xlu0 %v1556, 24
    %v1580 = vpop.permute.xlu0 %1579
    %v1583 = vsel %vm215, %v478, %v1562
    %v1584 = vsel %vm215, %v554, %v1564
    %vm1585 = vcmask 130048
    %v1586 = vsel %vm1585, %v1583, %v1570
    %v1587 = vsel %vm1585, %v1584, %v1572
    %vm1588 = vcmask 195584
    %v1589 = vsel %vm1588, %v1586, %v1578
    %v1590 = vsel %vm1588, %v1587, %v1580
    %v1591 = vld [vmem:[%s5] sm:$0xff]
    %v1592 = vld [vmem:[%s5 + $0x8] sm:$0xff]
    %v1593 = vld [vmem:[%s5 + $0x10] sm:$0xff]
    %v1594 = vld [vmem:[%s5 + $0x18] sm:$0xff]
    %v1595 = vld [vmem:[%s6] sm:$0x1]
    %v1597 = vlaneseq
    %v1598 = vshrl.u32 %v1597, 7
    %v1599 = vsub.s32 0, %v1598
    %v1600 = vrot.slane %v1595, %v1599
    %v1603 = vsel %vm78, %v1589, 0
    %v1606 = vsel %vm78, %v1590, 0
    %1608 = vmatprep.subr.mxu0 0.0
    %1609 = vmatpush1.msra.mxu0 0.0
    %1610 = vmatprep.subr.mxu0 0.0
    %1611 = vmatpush1.msra.mxu0 0.0
    %1612 = vmatprep.subr.mxu0 0.0
    %1613 = vmatpush1.msra.mxu0 0.0
    %1614 = vmatprep.subr.mxu0 0.0
    %1615 = vmatpush1.msra.mxu0 0.0
    %1616 = vmatprep.subr.mxu0 0.0
    %1617 = vmatpush1.msra.mxu0 0.0
    %1618 = vmatprep.subr.mxu0 0.0
    %1619 = vmatpush1.msra.mxu0 0.0
    %1620 = vmatprep.subr.mxu0 0.0
    %1621 = vmatpush1.msra.mxu0 0.0
    %1622 = vmatprep.subr.mxu0 0.0
    %1623 = vmatpush1.msra.mxu0 0.0
    %1624 = vmatprep.subr.mxu0 0.0
    %1625 = vmatpush1.msra.mxu0 0.0
    %1626 = vmatprep.subr.mxu0 0.0
    %1627 = vmatpush1.msra.mxu0 0.0
    %1628 = vmatprep.subr.mxu0 0.0
    %1629 = vmatpush1.msra.mxu0 0.0
    %1630 = vmatprep.subr.mxu0 0.0
    %1631 = vmatpush1.msra.mxu0 0.0
    %1632 = vmatprep.subr.mxu0 0.0
    %1633 = vmatpush1.msra.mxu0 %v1594
    %1634 = vmatprep.subr.mxu0 0.0
    %1635 = vmatpush1.msra.mxu0 %v1593
    %1636 = vmatprep.subr.mxu0 0.0
    %1637 = vmatpush1.msra.mxu0 %v1592
    %1638 = vmatprep.subr.mxu0 0.0
    %1639 = vmatpush1.msra.mxu0 %v1591
    %1640 = vmatprep.subr.mxu0 0.0
    %1641 = vmatpush2.msra.mxu0 0.0
    %1642 = vmatprep.subr.mxu0 0.0
    %1643 = vmatpush2.msra.mxu0 0.0
    %1644 = vmatprep.subr.mxu0 0.0
    %1645 = vmatpush2.msra.mxu0 0.0
    %1646 = vmatprep.subr.mxu0 0.0
    %1647 = vmatpush2.msra.mxu0 0.0
    %1648 = vmatprep.subr.mxu0 0.0
    %1649 = vmatpush2.msra.mxu0 0.0
    %1650 = vmatprep.subr.mxu0 0.0
    %1651 = vmatpush2.msra.mxu0 0.0
    %1652 = vmatprep.subr.mxu0 0.0
    %1653 = vmatpush2.msra.mxu0 0.0
    %1654 = vmatprep.subr.mxu0 0.0
    %1655 = vmatpush2.msra.mxu0 0.0
    %1656 = vmatprep.subr.mxu0 0.0
    %1657 = vmatpush2.msra.mxu0 0.0
    %1658 = vmatprep.subr.mxu0 0.0
    %1659 = vmatpush2.msra.mxu0 0.0
    %1660 = vmatprep.subr.mxu0 0.0
    %1661 = vmatpush2.msra.mxu0 0.0
    %1662 = vmatprep.subr.mxu0 0.0
    %1663 = vmatpush2.msra.mxu0 0.0
    %1664 = vmatprep.subr.mxu0 0.0
    %1665 = vmatpush2.msra.mxu0 0.0
    %1666 = vmatprep.subr.mxu0 0.0
    %1667 = vmatpush2.msra.mxu0 0.0
    %1668 = vmatprep.subr.mxu0 0.0
    %1669 = vmatpush2.msra.mxu0 0.0
    %1670 = vmatprep.subr.mxu0 0.0
    %1671 = vmatpush2.msra.mxu0 0.0
    %1672 = vmatprep.mubr.f32.mxu0 0.0
    %1673 = vmatmul.mubr.f32.gmra.mxu0 %v1603
    %v1674 = vpop.f32.mrf.mxu0
    %v1675 = vadd.f32 %v1600, %v1674
    %v1676 = vpop.f32.mrf.mxu0
    %1677 = vmatprep.mubr.f32.mxu0 0.0
    %1678 = vmatmul.mubr.f32.gmra.mxu0 %v1606
    %v1679 = vpop.f32.mrf.mxu0
    %v1680 = vadd.f32 %v1600, %v1679
    %v1681 = vpop.f32.mrf.mxu0
    %1682 = vdwg.mxu0
    %v1683 = vld [vmem:[%s7] sm:$0x3]
    %v1684 = vadd.f32 %v116, %v1675
    %v1685 = vadd.f32 %v117, %v1680
    %v1686 = vsel %vm78, %v1684, 0.0
    %1687 = vadd.xlane.f32.xlu0 %v1686
    %v1688 = vpop.xlane.xlu0 %1687
    %v1689 = vsel %vm78, %v1685, 0.0
    %1690 = vadd.xlane.f32.xlu0 %v1689
    %v1691 = vpop.xlane.xlu0 %1690
    %v1692 = vmul.f32 %v1688, %v85
    %v1693 = vmul.f32 %v1691, %v85
    %v1694 = vsub.f32 %v1684, %v1692
    %v1695 = vsub.f32 %v1685, %v1693
    %v1696 = vmul.f32 %v1694, %v1694
    %v1697 = vmul.f32 %v1695, %v1695
    %v1698 = vsel %vm78, %v1696, 0.0
    %1699 = vadd.xlane.f32.xlu0 %v1698
    %v1700 = vpop.xlane.xlu0 %1699
    %v1701 = vsel %vm78, %v1697, 0.0
    %1702 = vadd.xlane.f32.xlu0 %v1701
    %v1703 = vpop.xlane.xlu0 %1702
    %v1704 = vmul.f32 %v1700, %v85
    %v1705 = vmul.f32 %v1703, %v85
    %v1706 = vadd.f32 %v1704, 1e-05
    %v1707 = vadd.f32 %v1705, 1e-05
    %v1708 = vrsqrt.pop %v1706
    %v1709 = vrsqrt.pop %v1707
    %v1710 = vmul.f32 %v1694, %v1708
    %v1711 = vmul.f32 %v1695, %v1709
    %v1712 = vlaneseq
    %v1713 = vshrl.u32 %v1712, 7
    %v1714 = vsub.s32 0, %v1713
    %v1715 = vrot.slane %v1683, %v1714
    %v1716 = vmul.f32 %v1710, %v1715
    %v1717 = vmul.f32 %v1711, %v1715
    %v1718 = vlaneseq
    %v1719 = vshrl.u32 %v1718, 7
    %v1720 = vsub.s32 1, %v1719
    %v1721 = vrot.slane %v1683, %v1720
    %v1722 = vadd.f32 %v1716, %v1721
    %v1723 = vadd.f32 %v1717, %v1721
    %v1724 = vld [vmem:[%s8] sm:$0xff]
    %v1725 = vld [vmem:[%s8 + $0x8] sm:$0xff]
    %v1726 = vld [vmem:[%s8 + $0x10] sm:$0xff]
    %v1727 = vld [vmem:[%s8 + $0x18] sm:$0xff]
    %v1728 = vld [vmem:[%s9] sm:$0x1]
    %v1730 = vlaneseq
    %v1731 = vshrl.u32 %v1730, 7
    %v1732 = vsub.s32 0, %v1731
    %v1733 = vrot.slane %v1728, %v1732
    %v1736 = vsel %vm78, %v1722, 0
    %v1739 = vsel %vm78, %v1723, 0
    %1741 = vmatprep.subr.mxu0 0.0
    %1742 = vmatpush1.msra.mxu0 0.0
    %1743 = vmatprep.subr.mxu0 0.0
    %1744 = vmatpush1.msra.mxu0 0.0
    %1745 = vmatprep.subr.mxu0 0.0
    %1746 = vmatpush1.msra.mxu0 0.0
    %1747 = vmatprep.subr.mxu0 0.0
    %1748 = vmatpush1.msra.mxu0 0.0
    %1749 = vmatprep.subr.mxu0 0.0
    %1750 = vmatpush1.msra.mxu0 0.0
    %1751 = vmatprep.subr.mxu0 0.0
    %1752 = vmatpush1.msra.mxu0 0.0
    %1753 = vmatprep.subr.mxu0 0.0
    %1754 = vmatpush1.msra.mxu0 0.0
    %1755 = vmatprep.subr.mxu0 0.0
    %1756 = vmatpush1.msra.mxu0 0.0
    %1757 = vmatprep.subr.mxu0 0.0
    %1758 = vmatpush1.msra.mxu0 0.0
    %1759 = vmatprep.subr.mxu0 0.0
    %1760 = vmatpush1.msra.mxu0 0.0
    %1761 = vmatprep.subr.mxu0 0.0
    %1762 = vmatpush1.msra.mxu0 0.0
    %1763 = vmatprep.subr.mxu0 0.0
    %1764 = vmatpush1.msra.mxu0 0.0
    %1765 = vmatprep.subr.mxu0 0.0
    %1766 = vmatpush1.msra.mxu0 %v1727
    %1767 = vmatprep.subr.mxu0 0.0
    %1768 = vmatpush1.msra.mxu0 %v1726
    %1769 = vmatprep.subr.mxu0 0.0
    %1770 = vmatpush1.msra.mxu0 %v1725
    %1771 = vmatprep.subr.mxu0 0.0
    %1772 = vmatpush1.msra.mxu0 %v1724
    %1773 = vmatprep.subr.mxu0 0.0
    %1774 = vmatpush2.msra.mxu0 0.0
    %1775 = vmatprep.subr.mxu0 0.0
    %1776 = vmatpush2.msra.mxu0 0.0
    %1777 = vmatprep.subr.mxu0 0.0
    %1778 = vmatpush2.msra.mxu0 0.0
    %1779 = vmatprep.subr.mxu0 0.0
    %1780 = vmatpush2.msra.mxu0 0.0
    %1781 = vmatprep.subr.mxu0 0.0
    %1782 = vmatpush2.msra.mxu0 0.0
    %1783 = vmatprep.subr.mxu0 0.0
    %1784 = vmatpush2.msra.mxu0 0.0
    %1785 = vmatprep.subr.mxu0 0.0
    %1786 = vmatpush2.msra.mxu0 0.0
    %1787 = vmatprep.subr.mxu0 0.0
    %1788 = vmatpush2.msra.mxu0 0.0
    %1789 = vmatprep.subr.mxu0 0.0
    %1790 = vmatpush2.msra.mxu0 0.0
    %1791 = vmatprep.subr.mxu0 0.0
    %1792 = vmatpush2.msra.mxu0 0.0
    %1793 = vmatprep.subr.mxu0 0.0
    %1794 = vmatpush2.msra.mxu0 0.0
    %1795 = vmatprep.subr.mxu0 0.0
    %1796 = vmatpush2.msra.mxu0 0.0
    %1797 = vmatprep.subr.mxu0 0.0
    %1798 = vmatpush2.msra.mxu0 0.0
    %1799 = vmatprep.subr.mxu0 0.0
    %1800 = vmatpush2.msra.mxu0 0.0
    %1801 = vmatprep.subr.mxu0 0.0
    %1802 = vmatpush2.msra.mxu0 0.0
    %1803 = vmatprep.subr.mxu0 0.0
    %1804 = vmatpush2.msra.mxu0 0.0
    %1805 = vmatprep.mubr.f32.mxu0 0.0
    %1806 = vmatmul.mubr.f32.gmra.mxu0 %v1736
    %v1807 = vpop.f32.mrf.mxu0
    %v1808 = vadd.f32 %v1733, %v1807
    %v1809 = vpop.f32.mrf.mxu0
    %1810 = vmatprep.mubr.f32.mxu0 0.0
    %1811 = vmatmul.mubr.f32.gmra.mxu0 %v1739
    %v1812 = vpop.f32.mrf.mxu0
    %v1813 = vadd.f32 %v1733, %v1812
    %v1814 = vpop.f32.mrf.mxu0
    %1815 = vdwg.mxu0
    %v1816 = vmul.f32 %v1808, 0.5
    %v1817 = vmul.f32 %v1813, 0.5
    %v1818 = vmul.f32 %v1808, 0.044715
    %v1819 = vmul.f32 %v1813, 0.044715
    %v1820 = vmul.f32 %v1818, %v1808
    %v1821 = vmul.f32 %v1819, %v1813
    %v1822 = vmul.f32 %v1820, %v1808
    %v1823 = vmul.f32 %v1821, %v1813
    %v1824 = vadd.f32 %v1808, %v1822
    %v1825 = vadd.f32 %v1813, %v1823
    %v1826 = vmul.f32 %v1824, 0.7978846
    %v1827 = vmul.f32 %v1825, 0.7978846
    %v1828 = vtanh.pop %v1826
    %v1829 = vtanh.pop %v1827
    %v1830 = vadd.f32 %v1828, 1.0
    %v1831 = vadd.f32 %v1829, 1.0
    %v1832 = vmul.f32 %v1816, %v1830
    %v1833 = vmul.f32 %v1817, %v1831
    %v1834 = vld [vmem:[%s10] sm:$0xff]
    %v1835 = vld [vmem:[%s10 + $0x8] sm:$0xff]
    %v1836 = vld [vmem:[%s10 + $0x10] sm:$0xff]
    %v1837 = vld [vmem:[%s10 + $0x18] sm:$0xff]
    %v1838 = vld [vmem:[%s10 + $0x20] sm:$0xff]
    %v1839 = vld [vmem:[%s10 + $0x28] sm:$0xff]
    %v1840 = vld [vmem:[%s10 + $0x30] sm:$0xff]
    %v1841 = vld [vmem:[%s10 + $0x38] sm:$0xff]
    %v1842 = vld [vmem:[%s11] sm:$0x1]
    %v1844 = vlaneseq
    %v1845 = vshrl.u32 %v1844, 7
    %v1846 = vsub.s32 0, %v1845
    %v1847 = vrot.slane %v1842, %v1846
    %vm1849 = vcmask 523264
    %v1851 = vsel %vm1849, %v1832, 0
    %v1854 = vsel %vm1849, %v1833, 0
    %1856 = vmatprep.subr.mxu0 0.0
    %1857 = vmatpush1.msra.mxu0 0.0
    %1858 = vmatprep.subr.mxu0 0.0
    %1859 = vmatpush1.msra.mxu0 0.0
    %1860 = vmatprep.subr.mxu0 0.0
    %1861 = vmatpush1.msra.mxu0 0.0
    %1862 = vmatprep.subr.mxu0 0.0
    %1863 = vmatpush1.msra.mxu0 0.0
    %1864 = vmatprep.subr.mxu0 0.0
    %1865 = vmatpush1.msra.mxu0 0.0
    %1866 = vmatprep.subr.mxu0 0.0
    %1867 = vmatpush1.msra.mxu0 0.0
    %1868 = vmatprep.subr.mxu0 0.0
    %1869 = vmatpush1.msra.mxu0 0.0
    %1870 = vmatprep.subr.mxu0 0.0
    %1871 = vmatpush1.msra.mxu0 0.0
    %1872 = vmatprep.subr.mxu0 0.0
    %1873 = vmatpush1.msra.mxu0 %v1841
    %1874 = vmatprep.subr.mxu0 0.0
    %1875 = vmatpush1.msra.mxu0 %v1840
    %1876 = vmatprep.subr.mxu0 0.0
    %1877 = vmatpush1.msra.mxu0 %v1839
    %1878 = vmatprep.subr.mxu0 0.0
    %1879 = vmatpush1.msra.mxu0 %v1838
    %1880 = vmatprep.subr.mxu0 0.0
    %1881 = vmatpush1.msra.mxu0 %v1837
    %1882 = vmatprep.subr.mxu0 0.0
    %1883 = vmatpush1.msra.mxu0 %v1836
    %1884 = vmatprep.subr.mxu0 0.0
    %1885 = vmatpush1.msra.mxu0 %v1835
    %1886 = vmatprep.subr.mxu0 0.0
    %1887 = vmatpush1.msra.mxu0 %v1834
    %1888 = vmatprep.subr.mxu0 0.0
    %1889 = vmatpush2.msra.mxu0 0.0
    %1890 = vmatprep.subr.mxu0 0.0
    %1891 = vmatpush2.msra.mxu0 0.0
    %1892 = vmatprep.subr.mxu0 0.0
    %1893 = vmatpush2.msra.mxu0 0.0
    %1894 = vmatprep.subr.mxu0 0.0
    %1895 = vmatpush2.msra.mxu0 0.0
    %1896 = vmatprep.subr.mxu0 0.0
    %1897 = vmatpush2.msra.mxu0 0.0
    %1898 = vmatprep.subr.mxu0 0.0
    %1899 = vmatpush2.msra.mxu0 0.0
    %1900 = vmatprep.subr.mxu0 0.0
    %1901 = vmatpush2.msra.mxu0 0.0
    %1902 = vmatprep.subr.mxu0 0.0
    %1903 = vmatpush2.msra.mxu0 0.0
    %1904 = vmatprep.subr.mxu0 0.0
    %1905 = vmatpush2.msra.mxu0 0.0
    %1906 = vmatprep.subr.mxu0 0.0
    %1907 = vmatpush2.msra.mxu0 0.0
    %1908 = vmatprep.subr.mxu0 0.0
    %1909 = vmatpush2.msra.mxu0 0.0
    %1910 = vmatprep.subr.mxu0 0.0
    %1911 = vmatpush2.msra.mxu0 0.0
    %1912 = vmatprep.subr.mxu0 0.0
    %1913 = vmatpush2.msra.mxu0 0.0
    %1914 = vmatprep.subr.mxu0 0.0
    %1915 = vmatpush2.msra.mxu0 0.0
    %1916 = vmatprep.subr.mxu0 0.0
    %1917 = vmatpush2.msra.mxu0 0.0
    %1918 = vmatprep.subr.mxu0 0.0
    %1919 = vmatpush2.msra.mxu0 0.0
    %1920 = vmatprep.mubr.f32.mxu0 0.0
    %1921 = vmatmul.mubr.f32.gmra.mxu0 %v1851
    %v1922 = vpop.f32.mrf.mxu0
    %v1923 = vadd.f32 %v1847, %v1922
    %v1924 = vpop.f32.mrf.mxu0
    %1925 = vmatprep.mubr.f32.mxu0 0.0
    %1926 = vmatmul.mubr.f32.gmra.mxu0 %v1854
    %v1927 = vpop.f32.mrf.mxu0
    %v1928 = vadd.f32 %v1847, %v1927
    %v1929 = vpop.f32.mrf.mxu0
    %1930 = vdwg.mxu0
    %v1931 = vld [vmem:[%s12] sm:$0x3]
    %v1932 = vadd.f32 %v1722, %v1923
    %v1933 = vadd.f32 %v1723, %v1928
    %v1934 = vsel %vm78, %v1932, 0.0
    %1935 = vadd.xlane.f32.xlu0 %v1934
    %v1936 = vpop.xlane.xlu0 %1935
    %v1937 = vsel %vm78, %v1933, 0.0
    %1938 = vadd.xlane.f32.xlu0 %v1937
    %v1939 = vpop.xlane.xlu0 %1938
    %v1940 = vmul.f32 %v1936, %v85
    %v1941 = vmul.f32 %v1939, %v85
    %v1942 = vsub.f32 %v1932, %v1940
    %v1943 = vsub.f32 %v1933, %v1941
    %v1944 = vmul.f32 %v1942, %v1942
    %v1945 = vmul.f32 %v1943, %v1943
    %v1946 = vsel %vm78, %v1944, 0.0
    %1947 = vadd.xlane.f32.xlu0 %v1946
    %v1948 = vpop.xlane.xlu0 %1947
    %v1949 = vsel %vm78, %v1945, 0.0
    %1950 = vadd.xlane.f32.xlu0 %v1949
    %v1951 = vpop.xlane.xlu0 %1950
    %v1952 = vmul.f32 %v1948, %v85
    %v1953 = vmul.f32 %v1951, %v85
    %v1954 = vadd.f32 %v1952, 1e-05
    %v1955 = vadd.f32 %v1953, 1e-05
    %v1956 = vrsqrt.pop %v1954
    %v1957 = vrsqrt.pop %v1955
    %v1958 = vmul.f32 %v1942, %v1956
    %v1959 = vmul.f32 %v1943, %v1957
    %v1960 = vlaneseq
    %v1961 = vshrl.u32 %v1960, 7
    %v1962 = vsub.s32 0, %v1961
    %v1963 = vrot.slane %v1931, %v1962
    %v1964 = vmul.f32 %v1958, %v1963
    %v1965 = vmul.f32 %v1959, %v1963
    %v1966 = vlaneseq
    %v1967 = vshrl.u32 %v1966, 7
    %v1968 = vsub.s32 1, %v1967
    %v1969 = vrot.slane %v1931, %v1968
    %v1970 = vadd.f32 %v1964, %v1969
    %v1971 = vadd.f32 %v1965, %v1969
    %s1972 = scalar_lea.vmem %s3, 32
    %v1973 = vld [vmem:[%s1972] sm:$0xff]
    %v1974 = vld [vmem:[%s1972 + $0x8] sm:$0xff]
    %v1975 = vld [vmem:[%s1972 + $0x10] sm:$0xff]
    %v1976 = vld [vmem:[%s1972 + $0x18] sm:$0xff]
    %s1977 = scalar_lea.vmem %s4, 1
    %v1978 = vld [vmem:[%s1977] sm:$0x1]
    %v1980 = vlaneseq
    %v1981 = vshrl.u32 %v1980, 7
    %v1982 = vsub.s32 0, %v1981
    %v1983 = vrot.slane %v1978, %v1982
    %v1986 = vsel %vm78, %v1970, 0
    %v1989 = vsel %vm78, %v1971, 0
    %1991 = vmatprep.subr.mxu0 0.0
    %1992 = vmatpush1.msra.mxu0 0.0
    %1993 = vmatprep.subr.mxu0 0.0
    %1994 = vmatpush1.msra.mxu0 0.0
    %1995 = vmatprep.subr.mxu0 0.0
    %1996 = vmatpush1.msra.mxu0 0.0
    %1997 = vmatprep.subr.mxu0 0.0
    %1998 = vmatpush1.msra.mxu0 0.0
    %1999 = vmatprep.subr.mxu0 0.0
    %2000 = vmatpush1.msra.mxu0 0.0
    %2001 = vmatprep.subr.mxu0 0.0
    %2002 = vmatpush1.msra.mxu0 0.0
    %2003 = vmatprep.subr.mxu0 0.0
    %2004 = vmatpush1.msra.mxu0 0.0
    %2005 = vmatprep.subr.mxu0 0.0
    %2006 = vmatpush1.msra.mxu0 0.0
    %2007 = vmatprep.subr.mxu0 0.0
    %2008 = vmatpush1.msra.mxu0 0.0
    %2009 = vmatprep.subr.mxu0 0.0
    %2010 = vmatpush1.msra.mxu0 0.0
    %2011 = vmatprep.subr.mxu0 0.0
    %2012 = vmatpush1.msra.mxu0 0.0
    %2013 = vmatprep.subr.mxu0 0.0
    %2014 = vmatpush1.msra.mxu0 0.0
    %2015 = vmatprep.subr.mxu0 0.0
    %2016 = vmatpush1.msra.mxu0 %v1976
    %2017 = vmatprep.subr.mxu0 0.0
    %2018 = vmatpush1.msra.mxu0 %v1975
    %2019 = vmatprep.subr.mxu0 0.0
    %2020 = vmatpush1.msra.mxu0 %v1974
    %2021 = vmatprep.subr.mxu0 0.0
    %2022 = vmatpush1.msra.mxu0 %v1973
    %2023 = vmatprep.subr.mxu0 0.0
    %2024 = vmatpush2.msra.mxu0 0.0
    %2025 = vmatprep.subr.mxu0 0.0
    %2026 = vmatpush2.msra.mxu0 0.0
    %2027 = vmatprep.subr.mxu0 0.0
    %2028 = vmatpush2.msra.mxu0 0.0
    %2029 = vmatprep.subr.mxu0 0.0
    %2030 = vmatpush2.msra.mxu0 0.0
    %2031 = vmatprep.subr.mxu0 0.0
    %2032 = vmatpush2.msra.mxu0 0.0
    %2033 = vmatprep.subr.mxu0 0.0
    %2034 = vmatpush2.msra.mxu0 0.0
    %2035 = vmatprep.subr.mxu0 0.0
    %2036 = vmatpush2.msra.mxu0 0.0
    %2037 = vmatprep.subr.mxu0 0.0
    %2038 = vmatpush2.msra.mxu0 0.0
    %2039 = vmatprep.subr.mxu0 0.0
    %2040 = vmatpush2.msra.mxu0 0.0
    %2041 = vmatprep.subr.mxu0 0.0
    %2042 = vmatpush2.msra.mxu0 0.0
    %2043 = vmatprep.subr.mxu0 0.0
    %2044 = vmatpush2.msra.mxu0 0.0
    %2045 = vmatprep.subr.mxu0 0.0
    %2046 = vmatpush2.msra.mxu0 0.0
    %2047 = vmatprep.subr.mxu0 0.0
    %2048 = vmatpush2.msra.mxu0 0.0
    %2049 = vmatprep.subr.mxu0 0.0
    %2050 = vmatpush2.msra.mxu0 0.0
    %2051 = vmatprep.subr.mxu0 0.0
    %2052 = vmatpush2.msra.mxu0 0.0
    %2053 = vmatprep.subr.mxu0 0.0
    %2054 = vmatpush2.msra.mxu0 0.0
    %2055 = vmatprep.mubr.f32.mxu0 0.0
    %2056 = vmatmul.mubr.f32.gmra.mxu0 %v1986
    %v2057 = vpop.f32.mrf.mxu0
    %v2058 = vadd.f32 %v1983, %v2057
    %v2059 = vpop.f32.mrf.mxu0
    %2060 = vmatprep.mubr.f32.mxu0 0.0
    %2061 = vmatmul.mubr.f32.gmra.mxu0 %v1989
    %v2062 = vpop.f32.mrf.mxu0
    %v2063 = vadd.f32 %v1983, %v2062
    %v2064 = vpop.f32.mrf.mxu0
    %2065 = vdwg.mxu0
    %2067 = vrot.lane.b32.xlu0 %v2058, 96
    %v2068 = vpop.permute.xlu0 %2067
    %v2069 = vsel %vm215, %v2058, 0
    %v2071 = vsel %vm215, %v2068, 0
    %2073 = vmatprep.subr.mxu0 0.0
    %2074 = vmatpush1.xpose.msra.mxu0 0.0
    %2075 = vmatprep.subr.mxu0 0.0
    %2076 = vmatpush1.xpose.msra.mxu0 0.0
    %2077 = vmatprep.subr.mxu0 0.0
    %2078 = vmatpush1.xpose.msra.mxu0 0.0
    %2079 = vmatprep.subr.mxu0 0.0
    %2080 = vmatpush1.xpose.msra.mxu0 0.0
    %2081 = vmatprep.subr.mxu0 0.0
    %2082 = vmatpush1.xpose.msra.mxu0 0.0
    %2083 = vmatprep.subr.mxu0 0.0
    %2084 = vmatpush1.xpose.msra.mxu0 0.0
    %2085 = vmatprep.subr.mxu0 0.0
    %2086 = vmatpush1.xpose.msra.mxu0 0.0
    %2087 = vmatprep.subr.mxu0 0.0
    %2088 = vmatpush1.xpose.msra.mxu0 0.0
    %2089 = vmatprep.subr.mxu0 0.0
    %2090 = vmatpush1.xpose.msra.mxu0 0.0
    %2091 = vmatprep.subr.mxu0 0.0
    %2092 = vmatpush1.xpose.msra.mxu0 0.0
    %2093 = vmatprep.subr.mxu0 0.0
    %2094 = vmatpush1.xpose.msra.mxu0 0.0
    %2095 = vmatprep.subr.mxu0 0.0
    %2096 = vmatpush1.xpose.msra.mxu0 0.0
    %2097 = vmatprep.subr.mxu0 0.0
    %2098 = vmatpush1.xpose.msra.mxu0 0.0
    %2099 = vmatprep.subr.mxu0 0.0
    %2100 = vmatpush1.xpose.msra.mxu0 0.0
    %2101 = vmatprep.subr.mxu0 0.0
    %2102 = vmatpush1.xpose.msra.mxu0 0.0
    %2103 = vmatprep.subr.mxu0 0.0
    %2104 = vmatpush1.xpose.msra.mxu0 %v2071
    %2105 = vmatprep.subr.mxu0 0.0
    %2106 = vmatpush2.xpose.msra.mxu0 0.0
    %2107 = vmatprep.subr.mxu0 0.0
    %2108 = vmatpush2.xpose.msra.mxu0 0.0
    %2109 = vmatprep.subr.mxu0 0.0
    %2110 = vmatpush2.xpose.msra.mxu0 0.0
    %2111 = vmatprep.subr.mxu0 0.0
    %2112 = vmatpush2.xpose.msra.mxu0 0.0
    %2113 = vmatprep.subr.mxu0 0.0
    %2114 = vmatpush2.xpose.msra.mxu0 0.0
    %2115 = vmatprep.subr.mxu0 0.0
    %2116 = vmatpush2.xpose.msra.mxu0 0.0
    %2117 = vmatprep.subr.mxu0 0.0
    %2118 = vmatpush2.xpose.msra.mxu0 0.0
    %2119 = vmatprep.subr.mxu0 0.0
    %2120 = vmatpush2.xpose.msra.mxu0 0.0
    %2121 = vmatprep.subr.mxu0 0.0
    %2122 = vmatpush2.xpose.msra.mxu0 0.0
    %2123 = vmatprep.subr.mxu0 0.0
    %2124 = vmatpush2.xpose.msra.mxu0 0.0
    %2125 = vmatprep.subr.mxu0 0.0
    %2126 = vmatpush2.xpose.msra.mxu0 0.0
    %2127 = vmatprep.subr.mxu0 0.0
    %2128 = vmatpush2.xpose.msra.mxu0 0.0
    %2129 = vmatprep.subr.mxu0 0.0
    %2130 = vmatpush2.xpose.msra.mxu0 0.0
    %2131 = vmatprep.subr.mxu0 0.0
    %2132 = vmatpush2.xpose.msra.mxu0 0.0
    %2133 = vmatprep.subr.mxu0 0.0
    %2134 = vmatpush2.xpose.msra.mxu0 0.0
    %2135 = vmatprep.subr.mxu0 0.0
    %2136 = vmatpush2.xpose.msra.mxu0 0.0
    %2137 = vmatprep.mubr.f32.mxu0 0.0
    %2138 = vmatmul.mubr.f32.gmra.mxu0 %v2069
    %v2139 = vpop.f32.mrf.mxu0
    %v2140 = vadd.f32 0.0, %v2139
    %v2141 = vpop.f32.mrf.mxu0
    %2142 = vdwg.mxu0
    %2144 = vrot.lane.b32.xlu0 %v2063, 96
    %v2145 = vpop.permute.xlu0 %2144
    %v2146 = vsel %vm215, %v2063, 0
    %v2148 = vsel %vm215, %v2145, 0
    %2150 = vmatprep.subr.mxu0 0.0
    %2151 = vmatpush1.xpose.msra.mxu0 0.0
    %2152 = vmatprep.subr.mxu0 0.0
    %2153 = vmatpush1.xpose.msra.mxu0 0.0
    %2154 = vmatprep.subr.mxu0 0.0
    %2155 = vmatpush1.xpose.msra.mxu0 0.0
    %2156 = vmatprep.subr.mxu0 0.0
    %2157 = vmatpush1.xpose.msra.mxu0 0.0
    %2158 = vmatprep.subr.mxu0 0.0
    %2159 = vmatpush1.xpose.msra.mxu0 0.0
    %2160 = vmatprep.subr.mxu0 0.0
    %2161 = vmatpush1.xpose.msra.mxu0 0.0
    %2162 = vmatprep.subr.mxu0 0.0
    %2163 = vmatpush1.xpose.msra.mxu0 0.0
    %2164 = vmatprep.subr.mxu0 0.0
    %2165 = vmatpush1.xpose.msra.mxu0 0.0
    %2166 = vmatprep.subr.mxu0 0.0
    %2167 = vmatpush1.xpose.msra.mxu0 0.0
    %2168 = vmatprep.subr.mxu0 0.0
    %2169 = vmatpush1.xpose.msra.mxu0 0.0
    %2170 = vmatprep.subr.mxu0 0.0
    %2171 = vmatpush1.xpose.msra.mxu0 0.0
    %2172 = vmatprep.subr.mxu0 0.0
    %2173 = vmatpush1.xpose.msra.mxu0 0.0
    %2174 = vmatprep.subr.mxu0 0.0
    %2175 = vmatpush1.xpose.msra.mxu0 0.0
    %2176 = vmatprep.subr.mxu0 0.0
    %2177 = vmatpush1.xpose.msra.mxu0 0.0
    %2178 = vmatprep.subr.mxu0 0.0
    %2179 = vmatpush1.xpose.msra.mxu0 0.0
    %2180 = vmatprep.subr.mxu0 0.0
    %2181 = vmatpush1.xpose.msra.mxu0 %v2148
    %2182 = vmatprep.subr.mxu0 0.0
    %2183 = vmatpush2.xpose.msra.mxu0 0.0
    %2184 = vmatprep.subr.mxu0 0.0
    %2185 = vmatpush2.xpose.msra.mxu0 0.0
    %2186 = vmatprep.subr.mxu0 0.0
    %2187 = vmatpush2.xpose.msra.mxu0 0.0
    %2188 = vmatprep.subr.mxu0 0.0
    %2189 = vmatpush2.xpose.msra.mxu0 0.0
    %2190 = vmatprep.subr.mxu0 0.0
    %2191 = vmatpush2.xpose.msra.mxu0 0.0
    %2192 = vmatprep.subr.mxu0 0.0
    %2193 = vmatpush2.xpose.msra.mxu0 0.0
    %2194 = vmatprep.subr.mxu0 0.0
    %2195 = vmatpush2.xpose.msra.mxu0 0.0
    %2196 = vmatprep.subr.mxu0 0.0
    %2197 = vmatpush2.xpose.msra.mxu0 0.0
    %2198 = vmatprep.subr.mxu0 0.0
    %2199 = vmatpush2.xpose.msra.mxu0 0.0
    %2200 = vmatprep.subr.mxu0 0.0
    %2201 = vmatpush2.xpose.msra.mxu0 0.0
    %2202 = vmatprep.subr.mxu0 0.0
    %2203 = vmatpush2.xpose.msra.mxu0 0.0
    %2204 = vmatprep.subr.mxu0 0.0
    %2205 = vmatpush2.xpose.msra.mxu0 0.0
    %2206 = vmatprep.subr.mxu0 0.0
    %2207 = vmatpush2.xpose.msra.mxu0 0.0
    %2208 = vmatprep.subr.mxu0 0.0
    %2209 = vmatpush2.xpose.msra.mxu0 0.0
    %2210 = vmatprep.subr.mxu0 0.0
    %2211 = vmatpush2.xpose.msra.mxu0 0.0
    %2212 = vmatprep.subr.mxu0 0.0
    %2213 = vmatpush2.xpose.msra.mxu0 0.0
    %2214 = vmatprep.mubr.f32.mxu0 0.0
    %2215 = vmatmul.mubr.f32.gmra.mxu0 %v2146
    %v2216 = vpop.f32.mrf.mxu0
    %v2217 = vadd.f32 0.0, %v2216
    %v2218 = vpop.f32.mrf.mxu0
    %2219 = vdwg.mxu0
    %v2220 = vmul.f32 %v2140, 0.35355338
    %v2221 = vmul.f32 %v2217, 0.35355338
    %v2222 = vadd.f32 %v2220, %v374
    %v2223 = vadd.f32 %v2221, %v378
    %v2224 = vsel %vm215, %v2222, -inf
    %2225 = vmax.xlane.f32.xlu0 %v2224
    %v2226 = vpop.xlane.xlu0 %2225
    %v2227 = vsel %vm215, %v2223, -inf
    %2228 = vmax.xlane.f32.xlu0 %v2227
    %v2229 = vpop.xlane.xlu0 %2228
    %v2230 = vsub.f32 %v2222, %v2226
    %v2231 = vsub.f32 %v2223, %v2229
    %v2232 = vmul.f32 %v2230, 1.442695
    %v2233 = vpow.pop %v2232
    %v2234 = vmul.f32 %v2231, 1.442695
    %v2235 = vpow.pop %v2234
    %v2236 = vsel %vm215, %v2233, 0.0
    %2237 = vadd.xlane.f32.xlu0 %v2236
    %v2238 = vpop.xlane.xlu0 %2237
    %v2239 = vsel %vm215, %v2235, 0.0
    %2240 = vadd.xlane.f32.xlu0 %v2239
    %v2241 = vpop.xlane.xlu0 %2240
    %v2242 = vrcp.pop %v2238
    %v2243 = vmul.f32 %v2233, %v2242
    %v2244 = vrcp.pop %v2241
    %v2245 = vmul.f32 %v2235, %v2244
    %2246 = vrot.lane.b32.xlu0 %v2058, 64
    %v2247 = vpop.permute.xlu0 %2246
    %v2250 = vsel %vm215, %v2243, 0
    %2252 = vmatprep.subr.mxu0 0.0
    %2253 = vmatpush1.msra.mxu0 0.0
    %2254 = vmatprep.subr.mxu0 0.0
    %2255 = vmatpush1.msra.mxu0 0.0
    %2256 = vmatprep.subr.mxu0 0.0
    %2257 = vmatpush1.msra.mxu0 0.0
    %2258 = vmatprep.subr.mxu0 0.0
    %2259 = vmatpush1.msra.mxu0 0.0
    %2260 = vmatprep.subr.mxu0 0.0
    %2261 = vmatpush1.msra.mxu0 0.0
    %2262 = vmatprep.subr.mxu0 0.0
    %2263 = vmatpush1.msra.mxu0 0.0
    %2264 = vmatprep.subr.mxu0 0.0
    %2265 = vmatpush1.msra.mxu0 0.0
    %2266 = vmatprep.subr.mxu0 0.0
    %2267 = vmatpush1.msra.mxu0 0.0
    %2268 = vmatprep.subr.mxu0 0.0
    %2269 = vmatpush1.msra.mxu0 0.0
    %2270 = vmatprep.subr.mxu0 0.0
    %2271 = vmatpush1.msra.mxu0 0.0
    %2272 = vmatprep.subr.mxu0 0.0
    %2273 = vmatpush1.msra.mxu0 0.0
    %2274 = vmatprep.subr.mxu0 0.0
    %2275 = vmatpush1.msra.mxu0 0.0
    %2276 = vmatprep.subr.mxu0 0.0
    %2277 = vmatpush1.msra.mxu0 0.0
    %2278 = vmatprep.subr.mxu0 0.0
    %2279 = vmatpush1.msra.mxu0 0.0
    %2280 = vmatprep.subr.mxu0 0.0
    %2281 = vmatpush1.msra.mxu0 0.0
    %2282 = vmatprep.subr.mxu0 0.0
    %2283 = vmatpush1.msra.mxu0 %v2247
    %2284 = vmatprep.subr.mxu0 0.0
    %2285 = vmatpush2.msra.mxu0 0.0
    %2286 = vmatprep.subr.mxu0 0.0
    %2287 = vmatpush2.msra.mxu0 0.0
    %2288 = vmatprep.subr.mxu0 0.0
    %2289 = vmatpush2.msra.mxu0 0.0
    %2290 = vmatprep.subr.mxu0 0.0
    %2291 = vmatpush2.msra.mxu0 0.0
    %2292 = vmatprep.subr.mxu0 0.0
    %2293 = vmatpush2.msra.mxu0 0.0
    %2294 = vmatprep.subr.mxu0 0.0
    %2295 = vmatpush2.msra.mxu0 0.0
    %2296 = vmatprep.subr.mxu0 0.0
    %2297 = vmatpush2.msra.mxu0 0.0
    %2298 = vmatprep.subr.mxu0 0.0
    %2299 = vmatpush2.msra.mxu0 0.0
    %2300 = vmatprep.subr.mxu0 0.0
    %2301 = vmatpush2.msra.mxu0 0.0
    %2302 = vmatprep.subr.mxu0 0.0
    %2303 = vmatpush2.msra.mxu0 0.0
    %2304 = vmatprep.subr.mxu0 0.0
    %2305 = vmatpush2.msra.mxu0 0.0
    %2306 = vmatprep.subr.mxu0 0.0
    %2307 = vmatpush2.msra.mxu0 0.0
    %2308 = vmatprep.subr.mxu0 0.0
    %2309 = vmatpush2.msra.mxu0 0.0
    %2310 = vmatprep.subr.mxu0 0.0
    %2311 = vmatpush2.msra.mxu0 0.0
    %2312 = vmatprep.subr.mxu0 0.0
    %2313 = vmatpush2.msra.mxu0 0.0
    %2314 = vmatprep.subr.mxu0 0.0
    %2315 = vmatpush2.msra.mxu0 0.0
    %2316 = vmatprep.mubr.f32.mxu0 0.0
    %2317 = vmatmul.mubr.f32.gmra.mxu0 %v2250
    %v2318 = vpop.f32.mrf.mxu0
    %v2319 = vadd.f32 0.0, %v2318
    %v2320 = vpop.f32.mrf.mxu0
    %2321 = vdwg.mxu0
    %2322 = vrot.lane.b32.xlu0 %v2063, 64
    %v2323 = vpop.permute.xlu0 %2322
    %v2326 = vsel %vm215, %v2245, 0
    %2328 = vmatprep.subr.mxu0 0.0
    %2329 = vmatpush1.msra.mxu0 0.0
    %2330 = vmatprep.subr.mxu0 0.0
    %2331 = vmatpush1.msra.mxu0 0.0
    %2332 = vmatprep.subr.mxu0 0.0
    %2333 = vmatpush1.msra.mxu0 0.0
    %2334 = vmatprep.subr.mxu0 0.0
    %2335 = vmatpush1.msra.mxu0 0.0
    %2336 = vmatprep.subr.mxu0 0.0
    %2337 = vmatpush1.msra.mxu0 0.0
    %2338 = vmatprep.subr.mxu0 0.0
    %2339 = vmatpush1.msra.mxu0 0.0
    %2340 = vmatprep.subr.mxu0 0.0
    %2341 = vmatpush1.msra.mxu0 0.0
    %2342 = vmatprep.subr.mxu0 0.0
    %2343 = vmatpush1.msra.mxu0 0.0
    %2344 = vmatprep.subr.mxu0 0.0
    %2345 = vmatpush1.msra.mxu0 0.0
    %2346 = vmatprep.subr.mxu0 0.0
    %2347 = vmatpush1.msra.mxu0 0.0
    %2348 = vmatprep.subr.mxu0 0.0
    %2349 = vmatpush1.msra.mxu0 0.0
    %2350 = vmatprep.subr.mxu0 0.0
    %2351 = vmatpush1.msra.mxu0 0.0
    %2352 = vmatprep.subr.mxu0 0.0
    %2353 = vmatpush1.msra.mxu0 0.0
    %2354 = vmatprep.subr.mxu0 0.0
    %2355 = vmatpush1.msra.mxu0 0.0
    %2356 = vmatprep.subr.mxu0 0.0
    %2357 = vmatpush1.msra.mxu0 0.0
    %2358 = vmatprep.subr.mxu0 0.0
    %2359 = vmatpush1.msra.mxu0 %v2323
    %2360 = vmatprep.subr.mxu0 0.0
    %2361 = vmatpush2.msra.mxu0 0.0
    %2362 = vmatprep.subr.mxu0 0.0
    %2363 = vmatpush2.msra.mxu0 0.0
    %2364 = vmatprep.subr.mxu0 0.0
    %2365 = vmatpush2.msra.mxu0 0.0
    %2366 = vmatprep.subr.mxu0 0.0
    %2367 = vmatpush2.msra.mxu0 0.0
    %2368 = vmatprep.subr.mxu0 0.0
    %2369 = vmatpush2.msra.mxu0 0.0
    %2370 = vmatprep.subr.mxu0 0.0
    %2371 = vmatpush2.msra.mxu0 0.0
    %2372 = vmatprep.subr.mxu0 0.0
    %2373 = vmatpush2.msra.mxu0 0.0
    %2374 = vmatprep.subr.mxu0 0.0
    %2375 = vmatpush2.msra.mxu0 0.0
    %2376 = vmatprep.subr.mxu0 0.0
    %2377 = vmatpush2.msra.mxu0 0.0
    %2378 = vmatprep.subr.mxu0 0.0
    %2379 = vmatpush2.msra.mxu0 0.0
    %2380 = vmatprep.subr.mxu0 0.0
    %2381 = vmatpush2.msra.mxu0 0.0
    %2382 = vmatprep.subr.mxu0 0.0
    %2383 = vmatpush2.msra.mxu0 0.0
    %2384 = vmatprep.subr.mxu0 0.0
    %2385 = vmatpush2.msra.mxu0 0.0
    %2386 = vmatprep.subr.mxu0 0.0
    %2387 = vmatpush2.msra.mxu0 0.0
    %2388 = vmatprep.subr.mxu0 0.0
    %2389 = vmatpush2.msra.mxu0 0.0
    %2390 = vmatprep.subr.mxu0 0.0
    %2391 = vmatpush2.msra.mxu0 0.0
    %2392 = vmatprep.mubr.f32.mxu0 0.0
    %2393 = vmatmul.mubr.f32.gmra.mxu0 %v2326
    %v2394 = vpop.f32.mrf.mxu0
    %v2395 = vadd.f32 0.0, %v2394
    %v2396 = vpop.f32.mrf.mxu0
    %2397 = vdwg.mxu0
    %2398 = vrot.lane.b32.xlu0 %v2058, 120
    %v2399 = vpop.permute.xlu0 %2398
    %2400 = vrot.lane.b32.xlu0 %v2058, 88
    %v2401 = vpop.permute.xlu0 %2400
    %v2402 = vsel %vm215, %v2399, 0
    %v2404 = vsel %vm215, %v2401, 0
    %2406 = vmatprep.subr.mxu0 0.0
    %2407 = vmatpush1.xpose.msra.mxu0 0.0
    %2408 = vmatprep.subr.mxu0 0.0
    %2409 = vmatpush1.xpose.msra.mxu0 0.0
    %2410 = vmatprep.subr.mxu0 0.0
    %2411 = vmatpush1.xpose.msra.mxu0 0.0
    %2412 = vmatprep.subr.mxu0 0.0
    %2413 = vmatpush1.xpose.msra.mxu0 0.0
    %2414 = vmatprep.subr.mxu0 0.0
    %2415 = vmatpush1.xpose.msra.mxu0 0.0
    %2416 = vmatprep.subr.mxu0 0.0
    %2417 = vmatpush1.xpose.msra.mxu0 0.0
    %2418 = vmatprep.subr.mxu0 0.0
    %2419 = vmatpush1.xpose.msra.mxu0 0.0
    %2420 = vmatprep.subr.mxu0 0.0
    %2421 = vmatpush1.xpose.msra.mxu0 0.0
    %2422 = vmatprep.subr.mxu0 0.0
    %2423 = vmatpush1.xpose.msra.mxu0 0.0
    %2424 = vmatprep.subr.mxu0 0.0
    %2425 = vmatpush1.xpose.msra.mxu0 0.0
    %2426 = vmatprep.subr.mxu0 0.0
    %2427 = vmatpush1.xpose.msra.mxu0 0.0
    %2428 = vmatprep.subr.mxu0 0.0
    %2429 = vmatpush1.xpose.msra.mxu0 0.0
    %2430 = vmatprep.subr.mxu0 0.0
    %2431 = vmatpush1.xpose.msra.mxu0 0.0
    %2432 = vmatprep.subr.mxu0 0.0
    %2433 = vmatpush1.xpose.msra.mxu0 0.0
    %2434 = vmatprep.subr.mxu0 0.0
    %2435 = vmatpush1.xpose.msra.mxu0 0.0
    %2436 = vmatprep.subr.mxu0 0.0
    %2437 = vmatpush1.xpose.msra.mxu0 %v2404
    %2438 = vmatprep.subr.mxu0 0.0
    %2439 = vmatpush2.xpose.msra.mxu0 0.0
    %2440 = vmatprep.subr.mxu0 0.0
    %2441 = vmatpush2.xpose.msra.mxu0 0.0
    %2442 = vmatprep.subr.mxu0 0.0
    %2443 = vmatpush2.xpose.msra.mxu0 0.0
    %2444 = vmatprep.subr.mxu0 0.0
    %2445 = vmatpush2.xpose.msra.mxu0 0.0
    %2446 = vmatprep.subr.mxu0 0.0
    %2447 = vmatpush2.xpose.msra.mxu0 0.0
    %2448 = vmatprep.subr.mxu0 0.0
    %2449 = vmatpush2.xpose.msra.mxu0 0.0
    %2450 = vmatprep.subr.mxu0 0.0
    %2451 = vmatpush2.xpose.msra.mxu0 0.0
    %2452 = vmatprep.subr.mxu0 0.0
    %2453 = vmatpush2.xpose.msra.mxu0 0.0
    %2454 = vmatprep.subr.mxu0 0.0
    %2455 = vmatpush2.xpose.msra.mxu0 0.0
    %2456 = vmatprep.subr.mxu0 0.0
    %2457 = vmatpush2.xpose.msra.mxu0 0.0
    %2458 = vmatprep.subr.mxu0 0.0
    %2459 = vmatpush2.xpose.msra.mxu0 0.0
    %2460 = vmatprep.subr.mxu0 0.0
    %2461 = vmatpush2.xpose.msra.mxu0 0.0
    %2462 = vmatprep.subr.mxu0 0.0
    %2463 = vmatpush2.xpose.msra.mxu0 0.0
    %2464 = vmatprep.subr.mxu0 0.0
    %2465 = vmatpush2.xpose.msra.mxu0 0.0
    %2466 = vmatprep.subr.mxu0 0.0
    %2467 = vmatpush2.xpose.msra.mxu0 0.0
    %2468 = vmatprep.subr.mxu0 0.0
    %2469 = vmatpush2.xpose.msra.mxu0 0.0
    %2470 = vmatprep.mubr.f32.mxu0 0.0
    %2471 = vmatmul.mubr.f32.gmra.mxu0 %v2402
    %v2472 = vpop.f32.mrf.mxu0
    %v2473 = vadd.f32 0.0, %v2472
    %v2474 = vpop.f32.mrf.mxu0
    %2475 = vdwg.mxu0
    %2476 = vrot.lane.b32.xlu0 %v2063, 120
    %v2477 = vpop.permute.xlu0 %2476
    %2478 = vrot.lane.b32.xlu0 %v2063, 88
    %v2479 = vpop.permute.xlu0 %2478
    %v2480 = vsel %vm215, %v2477, 0
    %v2482 = vsel %vm215, %v2479, 0
    %2484 = vmatprep.subr.mxu0 0.0
    %2485 = vmatpush1.xpose.msra.mxu0 0.0
    %2486 = vmatprep.subr.mxu0 0.0
    %2487 = vmatpush1.xpose.msra.mxu0 0.0
    %2488 = vmatprep.subr.mxu0 0.0
    %2489 = vmatpush1.xpose.msra.mxu0 0.0
    %2490 = vmatprep.subr.mxu0 0.0
    %2491 = vmatpush1.xpose.msra.mxu0 0.0
    %2492 = vmatprep.subr.mxu0 0.0
    %2493 = vmatpush1.xpose.msra.mxu0 0.0
    %2494 = vmatprep.subr.mxu0 0.0
    %2495 = vmatpush1.xpose.msra.mxu0 0.0
    %2496 = vmatprep.subr.mxu0 0.0
    %2497 = vmatpush1.xpose.msra.mxu0 0.0
    %2498 = vmatprep.subr.mxu0 0.0
    %2499 = vmatpush1.xpose.msra.mxu0 0.0
    %2500 = vmatprep.subr.mxu0 0.0
    %2501 = vmatpush1.xpose.msra.mxu0 0.0
    %2502 = vmatprep.subr.mxu0 0.0
    %2503 = vmatpush1.xpose.msra.mxu0 0.0
    %2504 = vmatprep.subr.mxu0 0.0
    %2505 = vmatpush1.xpose.msra.mxu0 0.0
    %2506 = vmatprep.subr.mxu0 0.0
    %2507 = vmatpush1.xpose.msra.mxu0 0.0
    %2508 = vmatprep.subr.mxu0 0.0
    %2509 = vmatpush1.xpose.msra.mxu0 0.0
    %2510 = vmatprep.subr.mxu0 0.0
    %2511 = vmatpush1.xpose.msra.mxu0 0.0
    %2512 = vmatprep.subr.mxu0 0.0
    %2513 = vmatpush1.xpose.msra.mxu0 0.0
    %2514 = vmatprep.subr.mxu0 0.0
    %2515 = vmatpush1.xpose.msra.mxu0 %v2482
    %2516 = vmatprep.subr.mxu0 0.0
    %2517 = vmatpush2.xpose.msra.mxu0 0.0
    %2518 = vmatprep.subr.mxu0 0.0
    %2519 = vmatpush2.xpose.msra.mxu0 0.0
    %2520 = vmatprep.subr.mxu0 0.0
    %2521 = vmatpush2.xpose.msra.mxu0 0.0
    %2522 = vmatprep.subr.mxu0 0.0
    %2523 = vmatpush2.xpose.msra.mxu0 0.0
    %2524 = vmatprep.subr.mxu0 0.0
    %2525 = vmatpush2.xpose.msra.mxu0 0.0
    %2526 = vmatprep.subr.mxu0 0.0
    %2527 = vmatpush2.xpose.msra.mxu0 0.0
    %2528 = vmatprep.subr.mxu0 0.0
    %2529 = vmatpush2.xpose.msra.mxu0 0.0
    %2530 = vmatprep.subr.mxu0 0.0
    %2531 = vmatpush2.xpose.msra.mxu0 0.0
    %2532 = vmatprep.subr.mxu0 0.0
    %2533 = vmatpush2.xpose.msra.mxu0 0.0
    %2534 = vmatprep.subr.mxu0 0.0
    %2535 = vmatpush2.xpose.msra.mxu0 0.0
    %2536 = vmatprep.subr.mxu0 0.0
    %2537 = vmatpush2.xpose.msra.mxu0 0.0
    %2538 = vmatprep.subr.mxu0 0.0
    %2539 = vmatpush2.xpose.msra.mxu0 0.0
    %2540 = vmatprep.subr.mxu0 0.0
    %2541 = vmatpush2.xpose.msra.mxu0 0.0
    %2542 = vmatprep.subr.mxu0 0.0
    %2543 = vmatpush2.xpose.msra.mxu0 0.0
    %2544 = vmatprep.subr.mxu0 0.0
    %2545 = vmatpush2.xpose.msra.mxu0 0.0
    %2546 = vmatprep.subr.mxu0 0.0
    %2547 = vmatpush2.xpose.msra.mxu0 0.0
    %2548 = vmatprep.mubr.f32.mxu0 0.0
    %2549 = vmatmul.mubr.f32.gmra.mxu0 %v2480
    %v2550 = vpop.f32.mrf.mxu0
    %v2551 = vadd.f32 0.0, %v2550
    %v2552 = vpop.f32.mrf.mxu0
    %2553 = vdwg.mxu0
    %v2554 = vmul.f32 %v2473, 0.35355338
    %v2555 = vmul.f32 %v2551, 0.35355338
    %v2556 = vadd.f32 %v2554, %v374
    %v2557 = vadd.f32 %v2555, %v378
    %v2558 = vsel %vm215, %v2556, -inf
    %2559 = vmax.xlane.f32.xlu0 %v2558
    %v2560 = vpop.xlane.xlu0 %2559
    %v2561 = vsel %vm215, %v2557, -inf
    %2562 = vmax.xlane.f32.xlu0 %v2561
    %v2563 = vpop.xlane.xlu0 %2562
    %v2564 = vsub.f32 %v2556, %v2560
    %v2565 = vsub.f32 %v2557, %v2563
    %v2566 = vmul.f32 %v2564, 1.442695
    %v2567 = vpow.pop %v2566
    %v2568 = vmul.f32 %v2565, 1.442695
    %v2569 = vpow.pop %v2568
    %v2570 = vsel %vm215, %v2567, 0.0
    %2571 = vadd.xlane.f32.xlu0 %v2570
    %v2572 = vpop.xlane.xlu0 %2571
    %v2573 = vsel %vm215, %v2569, 0.0
    %2574 = vadd.xlane.f32.xlu0 %v2573
    %v2575 = vpop.xlane.xlu0 %2574
    %v2576 = vrcp.pop %v2572
    %v2577 = vmul.f32 %v2567, %v2576
    %v2578 = vrcp.pop %v2575
    %v2579 = vmul.f32 %v2569, %v2578
    %2580 = vrot.lane.b32.xlu0 %v2058, 56
    %v2581 = vpop.permute.xlu0 %2580
    %v2584 = vsel %vm215, %v2577, 0
    %2586 = vmatprep.subr.mxu0 0.0
    %2587 = vmatpush1.msra.mxu0 0.0
    %2588 = vmatprep.subr.mxu0 0.0
    %2589 = vmatpush1.msra.mxu0 0.0
    %2590 = vmatprep.subr.mxu0 0.0
    %2591 = vmatpush1.msra.mxu0 0.0
    %2592 = vmatprep.subr.mxu0 0.0
    %2593 = vmatpush1.msra.mxu0 0.0
    %2594 = vmatprep.subr.mxu0 0.0
    %2595 = vmatpush1.msra.mxu0 0.0
    %2596 = vmatprep.subr.mxu0 0.0
    %2597 = vmatpush1.msra.mxu0 0.0
    %2598 = vmatprep.subr.mxu0 0.0
    %2599 = vmatpush1.msra.mxu0 0.0
    %2600 = vmatprep.subr.mxu0 0.0
    %2601 = vmatpush1.msra.mxu0 0.0
    %2602 = vmatprep.subr.mxu0 0.0
    %2603 = vmatpush1.msra.mxu0 0.0
    %2604 = vmatprep.subr.mxu0 0.0
    %2605 = vmatpush1.msra.mxu0 0.0
    %2606 = vmatprep.subr.mxu0 0.0
    %2607 = vmatpush1.msra.mxu0 0.0
    %2608 = vmatprep.subr.mxu0 0.0
    %2609 = vmatpush1.msra.mxu0 0.0
    %2610 = vmatprep.subr.mxu0 0.0
    %2611 = vmatpush1.msra.mxu0 0.0
    %2612 = vmatprep.subr.mxu0 0.0
    %2613 = vmatpush1.msra.mxu0 0.0
    %2614 = vmatprep.subr.mxu0 0.0
    %2615 = vmatpush1.msra.mxu0 0.0
    %2616 = vmatprep.subr.mxu0 0.0
    %2617 = vmatpush1.msra.mxu0 %v2581
    %2618 = vmatprep.subr.mxu0 0.0
    %2619 = vmatpush2.msra.mxu0 0.0
    %2620 = vmatprep.subr.mxu0 0.0
    %2621 = vmatpush2.msra.mxu0 0.0
    %2622 = vmatprep.subr.mxu0 0.0
    %2623 = vmatpush2.msra.mxu0 0.0
    %2624 = vmatprep.subr.mxu0 0.0
    %2625 = vmatpush2.msra.mxu0 0.0
    %2626 = vmatprep.subr.mxu0 0.0
    %2627 = vmatpush2.msra.mxu0 0.0
    %2628 = vmatprep.subr.mxu0 0.0
    %2629 = vmatpush2.msra.mxu0 0.0
    %2630 = vmatprep.subr.mxu0 0.0
    %2631 = vmatpush2.msra.mxu0 0.0
    %2632 = vmatprep.subr.mxu0 0.0
    %2633 = vmatpush2.msra.mxu0 0.0
    %2634 = vmatprep.subr.mxu0 0.0
    %2635 = vmatpush2.msra.mxu0 0.0
    %2636 = vmatprep.subr.mxu0 0.0
    %2637 = vmatpush2.msra.mxu0 0.0
    %2638 = vmatprep.subr.mxu0 0.0
    %2639 = vmatpush2.msra.mxu0 0.0
    %2640 = vmatprep.subr.mxu0 0.0
    %2641 = vmatpush2.msra.mxu0 0.0
    %2642 = vmatprep.subr.mxu0 0.0
    %2643 = vmatpush2.msra.mxu0 0.0
    %2644 = vmatprep.subr.mxu0 0.0
    %2645 = vmatpush2.msra.mxu0 0.0
    %2646 = vmatprep.subr.mxu0 0.0
    %2647 = vmatpush2.msra.mxu0 0.0
    %2648 = vmatprep.subr.mxu0 0.0
    %2649 = vmatpush2.msra.mxu0 0.0
    %2650 = vmatprep.mubr.f32.mxu0 0.0
    %2651 = vmatmul.mubr.f32.gmra.mxu0 %v2584
    %v2652 = vpop.f32.mrf.mxu0
    %v2653 = vadd.f32 0.0, %v2652
    %v2654 = vpop.f32.mrf.mxu0
    %2655 = vdwg.mxu0
    %2656 = vrot.lane.b32.xlu0 %v2063, 56
    %v2657 = vpop.permute.xlu0 %2656
    %v2660 = vsel %vm215, %v2579, 0
    %2662 = vmatprep.subr.mxu0 0.0
    %2663 = vmatpush1.msra.mxu0 0.0
    %2664 = vmatprep.subr.mxu0 0.0
    %2665 = vmatpush1.msra.mxu0 0.0
    %2666 = vmatprep.subr.mxu0 0.0
    %2667 = vmatpush1.msra.mxu0 0.0
    %2668 = vmatprep.subr.mxu0 0.0
    %2669 = vmatpush1.msra.mxu0 0.0
    %2670 = vmatprep.subr.mxu0 0.0
    %2671 = vmatpush1.msra.mxu0 0.0
    %2672 = vmatprep.subr.mxu0 0.0
    %2673 = vmatpush1.msra.mxu0 0.0
    %2674 = vmatprep.subr.mxu0 0.0
    %2675 = vmatpush1.msra.mxu0 0.0
    %2676 = vmatprep.subr.mxu0 0.0
    %2677 = vmatpush1.msra.mxu0 0.0
    %2678 = vmatprep.subr.mxu0 0.0
    %2679 = vmatpush1.msra.mxu0 0.0
    %2680 = vmatprep.subr.mxu0 0.0
    %2681 = vmatpush1.msra.mxu0 0.0
    %2682 = vmatprep.subr.mxu0 0.0
    %2683 = vmatpush1.msra.mxu0 0.0
    %2684 = vmatprep.subr.mxu0 0.0
    %2685 = vmatpush1.msra.mxu0 0.0
    %2686 = vmatprep.subr.mxu0 0.0
    %2687 = vmatpush1.msra.mxu0 0.0
    %2688 = vmatprep.subr.mxu0 0.0
    %2689 = vmatpush1.msra.mxu0 0.0
    %2690 = vmatprep.subr.mxu0 0.0
    %2691 = vmatpush1.msra.mxu0 0.0
    %2692 = vmatprep.subr.mxu0 0.0
    %2693 = vmatpush1.msra.mxu0 %v2657
    %2694 = vmatprep.subr.mxu0 0.0
    %2695 = vmatpush2.msra.mxu0 0.0
    %2696 = vmatprep.subr.mxu0 0.0
    %2697 = vmatpush2.msra.mxu0 0.0
    %2698 = vmatprep.subr.mxu0 0.0
    %2699 = vmatpush2.msra.mxu0 0.0
    %2700 = vmatprep.subr.mxu0 0.0
    %2701 = vmatpush2.msra.mxu0 0.0
    %2702 = vmatprep.subr.mxu0 0.0
    %2703 = vmatpush2.msra.mxu0 0.0
    %2704 = vmatprep.subr.mxu0 0.0
    %2705 = vmatpush2.msra.mxu0 0.0
    %2706 = vmatprep.subr.mxu0 0.0
    %2707 = vmatpush2.msra.mxu0 0.0
    %2708 = vmatprep.subr.mxu0 0.0
    %2709 = vmatpush2.msra.mxu0 0.0
    %2710 = vmatprep.subr.mxu0 0.0
    %2711 = vmatpush2.msra.mxu0 0.0
    %2712 = vmatprep.subr.mxu0 0.0
    %2713 = vmatpush2.msra.mxu0 0.0
    %2714 = vmatprep.subr.mxu0 0.0
    %2715 = vmatpush2.msra.mxu0 0.0
    %2716 = vmatprep.subr.mxu0 0.0
    %2717 = vmatpush2.msra.mxu0 0.0
    %2718 = vmatprep.subr.mxu0 0.0
    %2719 = vmatpush2.msra.mxu0 0.0
    %2720 = vmatprep.subr.mxu0 0.0
    %2721 = vmatpush2.msra.mxu0 0.0
    %2722 = vmatprep.subr.mxu0 0.0
    %2723 = vmatpush2.msra.mxu0 0.0
    %2724 = vmatprep.subr.mxu0 0.0
    %2725 = vmatpush2.msra.mxu0 0.0
    %2726 = vmatprep.mubr.f32.mxu0 0.0
    %2727 = vmatmul.mubr.f32.gmra.mxu0 %v2660
    %v2728 = vpop.f32.mrf.mxu0
    %v2729 = vadd.f32 0.0, %v2728
    %v2730 = vpop.f32.mrf.mxu0
    %2731 = vdwg.mxu0
    %2732 = vrot.lane.b32.xlu0 %v2058, 112
    %v2733 = vpop.permute.xlu0 %2732
    %2734 = vrot.lane.b32.xlu0 %v2058, 80
    %v2735 = vpop.permute.xlu0 %2734
    %v2736 = vsel %vm215, %v2733, 0
    %v2738 = vsel %vm215, %v2735, 0
    %2740 = vmatprep.subr.mxu0 0.0
    %2741 = vmatpush1.xpose.msra.mxu0 0.0
    %2742 = vmatprep.subr.mxu0 0.0
    %2743 = vmatpush1.xpose.msra.mxu0 0.0
    %2744 = vmatprep.subr.mxu0 0.0
    %2745 = vmatpush1.xpose.msra.mxu0 0.0
    %2746 = vmatprep.subr.mxu0 0.0
    %2747 = vmatpush1.xpose.msra.mxu0 0.0
    %2748 = vmatprep.subr.mxu0 0.0
    %2749 = vmatpush1.xpose.msra.mxu0 0.0
    %2750 = vmatprep.subr.mxu0 0.0
    %2751 = vmatpush1.xpose.msra.mxu0 0.0
    %2752 = vmatprep.subr.mxu0 0.0
    %2753 = vmatpush1.xpose.msra.mxu0 0.0
    %2754 = vmatprep.subr.mxu0 0.0
    %2755 = vmatpush1.xpose.msra.mxu0 0.0
    %2756 = vmatprep.subr.mxu0 0.0
    %2757 = vmatpush1.xpose.msra.mxu0 0.0
    %2758 = vmatprep.subr.mxu0 0.0
    %2759 = vmatpush1.xpose.msra.mxu0 0.0
    %2760 = vmatprep.subr.mxu0 0.0
    %2761 = vmatpush1.xpose.msra.mxu0 0.0
    %2762 = vmatprep.subr.mxu0 0.0
    %2763 = vmatpush1.xpose.msra.mxu0 0.0
    %2764 = vmatprep.subr.mxu0 0.0
    %2765 = vmatpush1.xpose.msra.mxu0 0.0
    %2766 = vmatprep.subr.mxu0 0.0
    %2767 = vmatpush1.xpose.msra.mxu0 0.0
    %2768 = vmatprep.subr.mxu0 0.0
    %2769 = vmatpush1.xpose.msra.mxu0 0.0
    %2770 = vmatprep.subr.mxu0 0.0
    %2771 = vmatpush1.xpose.msra.mxu0 %v2738
    %2772 = vmatprep.subr.mxu0 0.0
    %2773 = vmatpush2.xpose.msra.mxu0 0.0
    %2774 = vmatprep.subr.mxu0 0.0
    %2775 = vmatpush2.xpose.msra.mxu0 0.0
    %2776 = vmatprep.subr.mxu0 0.0
    %2777 = vmatpush2.xpose.msra.mxu0 0.0
    %2778 = vmatprep.subr.mxu0 0.0
    %2779 = vmatpush2.xpose.msra.mxu0 0.0
    %2780 = vmatprep.subr.mxu0 0.0
    %2781 = vmatpush2.xpose.msra.mxu0 0.0
    %2782 = vmatprep.subr.mxu0 0.0
    %2783 = vmatpush2.xpose.msra.mxu0 0.0
    %2784 = vmatprep.subr.mxu0 0.0
    %2785 = vmatpush2.xpose.msra.mxu0 0.0
    %2786 = vmatprep.subr.mxu0 0.0
    %2787 = vmatpush2.xpose.msra.mxu0 0.0
    %2788 = vmatprep.subr.mxu0 0.0
    %2789 = vmatpush2.xpose.msra.mxu0 0.0
    %2790 = vmatprep.subr.mxu0 0.0
    %2791 = vmatpush2.xpose.msra.mxu0 0.0
    %2792 = vmatprep.subr.mxu0 0.0
    %2793 = vmatpush2.xpose.msra.mxu0 0.0
    %2794 = vmatprep.subr.mxu0 0.0
    %2795 = vmatpush2.xpose.msra.mxu0 0.0
    %2796 = vmatprep.subr.mxu0 0.0
    %2797 = vmatpush2.xpose.msra.mxu0 0.0
    %2798 = vmatprep.subr.mxu0 0.0
    %2799 = vmatpush2.xpose.msra.mxu0 0.0
    %2800 = vmatprep.subr.mxu0 0.0
    %2801 = vmatpush2.xpose.msra.mxu0 0.0
    %2802 = vmatprep.subr.mxu0 0.0
    %2803 = vmatpush2.xpose.msra.mxu0 0.0
    %2804 = vmatprep.mubr.f32.mxu0 0.0
    %2805 = vmatmul.mubr.f32.gmra.mxu0 %v2736
    %v2806 = vpop.f32.mrf.mxu0
    %v2807 = vadd.f32 0.0, %v2806
    %v2808 = vpop.f32.mrf.mxu0
    %2809 = vdwg.mxu0
    %2810 = vrot.lane.b32.xlu0 %v2063, 112
    %v2811 = vpop.permute.xlu0 %2810
    %2812 = vrot.lane.b32.xlu0 %v2063, 80
    %v2813 = vpop.permute.xlu0 %2812
    %v2814 = vsel %vm215, %v2811, 0
    %v2816 = vsel %vm215, %v2813, 0
    %2818 = vmatprep.subr.mxu0 0.0
    %2819 = vmatpush1.xpose.msra.mxu0 0.0
    %2820 = vmatprep.subr.mxu0 0.0
    %2821 = vmatpush1.xpose.msra.mxu0 0.0
    %2822 = vmatprep.subr.mxu0 0.0
    %2823 = vmatpush1.xpose.msra.mxu0 0.0
    %2824 = vmatprep.subr.mxu0 0.0
    %2825 = vmatpush1.xpose.msra.mxu0 0.0
    %2826 = vmatprep.subr.mxu0 0.0
    %2827 = vmatpush1.xpose.msra.mxu0 0.0
    %2828 = vmatprep.subr.mxu0 0.0
    %2829 = vmatpush1.xpose.msra.mxu0 0.0
    %2830 = vmatprep.subr.mxu0 0.0
    %2831 = vmatpush1.xpose.msra.mxu0 0.0
    %2832 = vmatprep.subr.mxu0 0.0
    %2833 = vmatpush1.xpose.msra.mxu0 0.0
    %2834 = vmatprep.subr.mxu0 0.0
    %2835 = vmatpush1.xpose.msra.mxu0 0.0
    %2836 = vmatprep.subr.mxu0 0.0
    %2837 = vmatpush1.xpose.msra.mxu0 0.0
    %2838 = vmatprep.subr.mxu0 0.0
    %2839 = vmatpush1.xpose.msra.mxu0 0.0
    %2840 = vmatprep.subr.mxu0 0.0
    %2841 = vmatpush1.xpose.msra.mxu0 0.0
    %2842 = vmatprep.subr.mxu0 0.0
    %2843 = vmatpush1.xpose.msra.mxu0 0.0
    %2844 = vmatprep.subr.mxu0 0.0
    %2845 = vmatpush1.xpose.msra.mxu0 0.0
    %2846 = vmatprep.subr.mxu0 0.0
    %2847 = vmatpush1.xpose.msra.mxu0 0.0
    %2848 = vmatprep.subr.mxu0 0.0
    %2849 = vmatpush1.xpose.msra.mxu0 %v2816
    %2850 = vmatprep.subr.mxu0 0.0
    %2851 = vmatpush2.xpose.msra.mxu0 0.0
    %2852 = vmatprep.subr.mxu0 0.0
    %2853 = vmatpush2.xpose.msra.mxu0 0.0
    %2854 = vmatprep.subr.mxu0 0.0
    %2855 = vmatpush2.xpose.msra.mxu0 0.0
    %2856 = vmatprep.subr.mxu0 0.0
    %2857 = vmatpush2.xpose.msra.mxu0 0.0
    %2858 = vmatprep.subr.mxu0 0.0
    %2859 = vmatpush2.xpose.msra.mxu0 0.0
    %2860 = vmatprep.subr.mxu0 0.0
    %2861 = vmatpush2.xpose.msra.mxu0 0.0
    %2862 = vmatprep.subr.mxu0 0.0
    %2863 = vmatpush2.xpose.msra.mxu0 0.0
    %2864 = vmatprep.subr.mxu0 0.0
    %2865 = vmatpush2.xpose.msra.mxu0 0.0
    %2866 = vmatprep.subr.mxu0 0.0
    %2867 = vmatpush2.xpose.msra.mxu0 0.0
    %2868 = vmatprep.subr.mxu0 0.0
    %2869 = vmatpush2.xpose.msra.mxu0 0.0
    %2870 = vmatprep.subr.mxu0 0.0
    %2871 = vmatpush2.xpose.msra.mxu0 0.0
    %2872 = vmatprep.subr.mxu0 0.0
    %2873 = vmatpush2.xpose.msra.mxu0 0.0
    %2874 = vmatprep.subr.mxu0 0.0
    %2875 = vmatpush2.xpose.msra.mxu0 0.0
    %2876 = vmatprep.subr.mxu0 0.0
    %2877 = vmatpush2.xpose.msra.mxu0 0.0
    %2878 = vmatprep.subr.mxu0 0.0
    %2879 = vmatpush2.xpose.msra.mxu0 0.0
    %2880 = vmatprep.subr.mxu0 0.0
    %2881 = vmatpush2.xpose.msra.mxu0 0.0
    %2882 = vmatprep.mubr.f32.mxu0 0.0
    %2883 = vmatmul.mubr.f32.gmra.mxu0 %v2814
    %v2884 = vpop.f32.mrf.mxu0
    %v2885 = vadd.f32 0.0, %v2884
    %v2886 = vpop.f32.mrf.mxu0
    %2887 = vdwg.mxu0
    %v2888 = vmul.f32 %v2807, 0.35355338
    %v2889 = vmul.f32 %v2885, 0.35355338
    %v2890 = vadd.f32 %v2888, %v374
    %v2891 = vadd.f32 %v2889, %v378
    %v2892 = vsel %vm215, %v2890, -inf
    %2893 = vmax.xlane.f32.xlu0 %v2892
    %v2894 = vpop.xlane.xlu0 %2893
    %v2895 = vsel %vm215, %v2891, -inf
    %2896 = vmax.xlane.f32.xlu0 %v2895
    %v2897 = vpop.xlane.xlu0 %2896
    %v2898 = vsub.f32 %v2890, %v2894
    %v2899 = vsub.f32 %v2891, %v2897
    %v2900 = vmul.f32 %v2898, 1.442695
    %v2901 = vpow.pop %v2900
    %v2902 = vmul.f32 %v2899, 1.442695
    %v2903 = vpow.pop %v2902
    %v2904 = vsel %vm215, %v2901, 0.0
    %2905 = vadd.xlane.f32.xlu0 %v2904
    %v2906 = vpop.xlane.xlu0 %2905
    %v2907 = vsel %vm215, %v2903, 0.0
    %2908 = vadd.xlane.f32.xlu0 %v2907
    %v2909 = vpop.xlane.xlu0 %2908
    %v2910 = vrcp.pop %v2906
    %v2911 = vmul.f32 %v2901, %v2910
    %v2912 = vrcp.pop %v2909
    %v2913 = vmul.f32 %v2903, %v2912
    %2914 = vrot.lane.b32.xlu0 %v2058, 48
    %v2915 = vpop.permute.xlu0 %2914
    %v2918 = vsel %vm215, %v2911, 0
    %2920 = vmatprep.subr.mxu0 0.0
    %2921 = vmatpush1.msra.mxu0 0.0
    %2922 = vmatprep.subr.mxu0 0.0
    %2923 = vmatpush1.msra.mxu0 0.0
    %2924 = vmatprep.subr.mxu0 0.0
    %2925 = vmatpush1.msra.mxu0 0.0
    %2926 = vmatprep.subr.mxu0 0.0
    %2927 = vmatpush1.msra.mxu0 0.0
    %2928 = vmatprep.subr.mxu0 0.0
    %2929 = vmatpush1.msra.mxu0 0.0
    %2930 = vmatprep.subr.mxu0 0.0
    %2931 = vmatpush1.msra.mxu0 0.0
    %2932 = vmatprep.subr.mxu0 0.0
    %2933 = vmatpush1.msra.mxu0 0.0
    %2934 = vmatprep.subr.mxu0 0.0
    %2935 = vmatpush1.msra.mxu0 0.0
    %2936 = vmatprep.subr.mxu0 0.0
    %2937 = vmatpush1.msra.mxu0 0.0
    %2938 = vmatprep.subr.mxu0 0.0
    %2939 = vmatpush1.msra.mxu0 0.0
    %2940 = vmatprep.subr.mxu0 0.0
    %2941 = vmatpush1.msra.mxu0 0.0
    %2942 = vmatprep.subr.mxu0 0.0
    %2943 = vmatpush1.msra.mxu0 0.0
    %2944 = vmatprep.subr.mxu0 0.0
    %2945 = vmatpush1.msra.mxu0 0.0
    %2946 = vmatprep.subr.mxu0 0.0
    %2947 = vmatpush1.msra.mxu0 0.0
    %2948 = vmatprep.subr.mxu0 0.0
    %2949 = vmatpush1.msra.mxu0 0.0
    %2950 = vmatprep.subr.mxu0 0.0
    %2951 = vmatpush1.msra.mxu0 %v2915
    %2952 = vmatprep.subr.mxu0 0.0
    %2953 = vmatpush2.msra.mxu0 0.0
    %2954 = vmatprep.subr.mxu0 0.0
    %2955 = vmatpush2.msra.mxu0 0.0
    %2956 = vmatprep.subr.mxu0 0.0
    %2957 = vmatpush2.msra.mxu0 0.0
    %2958 = vmatprep.subr.mxu0 0.0
    %2959 = vmatpush2.msra.mxu0 0.0
    %2960 = vmatprep.subr.mxu0 0.0
    %2961 = vmatpush2.msra.mxu0 0.0
    %2962 = vmatprep.subr.mxu0 0.0
    %2963 = vmatpush2.msra.mxu0 0.0
    %2964 = vmatprep.subr.mxu0 0.0
    %2965 = vmatpush2.msra.mxu0 0.0
    %2966 = vmatprep.subr.mxu0 0.0
    %2967 = vmatpush2.msra.mxu0 0.0
    %2968 = vmatprep.subr.mxu0 0.0
    %2969 = vmatpush2.msra.mxu0 0.0
    %2970 = vmatprep.subr.mxu0 0.0
    %2971 = vmatpush2.msra.mxu0 0.0
    %2972 = vmatprep.subr.mxu0 0.0
    %2973 = vmatpush2.msra.mxu0 0.0
    %2974 = vmatprep.subr.mxu0 0.0
    %2975 = vmatpush2.msra.mxu0 0.0
    %2976 = vmatprep.subr.mxu0 0.0
    %2977 = vmatpush2.msra.mxu0 0.0
    %2978 = vmatprep.subr.mxu0 0.0
    %2979 = vmatpush2.msra.mxu0 0.0
    %2980 = vmatprep.subr.mxu0 0.0
    %2981 = vmatpush2.msra.mxu0 0.0
    %2982 = vmatprep.subr.mxu0 0.0
    %2983 = vmatpush2.msra.mxu0 0.0
    %2984 = vmatprep.mubr.f32.mxu0 0.0
    %2985 = vmatmul.mubr.f32.gmra.mxu0 %v2918
    %v2986 = vpop.f32.mrf.mxu0
    %v2987 = vadd.f32 0.0, %v2986
    %v2988 = vpop.f32.mrf.mxu0
    %2989 = vdwg.mxu0
    %2990 = vrot.lane.b32.xlu0 %v2063, 48
    %v2991 = vpop.permute.xlu0 %2990
    %v2994 = vsel %vm215, %v2913, 0
    %2996 = vmatprep.subr.mxu0 0.0
    %2997 = vmatpush1.msra.mxu0 0.0
    %2998 = vmatprep.subr.mxu0 0.0
    %2999 = vmatpush1.msra.mxu0 0.0
    %3000 = vmatprep.subr.mxu0 0.0
    %3001 = vmatpush1.msra.mxu0 0.0
    %3002 = vmatprep.subr.mxu0 0.0
    %3003 = vmatpush1.msra.mxu0 0.0
    %3004 = vmatprep.subr.mxu0 0.0
    %3005 = vmatpush1.msra.mxu0 0.0
    %3006 = vmatprep.subr.mxu0 0.0
    %3007 = vmatpush1.msra.mxu0 0.0
    %3008 = vmatprep.subr.mxu0 0.0
    %3009 = vmatpush1.msra.mxu0 0.0
    %3010 = vmatprep.subr.mxu0 0.0
    %3011 = vmatpush1.msra.mxu0 0.0
    %3012 = vmatprep.subr.mxu0 0.0
    %3013 = vmatpush1.msra.mxu0 0.0
    %3014 = vmatprep.subr.mxu0 0.0
    %3015 = vmatpush1.msra.mxu0 0.0
    %3016 = vmatprep.subr.mxu0 0.0
    %3017 = vmatpush1.msra.mxu0 0.0
    %3018 = vmatprep.subr.mxu0 0.0
    %3019 = vmatpush1.msra.mxu0 0.0
    %3020 = vmatprep.subr.mxu0 0.0
    %3021 = vmatpush1.msra.mxu0 0.0
    %3022 = vmatprep.subr.mxu0 0.0
    %3023 = vmatpush1.msra.mxu0 0.0
    %3024 = vmatprep.subr.mxu0 0.0
    %3025 = vmatpush1.msra.mxu0 0.0
    %3026 = vmatprep.subr.mxu0 0.0
    %3027 = vmatpush1.msra.mxu0 %v2991
    %3028 = vmatprep.subr.mxu0 0.0
    %3029 = vmatpush2.msra.mxu0 0.0
    %3030 = vmatprep.subr.mxu0 0.0
    %3031 = vmatpush2.msra.mxu0 0.0
    %3032 = vmatprep.subr.mxu0 0.0
    %3033 = vmatpush2.msra.mxu0 0.0
    %3034 = vmatprep.subr.mxu0 0.0
    %3035 = vmatpush2.msra.mxu0 0.0
    %3036 = vmatprep.subr.mxu0 0.0
    %3037 = vmatpush2.msra.mxu0 0.0
    %3038 = vmatprep.subr.mxu0 0.0
    %3039 = vmatpush2.msra.mxu0 0.0
    %3040 = vmatprep.subr.mxu0 0.0
    %3041 = vmatpush2.msra.mxu0 0.0
    %3042 = vmatprep.subr.mxu0 0.0
    %3043 = vmatpush2.msra.mxu0 0.0
    %3044 = vmatprep.subr.mxu0 0.0
    %3045 = vmatpush2.msra.mxu0 0.0
    %3046 = vmatprep.subr.mxu0 0.0
    %3047 = vmatpush2.msra.mxu0 0.0
    %3048 = vmatprep.subr.mxu0 0.0
    %3049 = vmatpush2.msra.mxu0 0.0
    %3050 = vmatprep.subr.mxu0 0.0
    %3051 = vmatpush2.msra.mxu0 0.0
    %3052 = vmatprep.subr.mxu0 0.0
    %3053 = vmatpush2.msra.mxu0 0.0
    %3054 = vmatprep.subr.mxu0 0.0
    %3055 = vmatpush2.msra.mxu0 0.0
    %3056 = vmatprep.subr.mxu0 0.0
    %3057 = vmatpush2.msra.mxu0 0.0
    %3058 = vmatprep.subr.mxu0 0.0
    %3059 = vmatpush2.msra.mxu0 0.0
    %3060 = vmatprep.mubr.f32.mxu0 0.0
    %3061 = vmatmul.mubr.f32.gmra.mxu0 %v2994
    %v3062 = vpop.f32.mrf.mxu0
    %v3063 = vadd.f32 0.0, %v3062
    %v3064 = vpop.f32.mrf.mxu0
    %3065 = vdwg.mxu0
    %3066 = vrot.lane.b32.xlu0 %v2058, 104
    %v3067 = vpop.permute.xlu0 %3066
    %3068 = vrot.lane.b32.xlu0 %v2058, 72
    %v3069 = vpop.permute.xlu0 %3068
    %v3070 = vsel %vm215, %v3067, 0
    %v3072 = vsel %vm215, %v3069, 0
    %3074 = vmatprep.subr.mxu0 0.0
    %3075 = vmatpush1.xpose.msra.mxu0 0.0
    %3076 = vmatprep.subr.mxu0 0.0
    %3077 = vmatpush1.xpose.msra.mxu0 0.0
    %3078 = vmatprep.subr.mxu0 0.0
    %3079 = vmatpush1.xpose.msra.mxu0 0.0
    %3080 = vmatprep.subr.mxu0 0.0
    %3081 = vmatpush1.xpose.msra.mxu0 0.0
    %3082 = vmatprep.subr.mxu0 0.0
    %3083 = vmatpush1.xpose.msra.mxu0 0.0
    %3084 = vmatprep.subr.mxu0 0.0
    %3085 = vmatpush1.xpose.msra.mxu0 0.0
    %3086 = vmatprep.subr.mxu0 0.0
    %3087 = vmatpush1.xpose.msra.mxu0 0.0
    %3088 = vmatprep.subr.mxu0 0.0
    %3089 = vmatpush1.xpose.msra.mxu0 0.0
    %3090 = vmatprep.subr.mxu0 0.0
    %3091 = vmatpush1.xpose.msra.mxu0 0.0
    %3092 = vmatprep.subr.mxu0 0.0
    %3093 = vmatpush1.xpose.msra.mxu0 0.0
    %3094 = vmatprep.subr.mxu0 0.0
    %3095 = vmatpush1.xpose.msra.mxu0 0.0
    %3096 = vmatprep.subr.mxu0 0.0
    %3097 = vmatpush1.xpose.msra.mxu0 0.0
    %3098 = vmatprep.subr.mxu0 0.0
    %3099 = vmatpush1.xpose.msra.mxu0 0.0
    %3100 = vmatprep.subr.mxu0 0.0
    %3101 = vmatpush1.xpose.msra.mxu0 0.0
    %3102 = vmatprep.subr.mxu0 0.0
    %3103 = vmatpush1.xpose.msra.mxu0 0.0
    %3104 = vmatprep.subr.mxu0 0.0
    %3105 = vmatpush1.xpose.msra.mxu0 %v3072
    %3106 = vmatprep.subr.mxu0 0.0
    %3107 = vmatpush2.xpose.msra.mxu0 0.0
    %3108 = vmatprep.subr.mxu0 0.0
    %3109 = vmatpush2.xpose.msra.mxu0 0.0
    %3110 = vmatprep.subr.mxu0 0.0
    %3111 = vmatpush2.xpose.msra.mxu0 0.0
    %3112 = vmatprep.subr.mxu0 0.0
    %3113 = vmatpush2.xpose.msra.mxu0 0.0
    %3114 = vmatprep.subr.mxu0 0.0
    %3115 = vmatpush2.xpose.msra.mxu0 0.0
    %3116 = vmatprep.subr.mxu0 0.0
    %3117 = vmatpush2.xpose.msra.mxu0 0.0
    %3118 = vmatprep.subr.mxu0 0.0
    %3119 = vmatpush2.xpose.msra.mxu0 0.0
    %3120 = vmatprep.subr.mxu0 0.0
    %3121 = vmatpush2.xpose.msra.mxu0 0.0
    %3122 = vmatprep.subr.mxu0 0.0
    %3123 = vmatpush2.xpose.msra.mxu0 0.0
    %3124 = vmatprep.subr.mxu0 0.0
    %3125 = vmatpush2.xpose.msra.mxu0 0.0
    %3126 = vmatprep.subr.mxu0 0.0
    %3127 = vmatpush2.xpose.msra.mxu0 0.0
    %3128 = vmatprep.subr.mxu0 0.0
    %3129 = vmatpush2.xpose.msra.mxu0 0.0
    %3130 = vmatprep.subr.mxu0 0.0
    %3131 = vmatpush2.xpose.msra.mxu0 0.0
    %3132 = vmatprep.subr.mxu0 0.0
    %3133 = vmatpush2.xpose.msra.mxu0 0.0
    %3134 = vmatprep.subr.mxu0 0.0
    %3135 = vmatpush2.xpose.msra.mxu0 0.0
    %3136 = vmatprep.subr.mxu0 0.0
    %3137 = vmatpush2.xpose.msra.mxu0 0.0
    %3138 = vmatprep.mubr.f32.mxu0 0.0
    %3139 = vmatmul.mubr.f32.gmra.mxu0 %v3070
    %v3140 = vpop.f32.mrf.mxu0
    %v3141 = vadd.f32 0.0, %v3140
    %v3142 = vpop.f32.mrf.mxu0
    %3143 = vdwg.mxu0
    %3144 = vrot.lane.b32.xlu0 %v2063, 104
    %v3145 = vpop.permute.xlu0 %3144
    %3146 = vrot.lane.b32.xlu0 %v2063, 72
    %v3147 = vpop.permute.xlu0 %3146
    %v3148 = vsel %vm215, %v3145, 0
    %v3150 = vsel %vm215, %v3147, 0
    %3152 = vmatprep.subr.mxu0 0.0
    %3153 = vmatpush1.xpose.msra.mxu0 0.0
    %3154 = vmatprep.subr.mxu0 0.0
    %3155 = vmatpush1.xpose.msra.mxu0 0.0
    %3156 = vmatprep.subr.mxu0 0.0
    %3157 = vmatpush1.xpose.msra.mxu0 0.0
    %3158 = vmatprep.subr.mxu0 0.0
    %3159 = vmatpush1.xpose.msra.mxu0 0.0
    %3160 = vmatprep.subr.mxu0 0.0
    %3161 = vmatpush1.xpose.msra.mxu0 0.0
    %3162 = vmatprep.subr.mxu0 0.0
    %3163 = vmatpush1.xpose.msra.mxu0 0.0
    %3164 = vmatprep.subr.mxu0 0.0
    %3165 = vmatpush1.xpose.msra.mxu0 0.0
    %3166 = vmatprep.subr.mxu0 0.0
    %3167 = vmatpush1.xpose.msra.mxu0 0.0
    %3168 = vmatprep.subr.mxu0 0.0
    %3169 = vmatpush1.xpose.msra.mxu0 0.0
    %3170 = vmatprep.subr.mxu0 0.0
    %3171 = vmatpush1.xpose.msra.mxu0 0.0
    %3172 = vmatprep.subr.mxu0 0.0
    %3173 = vmatpush1.xpose.msra.mxu0 0.0
    %3174 = vmatprep.subr.mxu0 0.0
    %3175 = vmatpush1.xpose.msra.mxu0 0.0
    %3176 = vmatprep.subr.mxu0 0.0
    %3177 = vmatpush1.xpose.msra.mxu0 0.0
    %3178 = vmatprep.subr.mxu0 0.0
    %3179 = vmatpush1.xpose.msra.mxu0 0.0
    %3180 = vmatprep.subr.mxu0 0.0
    %3181 = vmatpush1.xpose.msra.mxu0 0.0
    %3182 = vmatprep.subr.mxu0 0.0
    %3183 = vmatpush1.xpose.msra.mxu0 %v3150
    %3184 = vmatprep.subr.mxu0 0.0
    %3185 = vmatpush2.xpose.msra.mxu0 0.0
    %3186 = vmatprep.subr.mxu0 0.0
    %3187 = vmatpush2.xpose.msra.mxu0 0.0
    %3188 = vmatprep.subr.mxu0 0.0
    %3189 = vmatpush2.xpose.msra.mxu0 0.0
    %3190 = vmatprep.subr.mxu0 0.0
    %3191 = vmatpush2.xpose.msra.mxu0 0.0
    %3192 = vmatprep.subr.mxu0 0.0
    %3193 = vmatpush2.xpose.msra.mxu0 0.0
    %3194 = vmatprep.subr.mxu0 0.0
    %3195 = vmatpush2.xpose.msra.mxu0 0.0
    %3196 = vmatprep.subr.mxu0 0.0
    %3197 = vmatpush2.xpose.msra.mxu0 0.0
    %3198 = vmatprep.subr.mxu0 0.0
    %3199 = vmatpush2.xpose.msra.mxu0 0.0
    %3200 = vmatprep.subr.mxu0 0.0
    %3201 = vmatpush2.xpose.msra.mxu0 0.0
    %3202 = vmatprep.subr.mxu0 0.0
    %3203 = vmatpush2.xpose.msra.mxu0 0.0
    %3204 = vmatprep.subr.mxu0 0.0
    %3205 = vmatpush2.xpose.msra.mxu0 0.0
    %3206 = vmatprep.subr.mxu0 0.0
    %3207 = vmatpush2.xpose.msra.mxu0 0.0
    %3208 = vmatprep.subr.mxu0 0.0
    %3209 = vmatpush2.xpose.msra.mxu0 0.0
    %3210 = vmatprep.subr.mxu0 0.0
    %3211 = vmatpush2.xpose.msra.mxu0 0.0
    %3212 = vmatprep.subr.mxu0 0.0
    %3213 = vmatpush2.xpose.msra.mxu0 0.0
    %3214 = vmatprep.subr.mxu0 0.0
    %3215 = vmatpush2.xpose.msra.mxu0 0.0
    %3216 = vmatprep.mubr.f32.mxu0 0.0
    %3217 = vmatmul.mubr.f32.gmra.mxu0 %v3148
    %v3218 = vpop.f32.mrf.mxu0
    %v3219 = vadd.f32 0.0, %v3218
    %v3220 = vpop.f32.mrf.mxu0
    %3221 = vdwg.mxu0
    %v3222 = vmul.f32 %v3141, 0.35355338
    %v3223 = vmul.f32 %v3219, 0.35355338
    %v3224 = vadd.f32 %v3222, %v374
    %v3225 = vadd.f32 %v3223, %v378
    %v3226 = vsel %vm215, %v3224, -inf
    %3227 = vmax.xlane.f32.xlu0 %v3226
    %v3228 = vpop.xlane.xlu0 %3227
    %v3229 = vsel %vm215, %v3225, -inf
    %3230 = vmax.xlane.f32.xlu0 %v3229
    %v3231 = vpop.xlane.xlu0 %3230
    %v3232 = vsub.f32 %v3224, %v3228
    %v3233 = vsub.f32 %v3225, %v3231
    %v3234 = vmul.f32 %v3232, 1.442695
    %v3235 = vpow.pop %v3234
    %v3236 = vmul.f32 %v3233, 1.442695
    %v3237 = vpow.pop %v3236
    %v3238 = vsel %vm215, %v3235, 0.0
    %3239 = vadd.xlane.f32.xlu0 %v3238
    %v3240 = vpop.xlane.xlu0 %3239
    %v3241 = vsel %vm215, %v3237, 0.0
    %3242 = vadd.xlane.f32.xlu0 %v3241
    %v3243 = vpop.xlane.xlu0 %3242
    %v3244 = vrcp.pop %v3240
    %v3245 = vmul.f32 %v3235, %v3244
    %v3246 = vrcp.pop %v3243
    %v3247 = vmul.f32 %v3237, %v3246
    %3248 = vrot.lane.b32.xlu0 %v2058, 40
    %v3249 = vpop.permute.xlu0 %3248
    %v3252 = vsel %vm215, %v3245, 0
    %3254 = vmatprep.subr.mxu0 0.0
    %3255 = vmatpush1.msra.mxu0 0.0
    %3256 = vmatprep.subr.mxu0 0.0
    %3257 = vmatpush1.msra.mxu0 0.0
    %3258 = vmatprep.subr.mxu0 0.0
    %3259 = vmatpush1.msra.mxu0 0.0
    %3260 = vmatprep.subr.mxu0 0.0
    %3261 = vmatpush1.msra.mxu0 0.0
    %3262 = vmatprep.subr.mxu0 0.0
    %3263 = vmatpush1.msra.mxu0 0.0
    %3264 = vmatprep.subr.mxu0 0.0
    %3265 = vmatpush1.msra.mxu0 0.0
    %3266 = vmatprep.subr.mxu0 0.0
    %3267 = vmatpush1.msra.mxu0 0.0
    %3268 = vmatprep.subr.mxu0 0.0
    %3269 = vmatpush1.msra.mxu0 0.0
    %3270 = vmatprep.subr.mxu0 0.0
    %3271 = vmatpush1.msra.mxu0 0.0
    %3272 = vmatprep.subr.mxu0 0.0
    %3273 = vmatpush1.msra.mxu0 0.0
    %3274 = vmatprep.subr.mxu0 0.0
    %3275 = vmatpush1.msra.mxu0 0.0
    %3276 = vmatprep.subr.mxu0 0.0
    %3277 = vmatpush1.msra.mxu0 0.0
    %3278 = vmatprep.subr.mxu0 0.0
    %3279 = vmatpush1.msra.mxu0 0.0
    %3280 = vmatprep.subr.mxu0 0.0
    %3281 = vmatpush1.msra.mxu0 0.0
    %3282 = vmatprep.subr.mxu0 0.0
    %3283 = vmatpush1.msra.mxu0 0.0
    %3284 = vmatprep.subr.mxu0 0.0
    %3285 = vmatpush1.msra.mxu0 %v3249
    %3286 = vmatprep.subr.mxu0 0.0
    %3287 = vmatpush2.msra.mxu0 0.0
    %3288 = vmatprep.subr.mxu0 0.0
    %3289 = vmatpush2.msra.mxu0 0.0
    %3290 = vmatprep.subr.mxu0 0.0
    %3291 = vmatpush2.msra.mxu0 0.0
    %3292 = vmatprep.subr.mxu0 0.0
    %3293 = vmatpush2.msra.mxu0 0.0
    %3294 = vmatprep.subr.mxu0 0.0
    %3295 = vmatpush2.msra.mxu0 0.0
    %3296 = vmatprep.subr.mxu0 0.0
    %3297 = vmatpush2.msra.mxu0 0.0
    %3298 = vmatprep.subr.mxu0 0.0
    %3299 = vmatpush2.msra.mxu0 0.0
    %3300 = vmatprep.subr.mxu0 0.0
    %3301 = vmatpush2.msra.mxu0 0.0
    %3302 = vmatprep.subr.mxu0 0.0
    %3303 = vmatpush2.msra.mxu0 0.0
    %3304 = vmatprep.subr.mxu0 0.0
    %3305 = vmatpush2.msra.mxu0 0.0
    %3306 = vmatprep.subr.mxu0 0.0
    %3307 = vmatpush2.msra.mxu0 0.0
    %3308 = vmatprep.subr.mxu0 0.0
    %3309 = vmatpush2.msra.mxu0 0.0
    %3310 = vmatprep.subr.mxu0 0.0
    %3311 = vmatpush2.msra.mxu0 0.0
    %3312 = vmatprep.subr.mxu0 0.0
    %3313 = vmatpush2.msra.mxu0 0.0
    %3314 = vmatprep.subr.mxu0 0.0
    %3315 = vmatpush2.msra.mxu0 0.0
    %3316 = vmatprep.subr.mxu0 0.0
    %3317 = vmatpush2.msra.mxu0 0.0
    %3318 = vmatprep.mubr.f32.mxu0 0.0
    %3319 = vmatmul.mubr.f32.gmra.mxu0 %v3252
    %v3320 = vpop.f32.mrf.mxu0
    %v3321 = vadd.f32 0.0, %v3320
    %v3322 = vpop.f32.mrf.mxu0
    %3323 = vdwg.mxu0
    %3324 = vrot.lane.b32.xlu0 %v2063, 40
    %v3325 = vpop.permute.xlu0 %3324
    %v3328 = vsel %vm215, %v3247, 0
    %3330 = vmatprep.subr.mxu0 0.0
    %3331 = vmatpush1.msra.mxu0 0.0
    %3332 = vmatprep.subr.mxu0 0.0
    %3333 = vmatpush1.msra.mxu0 0.0
    %3334 = vmatprep.subr.mxu0 0.0
    %3335 = vmatpush1.msra.mxu0 0.0
    %3336 = vmatprep.subr.mxu0 0.0
    %3337 = vmatpush1.msra.mxu0 0.0
    %3338 = vmatprep.subr.mxu0 0.0
    %3339 = vmatpush1.msra.mxu0 0.0
    %3340 = vmatprep.subr.mxu0 0.0
    %3341 = vmatpush1.msra.mxu0 0.0
    %3342 = vmatprep.subr.mxu0 0.0
    %3343 = vmatpush1.msra.mxu0 0.0
    %3344 = vmatprep.subr.mxu0 0.0
    %3345 = vmatpush1.msra.mxu0 0.0
    %3346 = vmatprep.subr.mxu0 0.0
    %3347 = vmatpush1.msra.mxu0 0.0
    %3348 = vmatprep.subr.mxu0 0.0
    %3349 = vmatpush1.msra.mxu0 0.0
    %3350 = vmatprep.subr.mxu0 0.0
    %3351 = vmatpush1.msra.mxu0 0.0
    %3352 = vmatprep.subr.mxu0 0.0
    %3353 = vmatpush1.msra.mxu0 0.0
    %3354 = vmatprep.subr.mxu0 0.0
    %3355 = vmatpush1.msra.mxu0 0.0
    %3356 = vmatprep.subr.mxu0 0.0
    %3357 = vmatpush1.msra.mxu0 0.0
    %3358 = vmatprep.subr.mxu0 0.0
    %3359 = vmatpush1.msra.mxu0 0.0
    %3360 = vmatprep.subr.mxu0 0.0
    %3361 = vmatpush1.msra.mxu0 %v3325
    %3362 = vmatprep.subr.mxu0 0.0
    %3363 = vmatpush2.msra.mxu0 0.0
    %3364 = vmatprep.subr.mxu0 0.0
    %3365 = vmatpush2.msra.mxu0 0.0
    %3366 = vmatprep.subr.mxu0 0.0
    %3367 = vmatpush2.msra.mxu0 0.0
    %3368 = vmatprep.subr.mxu0 0.0
    %3369 = vmatpush2.msra.mxu0 0.0
    %3370 = vmatprep.subr.mxu0 0.0
    %3371 = vmatpush2.msra.mxu0 0.0
    %3372 = vmatprep.subr.mxu0 0.0
    %3373 = vmatpush2.msra.mxu0 0.0
    %3374 = vmatprep.subr.mxu0 0.0
    %3375 = vmatpush2.msra.mxu0 0.0
    %3376 = vmatprep.subr.mxu0 0.0
    %3377 = vmatpush2.msra.mxu0 0.0
    %3378 = vmatprep.subr.mxu0 0.0
    %3379 = vmatpush2.msra.mxu0 0.0
    %3380 = vmatprep.subr.mxu0 0.0
    %3381 = vmatpush2.msra.mxu0 0.0
    %3382 = vmatprep.subr.mxu0 0.0
    %3383 = vmatpush2.msra.mxu0 0.0
    %3384 = vmatprep.subr.mxu0 0.0
    %3385 = vmatpush2.msra.mxu0 0.0
    %3386 = vmatprep.subr.mxu0 0.0
    %3387 = vmatpush2.msra.mxu0 0.0
    %3388 = vmatprep.subr.mxu0 0.0
    %3389 = vmatpush2.msra.mxu0 0.0
    %3390 = vmatprep.subr.mxu0 0.0
    %3391 = vmatpush2.msra.mxu0 0.0
    %3392 = vmatprep.subr.mxu0 0.0
    %3393 = vmatpush2.msra.mxu0 0.0
    %3394 = vmatprep.mubr.f32.mxu0 0.0
    %3395 = vmatmul.mubr.f32.gmra.mxu0 %v3328
    %v3396 = vpop.f32.mrf.mxu0
    %v3397 = vadd.f32 0.0, %v3396
    %v3398 = vpop.f32.mrf.mxu0
    %3399 = vdwg.mxu0
    %3402 = vrot.lane.b32.xlu0 %v2653, 8
    %v3403 = vpop.permute.xlu0 %3402
    %3404 = vrot.lane.b32.xlu0 %v2729, 8
    %v3405 = vpop.permute.xlu0 %3404
    %3410 = vrot.lane.b32.xlu0 %v2987, 16
    %v3411 = vpop.permute.xlu0 %3410
    %3412 = vrot.lane.b32.xlu0 %v3063, 16
    %v3413 = vpop.permute.xlu0 %3412
    %3418 = vrot.lane.b32.xlu0 %v3321, 24
    %v3419 = vpop.permute.xlu0 %3418
    %3420 = vrot.lane.b32.xlu0 %v3397, 24
    %v3421 = vpop.permute.xlu0 %3420
    %v3424 = vsel %vm215, %v2319, %v3403
    %v3425 = vsel %vm215, %v2395, %v3405
    %v3426 = vsel %vm1585, %v3424, %v3411
    %v3427 = vsel %vm1585, %v3425, %v3413
    %v3428 = vsel %vm1588, %v3426, %v3419
    %v3429 = vsel %vm1588, %v3427, %v3421
    %s3430 = scalar_lea.vmem %s5, 32
    %v3431 = vld [vmem:[%s3430] sm:$0xff]
    %v3432 = vld [vmem:[%s3430 + $0x8] sm:$0xff]
    %v3433 = vld [vmem:[%s3430 + $0x10] sm:$0xff]
    %v3434 = vld [vmem:[%s3430 + $0x18] sm:$0xff]
    %s3435 = scalar_lea.vmem %s6, 1
    %v3436 = vld [vmem:[%s3435] sm:$0x1]
    %v3438 = vlaneseq
    %v3439 = vshrl.u32 %v3438, 7
    %v3440 = vsub.s32 0, %v3439
    %v3441 = vrot.slane %v3436, %v3440
    %v3444 = vsel %vm78, %v3428, 0
    %v3447 = vsel %vm78, %v3429, 0
    %3449 = vmatprep.subr.mxu0 0.0
    %3450 = vmatpush1.msra.mxu0 0.0
    %3451 = vmatprep.subr.mxu0 0.0
    %3452 = vmatpush1.msra.mxu0 0.0
    %3453 = vmatprep.subr.mxu0 0.0
    %3454 = vmatpush1.msra.mxu0 0.0
    %3455 = vmatprep.subr.mxu0 0.0
    %3456 = vmatpush1.msra.mxu0 0.0
    %3457 = vmatprep.subr.mxu0 0.0
    %3458 = vmatpush1.msra.mxu0 0.0
    %3459 = vmatprep.subr.mxu0 0.0
    %3460 = vmatpush1.msra.mxu0 0.0
    %3461 = vmatprep.subr.mxu0 0.0
    %3462 = vmatpush1.msra.mxu0 0.0
    %3463 = vmatprep.subr.mxu0 0.0
    %3464 = vmatpush1.msra.mxu0 0.0
    %3465 = vmatprep.subr.mxu0 0.0
    %3466 = vmatpush1.msra.mxu0 0.0
    %3467 = vmatprep.subr.mxu0 0.0
    %3468 = vmatpush1.msra.mxu0 0.0
    %3469 = vmatprep.subr.mxu0 0.0
    %3470 = vmatpush1.msra.mxu0 0.0
    %3471 = vmatprep.subr.mxu0 0.0
    %3472 = vmatpush1.msra.mxu0 0.0
    %3473 = vmatprep.subr.mxu0 0.0
    %3474 = vmatpush1.msra.mxu0 %v3434
    %3475 = vmatprep.subr.mxu0 0.0
    %3476 = vmatpush1.msra.mxu0 %v3433
    %3477 = vmatprep.subr.mxu0 0.0
    %3478 = vmatpush1.msra.mxu0 %v3432
    %3479 = vmatprep.subr.mxu0 0.0
    %3480 = vmatpush1.msra.mxu0 %v3431
    %3481 = vmatprep.subr.mxu0 0.0
    %3482 = vmatpush2.msra.mxu0 0.0
    %3483 = vmatprep.subr.mxu0 0.0
    %3484 = vmatpush2.msra.mxu0 0.0
    %3485 = vmatprep.subr.mxu0 0.0
    %3486 = vmatpush2.msra.mxu0 0.0
    %3487 = vmatprep.subr.mxu0 0.0
    %3488 = vmatpush2.msra.mxu0 0.0
    %3489 = vmatprep.subr.mxu0 0.0
    %3490 = vmatpush2.msra.mxu0 0.0
    %3491 = vmatprep.subr.mxu0 0.0
    %3492 = vmatpush2.msra.mxu0 0.0
    %3493 = vmatprep.subr.mxu0 0.0
    %3494 = vmatpush2.msra.mxu0 0.0
    %3495 = vmatprep.subr.mxu0 0.0
    %3496 = vmatpush2.msra.mxu0 0.0
    %3497 = vmatprep.subr.mxu0 0.0
    %3498 = vmatpush2.msra.mxu0 0.0
    %3499 = vmatprep.subr.mxu0 0.0
    %3500 = vmatpush2.msra.mxu0 0.0
    %3501 = vmatprep.subr.mxu0 0.0
    %3502 = vmatpush2.msra.mxu0 0.0
    %3503 = vmatprep.subr.mxu0 0.0
    %3504 = vmatpush2.msra.mxu0 0.0
    %3505 = vmatprep.subr.mxu0 0.0
    %3506 = vmatpush2.msra.mxu0 0.0
    %3507 = vmatprep.subr.mxu0 0.0
    %3508 = vmatpush2.msra.mxu0 0.0
    %3509 = vmatprep.subr.mxu0 0.0
    %3510 = vmatpush2.msra.mxu0 0.0
    %3511 = vmatprep.subr.mxu0 0.0
    %3512 = vmatpush2.msra.mxu0 0.0
    %3513 = vmatprep.mubr.f32.mxu0 0.0
    %3514 = vmatmul.mubr.f32.gmra.mxu0 %v3444
    %v3515 = vpop.f32.mrf.mxu0
    %v3516 = vadd.f32 %v3441, %v3515
    %v3517 = vpop.f32.mrf.mxu0
    %3518 = vmatprep.mubr.f32.mxu0 0.0
    %3519 = vmatmul.mubr.f32.gmra.mxu0 %v3447
    %v3520 = vpop.f32.mrf.mxu0
    %v3521 = vadd.f32 %v3441, %v3520
    %v3522 = vpop.f32.mrf.mxu0
    %3523 = vdwg.mxu0
    %s3524 = scalar_lea.vmem %s7, 2
    %v3525 = vld [vmem:[%s3524] sm:$0x3]
    %v3526 = vadd.f32 %v1970, %v3516
    %v3527 = vadd.f32 %v1971, %v3521
    %v3528 = vsel %vm78, %v3526, 0.0
    %3529 = vadd.xlane.f32.xlu0 %v3528
    %v3530 = vpop.xlane.xlu0 %3529
    %v3531 = vsel %vm78, %v3527, 0.0
    %3532 = vadd.xlane.f32.xlu0 %v3531
    %v3533 = vpop.xlane.xlu0 %3532
    %v3534 = vmul.f32 %v3530, %v85
    %v3535 = vmul.f32 %v3533, %v85
    %v3536 = vsub.f32 %v3526, %v3534
    %v3537 = vsub.f32 %v3527, %v3535
    %v3538 = vmul.f32 %v3536, %v3536
    %v3539 = vmul.f32 %v3537, %v3537
    %v3540 = vsel %vm78, %v3538, 0.0
    %3541 = vadd.xlane.f32.xlu0 %v3540
    %v3542 = vpop.xlane.xlu0 %3541
    %v3543 = vsel %vm78, %v3539, 0.0
    %3544 = vadd.xlane.f32.xlu0 %v3543
    %v3545 = vpop.xlane.xlu0 %3544
    %v3546 = vmul.f32 %v3542, %v85
    %v3547 = vmul.f32 %v3545, %v85
    %v3548 = vadd.f32 %v3546, 1e-05
    %v3549 = vadd.f32 %v3547, 1e-05
    %v3550 = vrsqrt.pop %v3548
    %v3551 = vrsqrt.pop %v3549
    %v3552 = vmul.f32 %v3536, %v3550
    %v3553 = vmul.f32 %v3537, %v3551
    %v3554 = vlaneseq
    %v3555 = vshrl.u32 %v3554, 7
    %v3556 = vsub.s32 0, %v3555
    %v3557 = vrot.slane %v3525, %v3556
    %v3558 = vmul.f32 %v3552, %v3557
    %v3559 = vmul.f32 %v3553, %v3557
    %v3560 = vlaneseq
    %v3561 = vshrl.u32 %v3560, 7
    %v3562 = vsub.s32 1, %v3561
    %v3563 = vrot.slane %v3525, %v3562
    %v3564 = vadd.f32 %v3558, %v3563
    %v3565 = vadd.f32 %v3559, %v3563
    %s3566 = scalar_lea.vmem %s8, 32
    %v3567 = vld [vmem:[%s3566] sm:$0xff]
    %v3568 = vld [vmem:[%s3566 + $0x8] sm:$0xff]
    %v3569 = vld [vmem:[%s3566 + $0x10] sm:$0xff]
    %v3570 = vld [vmem:[%s3566 + $0x18] sm:$0xff]
    %s3571 = scalar_lea.vmem %s9, 1
    %v3572 = vld [vmem:[%s3571] sm:$0x1]
    %v3574 = vlaneseq
    %v3575 = vshrl.u32 %v3574, 7
    %v3576 = vsub.s32 0, %v3575
    %v3577 = vrot.slane %v3572, %v3576
    %v3580 = vsel %vm78, %v3564, 0
    %v3583 = vsel %vm78, %v3565, 0
    %3585 = vmatprep.subr.mxu0 0.0
    %3586 = vmatpush1.msra.mxu0 0.0
    %3587 = vmatprep.subr.mxu0 0.0
    %3588 = vmatpush1.msra.mxu0 0.0
    %3589 = vmatprep.subr.mxu0 0.0
    %3590 = vmatpush1.msra.mxu0 0.0
    %3591 = vmatprep.subr.mxu0 0.0
    %3592 = vmatpush1.msra.mxu0 0.0
    %3593 = vmatprep.subr.mxu0 0.0
    %3594 = vmatpush1.msra.mxu0 0.0
    %3595 = vmatprep.subr.mxu0 0.0
    %3596 = vmatpush1.msra.mxu0 0.0
    %3597 = vmatprep.subr.mxu0 0.0
    %3598 = vmatpush1.msra.mxu0 0.0
    %3599 = vmatprep.subr.mxu0 0.0
    %3600 = vmatpush1.msra.mxu0 0.0
    %3601 = vmatprep.subr.mxu0 0.0
    %3602 = vmatpush1.msra.mxu0 0.0
    %3603 = vmatprep.subr.mxu0 0.0
    %3604 = vmatpush1.msra.mxu0 0.0
    %3605 = vmatprep.subr.mxu0 0.0
    %3606 = vmatpush1.msra.mxu0 0.0
    %3607 = vmatprep.subr.mxu0 0.0
    %3608 = vmatpush1.msra.mxu0 0.0
    %3609 = vmatprep.subr.mxu0 0.0
    %3610 = vmatpush1.msra.mxu0 %v3570
    %3611 = vmatprep.subr.mxu0 0.0
    %3612 = vmatpush1.msra.mxu0 %v3569
    %3613 = vmatprep.subr.mxu0 0.0
    %3614 = vmatpush1.msra.mxu0 %v3568
    %3615 = vmatprep.subr.mxu0 0.0
    %3616 = vmatpush1.msra.mxu0 %v3567
    %3617 = vmatprep.subr.mxu0 0.0
    %3618 = vmatpush2.msra.mxu0 0.0
    %3619 = vmatprep.subr.mxu0 0.0
    %3620 = vmatpush2.msra.mxu0 0.0
    %3621 = vmatprep.subr.mxu0 0.0
    %3622 = vmatpush2.msra.mxu0 0.0
    %3623 = vmatprep.subr.mxu0 0.0
    %3624 = vmatpush2.msra.mxu0 0.0
    %3625 = vmatprep.subr.mxu0 0.0
    %3626 = vmatpush2.msra.mxu0 0.0
    %3627 = vmatprep.subr.mxu0 0.0
    %3628 = vmatpush2.msra.mxu0 0.0
    %3629 = vmatprep.subr.mxu0 0.0
    %3630 = vmatpush2.msra.mxu0 0.0
    %3631 = vmatprep.subr.mxu0 0.0
    %3632 = vmatpush2.msra.mxu0 0.0
    %3633 = vmatprep.subr.mxu0 0.0
    %3634 = vmatpush2.msra.mxu0 0.0
    %3635 = vmatprep.subr.mxu0 0.0
    %3636 = vmatpush2.msra.mxu0 0.0
    %3637 = vmatprep.subr.mxu0 0.0
    %3638 = vmatpush2.msra.mxu0 0.0
    %3639 = vmatprep.subr.mxu0 0.0
    %3640 = vmatpush2.msra.mxu0 0.0
    %3641 = vmatprep.subr.mxu0 0.0
    %3642 = vmatpush2.msra.mxu0 0.0
    %3643 = vmatprep.subr.mxu0 0.0
    %3644 = vmatpush2.msra.mxu0 0.0
    %3645 = vmatprep.subr.mxu0 0.0
    %3646 = vmatpush2.msra.mxu0 0.0
    %3647 = vmatprep.subr.mxu0 0.0
    %3648 = vmatpush2.msra.mxu0 0.0
    %3649 = vmatprep.mubr.f32.mxu0 0.0
    %3650 = vmatmul.mubr.f32.gmra.mxu0 %v3580
    %v3651 = vpop.f32.mrf.mxu0
    %v3652 = vadd.f32 %v3577, %v3651
    %v3653 = vpop.f32.mrf.mxu0
    %3654 = vmatprep.mubr.f32.mxu0 0.0
    %3655 = vmatmul.mubr.f32.gmra.mxu0 %v3583
    %v3656 = vpop.f32.mrf.mxu0
    %v3657 = vadd.f32 %v3577, %v3656
    %v3658 = vpop.f32.mrf.mxu0
    %3659 = vdwg.mxu0
    %v3660 = vmul.f32 %v3652, 0.5
    %v3661 = vmul.f32 %v3657, 0.5
    %v3662 = vmul.f32 %v3652, 0.044715
    %v3663 = vmul.f32 %v3657, 0.044715
    %v3664 = vmul.f32 %v3662, %v3652
    %v3665 = vmul.f32 %v3663, %v3657
    %v3666 = vmul.f32 %v3664, %v3652
    %v3667 = vmul.f32 %v3665, %v3657
    %v3668 = vadd.f32 %v3652, %v3666
    %v3669 = vadd.f32 %v3657, %v3667
    %v3670 = vmul.f32 %v3668, 0.7978846
    %v3671 = vmul.f32 %v3669, 0.7978846
    %v3672 = vtanh.pop %v3670
    %v3673 = vtanh.pop %v3671
    %v3674 = vadd.f32 %v3672, 1.0
    %v3675 = vadd.f32 %v3673, 1.0
    %v3676 = vmul.f32 %v3660, %v3674
    %v3677 = vmul.f32 %v3661, %v3675
    %s3678 = scalar_lea.vmem %s10, 64
    %v3679 = vld [vmem:[%s3678] sm:$0xff]
    %v3680 = vld [vmem:[%s3678 + $0x8] sm:$0xff]
    %v3681 = vld [vmem:[%s3678 + $0x10] sm:$0xff]
    %v3682 = vld [vmem:[%s3678 + $0x18] sm:$0xff]
    %v3683 = vld [vmem:[%s3678 + $0x20] sm:$0xff]
    %v3684 = vld [vmem:[%s3678 + $0x28] sm:$0xff]
    %v3685 = vld [vmem:[%s3678 + $0x30] sm:$0xff]
    %v3686 = vld [vmem:[%s3678 + $0x38] sm:$0xff]
    %s3687 = scalar_lea.vmem %s11, 1
    %v3688 = vld [vmem:[%s3687] sm:$0x1]
    %v3690 = vlaneseq
    %v3691 = vshrl.u32 %v3690, 7
    %v3692 = vsub.s32 0, %v3691
    %v3693 = vrot.slane %v3688, %v3692
    %v3696 = vsel %vm1849, %v3676, 0
    %v3699 = vsel %vm1849, %v3677, 0
    %3701 = vmatprep.subr.mxu0 0.0
    %3702 = vmatpush1.msra.mxu0 0.0
    %3703 = vmatprep.subr.mxu0 0.0
    %3704 = vmatpush1.msra.mxu0 0.0
    %3705 = vmatprep.subr.mxu0 0.0
    %3706 = vmatpush1.msra.mxu0 0.0
    %3707 = vmatprep.subr.mxu0 0.0
    %3708 = vmatpush1.msra.mxu0 0.0
    %3709 = vmatprep.subr.mxu0 0.0
    %3710 = vmatpush1.msra.mxu0 0.0
    %3711 = vmatprep.subr.mxu0 0.0
    %3712 = vmatpush1.msra.mxu0 0.0
    %3713 = vmatprep.subr.mxu0 0.0
    %3714 = vmatpush1.msra.mxu0 0.0
    %3715 = vmatprep.subr.mxu0 0.0
    %3716 = vmatpush1.msra.mxu0 0.0
    %3717 = vmatprep.subr.mxu0 0.0
    %3718 = vmatpush1.msra.mxu0 %v3686
    %3719 = vmatprep.subr.mxu0 0.0
    %3720 = vmatpush1.msra.mxu0 %v3685
    %3721 = vmatprep.subr.mxu0 0.0
    %3722 = vmatpush1.msra.mxu0 %v3684
    %3723 = vmatprep.subr.mxu0 0.0
    %3724 = vmatpush1.msra.mxu0 %v3683
    %3725 = vmatprep.subr.mxu0 0.0
    %3726 = vmatpush1.msra.mxu0 %v3682
    %3727 = vmatprep.subr.mxu0 0.0
    %3728 = vmatpush1.msra.mxu0 %v3681
    %3729 = vmatprep.subr.mxu0 0.0
    %3730 = vmatpush1.msra.mxu0 %v3680
    %3731 = vmatprep.subr.mxu0 0.0
    %3732 = vmatpush1.msra.mxu0 %v3679
    %3733 = vmatprep.subr.mxu0 0.0
    %3734 = vmatpush2.msra.mxu0 0.0
    %3735 = vmatprep.subr.mxu0 0.0
    %3736 = vmatpush2.msra.mxu0 0.0
    %3737 = vmatprep.subr.mxu0 0.0
    %3738 = vmatpush2.msra.mxu0 0.0
    %3739 = vmatprep.subr.mxu0 0.0
    %3740 = vmatpush2.msra.mxu0 0.0
    %3741 = vmatprep.subr.mxu0 0.0
    %3742 = vmatpush2.msra.mxu0 0.0
    %3743 = vmatprep.subr.mxu0 0.0
    %3744 = vmatpush2.msra.mxu0 0.0
    %3745 = vmatprep.subr.mxu0 0.0
    %3746 = vmatpush2.msra.mxu0 0.0
    %3747 = vmatprep.subr.mxu0 0.0
    %3748 = vmatpush2.msra.mxu0 0.0
    %3749 = vmatprep.subr.mxu0 0.0
    %3750 = vmatpush2.msra.mxu0 0.0
    %3751 = vmatprep.subr.mxu0 0.0
    %3752 = vmatpush2.msra.mxu0 0.0
    %3753 = vmatprep.subr.mxu0 0.0
    %3754 = vmatpush2.msra.mxu0 0.0
    %3755 = vmatprep.subr.mxu0 0.0
    %3756 = vmatpush2.msra.mxu0 0.0
    %3757 = vmatprep.subr.mxu0 0.0
    %3758 = vmatpush2.msra.mxu0 0.0
    %3759 = vmatprep.subr.mxu0 0.0
    %3760 = vmatpush2.msra.mxu0 0.0
    %3761 = vmatprep.subr.mxu0 0.0
    %3762 = vmatpush2.msra.mxu0 0.0
    %3763 = vmatprep.subr.mxu0 0.0
    %3764 = vmatpush2.msra.mxu0 0.0
    %3765 = vmatprep.mubr.f32.mxu0 0.0
    %3766 = vmatmul.mubr.f32.gmra.mxu0 %v3696
    %v3767 = vpop.f32.mrf.mxu0
    %v3768 = vadd.f32 %v3693, %v3767
    %v3769 = vpop.f32.mrf.mxu0
    %3770 = vmatprep.mubr.f32.mxu0 0.0
    %3771 = vmatmul.mubr.f32.gmra.mxu0 %v3699
    %v3772 = vpop.f32.mrf.mxu0
    %v3773 = vadd.f32 %v3693, %v3772
    %v3774 = vpop.f32.mrf.mxu0
    %3775 = vdwg.mxu0
    %s3776 = scalar_lea.vmem %s12, 2
    %v3777 = vld [vmem:[%s3776] sm:$0x3]
    %v3778 = vadd.f32 %v3564, %v3768
    %v3779 = vadd.f32 %v3565, %v3773
    %v3780 = vsel %vm78, %v3778, 0.0
    %3781 = vadd.xlane.f32.xlu0 %v3780
    %v3782 = vpop.xlane.xlu0 %3781
    %v3783 = vsel %vm78, %v3779, 0.0
    %3784 = vadd.xlane.f32.xlu0 %v3783
    %v3785 = vpop.xlane.xlu0 %3784
    %v3786 = vmul.f32 %v3782, %v85
    %v3787 = vmul.f32 %v3785, %v85
    %v3788 = vsub.f32 %v3778, %v3786
    %v3789 = vsub.f32 %v3779, %v3787
    %v3790 = vmul.f32 %v3788, %v3788
    %v3791 = vmul.f32 %v3789, %v3789
    %v3792 = vsel %vm78, %v3790, 0.0
    %3793 = vadd.xlane.f32.xlu0 %v3792
    %v3794 = vpop.xlane.xlu0 %3793
    %v3795 = vsel %vm78, %v3791, 0.0
    %3796 = vadd.xlane.f32.xlu0 %v3795
    %v3797 = vpop.xlane.xlu0 %3796
    %v3798 = vmul.f32 %v3794, %v85
    %v3799 = vmul.f32 %v3797, %v85
    %v3800 = vadd.f32 %v3798, 1e-05
    %v3801 = vadd.f32 %v3799, 1e-05
    %v3802 = vrsqrt.pop %v3800
    %v3803 = vrsqrt.pop %v3801
    %v3804 = vmul.f32 %v3788, %v3802
    %v3805 = vmul.f32 %v3789, %v3803
    %v3806 = vlaneseq
    %v3807 = vshrl.u32 %v3806, 7
    %v3808 = vsub.s32 0, %v3807
    %v3809 = vrot.slane %v3777, %v3808
    %v3810 = vmul.f32 %v3804, %v3809
    %v3811 = vmul.f32 %v3805, %v3809
    %v3812 = vlaneseq
    %v3813 = vshrl.u32 %v3812, 7
    %v3814 = vsub.s32 1, %v3813
    %v3815 = vrot.slane %v3777, %v3814
    %v3816 = vadd.f32 %v3810, %v3815
    %v3817 = vadd.f32 %v3811, %v3815
    %v3819 = vrot.slane %v3817, 7
    %vm3821 = vcmask 1040384
    %v3822 = vsel %vm3821, %v3816, %v3819
    %v3823 = vld [vmem:[%s13] sm:$0xff]
    %v3824 = vld [vmem:[%s13 + $0x8] sm:$0xff]
    %v3825 = vld [vmem:[%s13 + $0x10] sm:$0xff]
    %v3826 = vld [vmem:[%s13 + $0x18] sm:$0xff]
    %v3827 = vld [vmem:[%s14] sm:$0x1]
    %v3829 = vlaneseq
    %v3830 = vshrl.u32 %v3829, 7
    %v3831 = vsub.s32 0, %v3830
    %v3832 = vrot.slane %v3827, %v3831
    %v3835 = vsel %vm78, %v3822, 0
    %3837 = vmatprep.subr.mxu0 0.0
    %3838 = vmatpush1.msra.mxu0 0.0
    %3839 = vmatprep.subr.mxu0 0.0
    %3840 = vmatpush1.msra.mxu0 0.0
    %3841 = vmatprep.subr.mxu0 0.0
    %3842 = vmatpush1.msra.mxu0 0.0
    %3843 = vmatprep.subr.mxu0 0.0
    %3844 = vmatpush1.msra.mxu0 0.0
    %3845 = vmatprep.subr.mxu0 0.0
    %3846 = vmatpush1.msra.mxu0 0.0
    %3847 = vmatprep.subr.mxu0 0.0
    %3848 = vmatpush1.msra.mxu0 0.0
    %3849 = vmatprep.subr.mxu0 0.0
    %3850 = vmatpush1.msra.mxu0 0.0
    %3851 = vmatprep.subr.mxu0 0.0
    %3852 = vmatpush1.msra.mxu0 0.0
    %3853 = vmatprep.subr.mxu0 0.0
    %3854 = vmatpush1.msra.mxu0 0.0
    %3855 = vmatprep.subr.mxu0 0.0
    %3856 = vmatpush1.msra.mxu0 0.0
    %3857 = vmatprep.subr.mxu0 0.0
    %3858 = vmatpush1.msra.mxu0 0.0
    %3859 = vmatprep.subr.mxu0 0.0
    %3860 = vmatpush1.msra.mxu0 0.0
    %3861 = vmatprep.subr.mxu0 0.0
    %3862 = vmatpush1.msra.mxu0 %v3826
    %3863 = vmatprep.subr.mxu0 0.0
    %3864 = vmatpush1.msra.mxu0 %v3825
    %3865 = vmatprep.subr.mxu0 0.0
    %3866 = vmatpush1.msra.mxu0 %v3824
    %3867 = vmatprep.subr.mxu0 0.0
    %3868 = vmatpush1.msra.mxu0 %v3823
    %3869 = vmatprep.subr.mxu0 0.0
    %3870 = vmatpush2.msra.mxu0 0.0
    %3871 = vmatprep.subr.mxu0 0.0
    %3872 = vmatpush2.msra.mxu0 0.0
    %3873 = vmatprep.subr.mxu0 0.0
    %3874 = vmatpush2.msra.mxu0 0.0
    %3875 = vmatprep.subr.mxu0 0.0
    %3876 = vmatpush2.msra.mxu0 0.0
    %3877 = vmatprep.subr.mxu0 0.0
    %3878 = vmatpush2.msra.mxu0 0.0
    %3879 = vmatprep.subr.mxu0 0.0
    %3880 = vmatpush2.msra.mxu0 0.0
    %3881 = vmatprep.subr.mxu0 0.0
    %3882 = vmatpush2.msra.mxu0 0.0
    %3883 = vmatprep.subr.mxu0 0.0
    %3884 = vmatpush2.msra.mxu0 0.0
    %3885 = vmatprep.subr.mxu0 0.0
    %3886 = vmatpush2.msra.mxu0 0.0
    %3887 = vmatprep.subr.mxu0 0.0
    %3888 = vmatpush2.msra.mxu0 0.0
    %3889 = vmatprep.subr.mxu0 0.0
    %3890 = vmatpush2.msra.mxu0 0.0
    %3891 = vmatprep.subr.mxu0 0.0
    %3892 = vmatpush2.msra.mxu0 0.0
    %3893 = vmatprep.subr.mxu0 0.0
    %3894 = vmatpush2.msra.mxu0 0.0
    %3895 = vmatprep.subr.mxu0 0.0
    %3896 = vmatpush2.msra.mxu0 0.0
    %3897 = vmatprep.subr.mxu0 0.0
    %3898 = vmatpush2.msra.mxu0 0.0
    %3899 = vmatprep.subr.mxu0 0.0
    %3900 = vmatpush2.msra.mxu0 0.0
    %3901 = vmatprep.mubr.f32.mxu0 0.0
    %3902 = vmatmul.mubr.f32.gmra.mxu0 %v3835
    %v3903 = vpop.f32.mrf.mxu0
    %v3904 = vadd.f32 %v3832, %v3903
    %v3905 = vpop.f32.mrf.mxu0
    %3906 = vdwg.mxu0
    %v3907 = vtanh.pop %v3904
    %v3908 = vld [vmem:[%s17] sm:$0xff]
    %v3909 = vld [vmem:[%s15] sm:$0xff]
    %v3910 = vld [vmem:[%s15 + $0x8] sm:$0xff]
    %v3911 = vld [vmem:[%s15 + $0x10] sm:$0xff]
    %v3912 = vld [vmem:[%s15 + $0x18] sm:$0xff]
    %v3913 = vld [vmem:[%s15 + $0x20] sm:$0xff]
    %v3914 = vld [vmem:[%s15 + $0x28] sm:$0xff]
    %v3915 = vld [vmem:[%s15 + $0x30] sm:$0xff]
    %v3916 = vld [vmem:[%s15 + $0x38] sm:$0xff]
    %v3917 = vld [vmem:[%s16] sm:$0x3]
    %v3919 = vlaneseq
    %v3920 = vshrl.u32 %v3919, 7
    %v3921 = vsub.s32 0, %v3920
    %v3922 = vrot.slane %v3917, %v3921
    %v3923 = vlaneseq
    %v3924 = vshrl.u32 %v3923, 7
    %v3925 = vsub.s32 1, %v3924
    %v3926 = vrot.slane %v3917, %v3925
    %v3930 = vsel %vm78, %v3907, 0
    %3932 = vmatprep.subr.mxu0 0.0
    %3933 = vmatpush1.msra.mxu0 0.0
    %3934 = vmatprep.subr.mxu0 0.0
    %3935 = vmatpush1.msra.mxu0 0.0
    %3936 = vmatprep.subr.mxu0 0.0
    %3937 = vmatpush1.msra.mxu0 0.0
    %3938 = vmatprep.subr.mxu0 0.0
    %3939 = vmatpush1.msra.mxu0 0.0
    %3940 = vmatprep.subr.mxu0 0.0
    %3941 = vmatpush1.msra.mxu0 0.0
    %3942 = vmatprep.subr.mxu0 0.0
    %3943 = vmatpush1.msra.mxu0 0.0
    %3944 = vmatprep.subr.mxu0 0.0
    %3945 = vmatpush1.msra.mxu0 0.0
    %3946 = vmatprep.subr.mxu0 0.0
    %3947 = vmatpush1.msra.mxu0 0.0
    %3948 = vmatprep.subr.mxu0 0.0
    %3949 = vmatpush1.msra.mxu0 0.0
    %3950 = vmatprep.subr.mxu0 0.0
    %3951 = vmatpush1.msra.mxu0 0.0
    %3952 = vmatprep.subr.mxu0 0.0
    %3953 = vmatpush1.msra.mxu0 0.0
    %3954 = vmatprep.subr.mxu0 0.0
    %3955 = vmatpush1.msra.mxu0 0.0
    %3956 = vmatprep.subr.mxu0 %v3916
    %3957 = vmatpush1.msra.mxu0 %v3915
    %3958 = vmatprep.subr.mxu0 %v3914
    %3959 = vmatpush1.msra.mxu0 %v3913
    %3960 = vmatprep.subr.mxu0 %v3912
    %3961 = vmatpush1.msra.mxu0 %v3911
    %3962 = vmatprep.subr.mxu0 %v3910
    %3963 = vmatpush1.msra.mxu0 %v3909
    %3964 = vmatprep.subr.mxu0 0.0
    %3965 = vmatpush2.msra.mxu0 0.0
    %3966 = vmatprep.subr.mxu0 0.0
    %3967 = vmatpush2.msra.mxu0 0.0
    %3968 = vmatprep.subr.mxu0 0.0
    %3969 = vmatpush2.msra.mxu0 0.0
    %3970 = vmatprep.subr.mxu0 0.0
    %3971 = vmatpush2.msra.mxu0 0.0
    %3972 = vmatprep.subr.mxu0 0.0
    %3973 = vmatpush2.msra.mxu0 0.0
    %3974 = vmatprep.subr.mxu0 0.0
    %3975 = vmatpush2.msra.mxu0 0.0
    %3976 = vmatprep.subr.mxu0 0.0
    %3977 = vmatpush2.msra.mxu0 0.0
    %3978 = vmatprep.subr.mxu0 0.0
    %3979 = vmatpush2.msra.mxu0 0.0
    %3980 = vmatprep.subr.mxu0 0.0
    %3981 = vmatpush2.msra.mxu0 0.0
    %3982 = vmatprep.subr.mxu0 0.0
    %3983 = vmatpush2.msra.mxu0 0.0
    %3984 = vmatprep.subr.mxu0 0.0
    %3985 = vmatpush2.msra.mxu0 0.0
    %3986 = vmatprep.subr.mxu0 0.0
    %3987 = vmatpush2.msra.mxu0 0.0
    %3988 = vmatprep.subr.mxu0 0.0
    %3989 = vmatpush2.msra.mxu0 0.0
    %3990 = vmatprep.subr.mxu0 0.0
    %3991 = vmatpush2.msra.mxu0 0.0
    %3992 = vmatprep.subr.mxu0 0.0
    %3993 = vmatpush2.msra.mxu0 0.0
    %3994 = vmatprep.subr.mxu0 0.0
    %3995 = vmatpush2.msra.mxu0 0.0
    %3996 = vmatprep.mubr.f32.mxu0 0.0
    %3997 = vmatmul.mubr.f32.gmra.mxu0 %v3930
    %v3998 = vpop.f32.mrf.mxu0
    %v3999 = vadd.f32 %v3922, %v3998
    %v4000 = vpop.f32.mrf.mxu0
    %v4001 = vadd.f32 %v3926, %v4000
    %4002 = vdwg.mxu0
    %v4003 = vmax.f32 %v3999, 0.0
    %v4004 = vmax.f32 %v4001, 0.0
    %v4005 = vand.u32 2147483647, %v3999
    %v4006 = vand.u32 2147483647, %v4001
    %v4007 = vsub.f32 0.0, %v4005
    %v4008 = vsub.f32 0.0, %v4006
    %v4009 = vmul.f32 %v4007, 1.442695
    %v4010 = vpow.pop %v4009
    %v4011 = vmul.f32 %v4008, 1.442695
    %v4012 = vpow.pop %v4011
    %v4013 = vadd.f32 %v4010, 1.0
    %v4014 = vadd.f32 %v4012, 1.0
    %v4015 = vlog2.pop %v4013
    %v4016 = vmul.f32 %v4015, 0.6931472
    %v4017 = vlog2.pop %v4014
    %v4018 = vmul.f32 %v4017, 0.6931472
    %v4019 = vadd.f32 %v4003, %v4016
    %v4020 = vadd.f32 %v4004, %v4018
    %v4021 = vtanh.pop %v4019
    %v4022 = vtanh.pop %v4020
    %v4023 = vmul.f32 %v3999, %v4021
    %v4024 = vmul.f32 %v4001, %v4022
    %v4026 = vlaneseq
    %v4027 = vshrl.u32 %v4026, 7
    %v4028 = vsub.s32 2, %v4027
    %v4029 = vrot.slane %v3908, %v4028
    %v4030 = vlaneseq
    %v4031 = vshrl.u32 %v4030, 7
    %v4032 = vsub.s32 6, %v4031
    %v4033 = vrot.slane %v3908, %v4032
    %v4036 = vlaneseq
    %v4037 = vshrl.u32 %v4036, 7
    %v4038 = vsub.s32 2, %v4037
    %v4039 = vrot.slane %v4029, %v4038
    %v4040 = vlaneseq
    %v4041 = vshrl.u32 %v4040, 7
    %v4042 = vsub.s32 2, %v4041
    %v4043 = vrot.slane %v4033, %v4042
    %v4044 = vsub.f32 %v4023, %v4039
    %v4045 = vsub.f32 %v4024, %v4043
    %v4046 = vadd.f32 %v3908, 1e-05
    %v4047 = vrsqrt.pop %v4046
    %v4049 = vlaneseq
    %v4050 = vshrl.u32 %v4049, 7
    %v4051 = vsub.s32 3, %v4050
    %v4052 = vrot.slane %v4047, %v4051
    %v4053 = vlaneseq
    %v4054 = vshrl.u32 %v4053, 7
    %v4055 = vsub.s32 7, %v4054
    %v4056 = vrot.slane %v4047, %v4055
    %v4059 = vlaneseq
    %v4060 = vshrl.u32 %v4059, 7
    %v4061 = vsub.s32 3, %v4060
    %v4062 = vrot.slane %v4052, %v4061
    %v4063 = vlaneseq
    %v4064 = vshrl.u32 %v4063, 7
    %v4065 = vsub.s32 3, %v4064
    %v4066 = vrot.slane %v4056, %v4065
    %v4067 = vmul.f32 %v4044, %v4062
    %v4068 = vmul.f32 %v4045, %v4066
    %v4069 = vlaneseq
    %v4070 = vshrl.u32 %v4069, 7
    %v4071 = vsub.s32 0, %v4070
    %v4072 = vrot.slane %v3908, %v4071
    %v4073 = vlaneseq
    %v4074 = vshrl.u32 %v4073, 7
    %v4075 = vsub.s32 4, %v4074
    %v4076 = vrot.slane %v3908, %v4075
    %v4079 = vlaneseq
    %v4080 = vshrl.u32 %v4079, 7
    %v4081 = vsub.s32 0, %v4080
    %v4082 = vrot.slane %v4072, %v4081
    %v4083 = vlaneseq
    %v4084 = vshrl.u32 %v4083, 7
    %v4085 = vsub.s32 0, %v4084
    %v4086 = vrot.slane %v4076, %v4085
    %v4087 = vmul.f32 %v4067, %v4082
    %v4088 = vmul.f32 %v4068, %v4086
    %v4089 = vlaneseq
    %v4090 = vshrl.u32 %v4089, 7
    %v4091 = vsub.s32 1, %v4090
    %v4092 = vrot.slane %v3908, %v4091
    %v4093 = vlaneseq
    %v4094 = vshrl.u32 %v4093, 7
    %v4095 = vsub.s32 5, %v4094
    %v4096 = vrot.slane %v3908, %v4095
    %v4099 = vlaneseq
    %v4100 = vshrl.u32 %v4099, 7
    %v4101 = vsub.s32 1, %v4100
    %v4102 = vrot.slane %v4092, %v4101
    %v4103 = vlaneseq
    %v4104 = vshrl.u32 %v4103, 7
    %v4105 = vsub.s32 1, %v4104
    %v4106 = vrot.slane %v4096, %v4105
    %v4107 = vadd.f32 %v4087, %v4102
    %v4108 = vadd.f32 %v4088, %v4106
    %v4109 = vld [vmem:[%s20] sm:$0xf]
    %v4110 = vld [vmem:[%s18] sm:$0xff]
    %v4111 = vld [vmem:[%s18 + $0x8] sm:$0xff]
    %v4112 = vld [vmem:[%s18 + $0x10] sm:$0xff]
    %v4113 = vld [vmem:[%s18 + $0x18] sm:$0xff]
    %v4114 = vld [vmem:[%s18 + $0x20] sm:$0xff]
    %v4115 = vld [vmem:[%s18 + $0x28] sm:$0xff]
    %v4116 = vld [vmem:[%s18 + $0x30] sm:$0xff]
    %v4117 = vld [vmem:[%s18 + $0x38] sm:$0xff]
    %v4118 = vld [vmem:[%s18 + $0x40] sm:$0xff]
    %v4119 = vld [vmem:[%s18 + $0x48] sm:$0xff]
    %v4120 = vld [vmem:[%s18 + $0x50] sm:$0xff]
    %v4121 = vld [vmem:[%s18 + $0x58] sm:$0xff]
    %v4122 = vld [vmem:[%s18 + $0x60] sm:$0xff]
    %v4123 = vld [vmem:[%s18 + $0x68] sm:$0xff]
    %v4124 = vld [vmem:[%s18 + $0x70] sm:$0xff]
    %v4125 = vld [vmem:[%s18 + $0x78] sm:$0xff]
    %v4126 = vld [vmem:[%s18 + $0x80] sm:$0xff]
    %v4127 = vld [vmem:[%s18 + $0x88] sm:$0xff]
    %v4128 = vld [vmem:[%s18 + $0x90] sm:$0xff]
    %v4129 = vld [vmem:[%s18 + $0x98] sm:$0xff]
    %v4130 = vld [vmem:[%s18 + $0xa0] sm:$0xff]
    %v4131 = vld [vmem:[%s18 + $0xa8] sm:$0xff]
    %v4132 = vld [vmem:[%s18 + $0xb0] sm:$0xff]
    %v4133 = vld [vmem:[%s18 + $0xb8] sm:$0xff]
    %v4134 = vld [vmem:[%s18 + $0xc0] sm:$0xff]
    %v4135 = vld [vmem:[%s18 + $0xc8] sm:$0xff]
    %v4136 = vld [vmem:[%s18 + $0xd0] sm:$0xff]
    %v4137 = vld [vmem:[%s18 + $0xd8] sm:$0xff]
    %v4138 = vld [vmem:[%s18 + $0xe0] sm:$0xff]
    %v4139 = vld [vmem:[%s18 + $0xe8] sm:$0xff]
    %v4140 = vld [vmem:[%s18 + $0xf0] sm:$0xff]
    %v4141 = vld [vmem:[%s18 + $0xf8] sm:$0xff]
    %v4142 = vld [vmem:[%s19] sm:$0x1]
    %v4144 = vlaneseq
    %v4145 = vshrl.u32 %v4144, 7
    %v4146 = vsub.s32 0, %v4145
    %v4147 = vrot.slane %v4142, %v4146
    %4149 = vmatprep.subr.mxu0 0.0
    %4150 = vmatpush1.msra.mxu0 %v4125
    %4151 = vmatprep.subr.mxu0 0.0
    %4152 = vmatpush1.msra.mxu0 %v4124
    %4153 = vmatprep.subr.mxu0 0.0
    %4154 = vmatpush1.msra.mxu0 %v4123
    %4155 = vmatprep.subr.mxu0 0.0
    %4156 = vmatpush1.msra.mxu0 %v4122
    %4157 = vmatprep.subr.mxu0 0.0
    %4158 = vmatpush1.msra.mxu0 %v4121
    %4159 = vmatprep.subr.mxu0 0.0
    %4160 = vmatpush1.msra.mxu0 %v4120
    %4161 = vmatprep.subr.mxu0 0.0
    %4162 = vmatpush1.msra.mxu0 %v4119
    %4163 = vmatprep.subr.mxu0 0.0
    %4164 = vmatpush1.msra.mxu0 %v4118
    %4165 = vmatprep.subr.mxu0 0.0
    %4166 = vmatpush1.msra.mxu0 %v4117
    %4167 = vmatprep.subr.mxu0 0.0
    %4168 = vmatpush1.msra.mxu0 %v4116
    %4169 = vmatprep.subr.mxu0 0.0
    %4170 = vmatpush1.msra.mxu0 %v4115
    %4171 = vmatprep.subr.mxu0 0.0
    %4172 = vmatpush1.msra.mxu0 %v4114
    %4173 = vmatprep.subr.mxu0 0.0
    %4174 = vmatpush1.msra.mxu0 %v4113
    %4175 = vmatprep.subr.mxu0 0.0
    %4176 = vmatpush1.msra.mxu0 %v4112
    %4177 = vmatprep.subr.mxu0 0.0
    %4178 = vmatpush1.msra.mxu0 %v4111
    %4179 = vmatprep.subr.mxu0 0.0
    %4180 = vmatpush1.msra.mxu0 %v4110
    %4181 = vmatprep.subr.mxu0 0.0
    %4182 = vmatpush2.msra.mxu0 %v4141
    %4183 = vmatprep.subr.mxu0 0.0
    %4184 = vmatpush2.msra.mxu0 %v4140
    %4185 = vmatprep.subr.mxu0 0.0
    %4186 = vmatpush2.msra.mxu0 %v4139
    %4187 = vmatprep.subr.mxu0 0.0
    %4188 = vmatpush2.msra.mxu0 %v4138
    %4189 = vmatprep.subr.mxu0 0.0
    %4190 = vmatpush2.msra.mxu0 %v4137
    %4191 = vmatprep.subr.mxu0 0.0
    %4192 = vmatpush2.msra.mxu0 %v4136
    %4193 = vmatprep.subr.mxu0 0.0
    %4194 = vmatpush2.msra.mxu0 %v4135
    %4195 = vmatprep.subr.mxu0 0.0
    %4196 = vmatpush2.msra.mxu0 %v4134
    %4197 = vmatprep.subr.mxu0 0.0
    %4198 = vmatpush2.msra.mxu0 %v4133
    %4199 = vmatprep.subr.mxu0 0.0
    %4200 = vmatpush2.msra.mxu0 %v4132
    %4201 = vmatprep.subr.mxu0 0.0
    %4202 = vmatpush2.msra.mxu0 %v4131
    %4203 = vmatprep.subr.mxu0 0.0
    %4204 = vmatpush2.msra.mxu0 %v4130
    %4205 = vmatprep.subr.mxu0 0.0
    %4206 = vmatpush2.msra.mxu0 %v4129
    %4207 = vmatprep.subr.mxu0 0.0
    %4208 = vmatpush2.msra.mxu0 %v4128
    %4209 = vmatprep.subr.mxu0 0.0
    %4210 = vmatpush2.msra.mxu0 %v4127
    %4211 = vmatprep.subr.mxu0 0.0
    %4212 = vmatpush2.msra.mxu0 %v4126
    %4213 = vmatprep.mubr.f32.mxu0 %v4108
    %4214 = vmatmul.mubr.f32.gmra.mxu0 %v4107
    %v4215 = vpop.f32.mrf.mxu0
    %v4216 = vadd.f32 %v4147, %v4215
    %v4217 = vpop.f32.mrf.mxu0
    %4218 = vdwg.mxu0
    %v4219 = vmax.f32 %v4216, 0.0
    %v4220 = vand.u32 2147483647, %v4216
    %v4221 = vsub.f32 0.0, %v4220
    %v4222 = vmul.f32 %v4221, 1.442695
    %v4223 = vpow.pop %v4222
    %v4224 = vadd.f32 %v4223, 1.0
    %v4225 = vlog2.pop %v4224
    %v4226 = vmul.f32 %v4225, 0.6931472
    %v4227 = vadd.f32 %v4219, %v4226
    %v4228 = vtanh.pop %v4227
    %v4229 = vmul.f32 %v4216, %v4228
    %v4230 = vlaneseq
    %v4231 = vshrl.u32 %v4230, 7
    %v4232 = vsub.s32 2, %v4231
    %v4233 = vrot.slane %v4109, %v4232
    %v4234 = vsub.f32 %v4229, %v4233
    %v4235 = vadd.f32 %v4109, 1e-05
    %v4236 = vrsqrt.pop %v4235
    %v4237 = vlaneseq
    %v4238 = vshrl.u32 %v4237, 7
    %v4239 = vsub.s32 3, %v4238
    %v4240 = vrot.slane %v4236, %v4239
    %v4241 = vmul.f32 %v4234, %v4240
    %v4242 = vlaneseq
    %v4243 = vshrl.u32 %v4242, 7
    %v4244 = vsub.s32 0, %v4243
    %v4245 = vrot.slane %v4109, %v4244
    %v4246 = vmul.f32 %v4241, %v4245
    %v4247 = vlaneseq
    %v4248 = vshrl.u32 %v4247, 7
    %v4249 = vsub.s32 1, %v4248
    %v4250 = vrot.slane %v4109, %v4249
    %v4251 = vadd.f32 %v4246, %v4250
    %v4252 = vld [vmem:[%s21] sm:$0xff]
    %v4253 = vld [vmem:[%s21 + $0x8] sm:$0xff]
    %v4254 = vld [vmem:[%s21 + $0x10] sm:$0xff]
    %v4255 = vld [vmem:[%s21 + $0x18] sm:$0xff]
    %v4256 = vld [vmem:[%s21 + $0x20] sm:$0xff]
    %v4257 = vld [vmem:[%s21 + $0x28] sm:$0xff]
    %v4258 = vld [vmem:[%s21 + $0x30] sm:$0xff]
    %v4259 = vld [vmem:[%s21 + $0x38] sm:$0xff]
    %v4260 = vld [vmem:[%s22] sm:$0x1]
    %v4262 = vlaneseq
    %v4263 = vshrl.u32 %v4262, 7
    %v4264 = vsub.s32 0, %v4263
    %v4265 = vrot.slane %v4260, %v4264
    %v4268 = vsel %vm1849, %v4251, 0
    %4270 = vmatprep.subr.mxu0 0.0
    %4271 = vmatpush1.msra.mxu0 0.0
    %4272 = vmatprep.subr.mxu0 0.0
    %4273 = vmatpush1.msra.mxu0 0.0
    %4274 = vmatprep.subr.mxu0 0.0
    %4275 = vmatpush1.msra.mxu0 0.0
    %4276 = vmatprep.subr.mxu0 0.0
    %4277 = vmatpush1.msra.mxu0 0.0
    %4278 = vmatprep.subr.mxu0 0.0
    %4279 = vmatpush1.msra.mxu0 0.0
    %4280 = vmatprep.subr.mxu0 0.0
    %4281 = vmatpush1.msra.mxu0 0.0
    %4282 = vmatprep.subr.mxu0 0.0
    %4283 = vmatpush1.msra.mxu0 0.0
    %4284 = vmatprep.subr.mxu0 0.0
    %4285 = vmatpush1.msra.mxu0 0.0
    %4286 = vmatprep.subr.mxu0 0.0
    %4287 = vmatpush1.msra.mxu0 %v4259
    %4288 = vmatprep.subr.mxu0 0.0
    %4289 = vmatpush1.msra.mxu0 %v4258
    %4290 = vmatprep.subr.mxu0 0.0
    %4291 = vmatpush1.msra.mxu0 %v4257
    %4292 = vmatprep.subr.mxu0 0.0
    %4293 = vmatpush1.msra.mxu0 %v4256
    %4294 = vmatprep.subr.mxu0 0.0
    %4295 = vmatpush1.msra.mxu0 %v4255
    %4296 = vmatprep.subr.mxu0 0.0
    %4297 = vmatpush1.msra.mxu0 %v4254
    %4298 = vmatprep.subr.mxu0 0.0
    %4299 = vmatpush1.msra.mxu0 %v4253
    %4300 = vmatprep.subr.mxu0 0.0
    %4301 = vmatpush1.msra.mxu0 %v4252
    %4302 = vmatprep.subr.mxu0 0.0
    %4303 = vmatpush2.msra.mxu0 0.0
    %4304 = vmatprep.subr.mxu0 0.0
    %4305 = vmatpush2.msra.mxu0 0.0
    %4306 = vmatprep.subr.mxu0 0.0
    %4307 = vmatpush2.msra.mxu0 0.0
    %4308 = vmatprep.subr.mxu0 0.0
    %4309 = vmatpush2.msra.mxu0 0.0
    %4310 = vmatprep.subr.mxu0 0.0
    %4311 = vmatpush2.msra.mxu0 0.0
    %4312 = vmatprep.subr.mxu0 0.0
    %4313 = vmatpush2.msra.mxu0 0.0
    %4314 = vmatprep.subr.mxu0 0.0
    %4315 = vmatpush2.msra.mxu0 0.0
    %4316 = vmatprep.subr.mxu0 0.0
    %4317 = vmatpush2.msra.mxu0 0.0
    %4318 = vmatprep.subr.mxu0 0.0
    %4319 = vmatpush2.msra.mxu0 0.0
    %4320 = vmatprep.subr.mxu0 0.0
    %4321 = vmatpush2.msra.mxu0 0.0
    %4322 = vmatprep.subr.mxu0 0.0
    %4323 = vmatpush2.msra.mxu0 0.0
    %4324 = vmatprep.subr.mxu0 0.0
    %4325 = vmatpush2.msra.mxu0 0.0
    %4326 = vmatprep.subr.mxu0 0.0
    %4327 = vmatpush2.msra.mxu0 0.0
    %4328 = vmatprep.subr.mxu0 0.0
    %4329 = vmatpush2.msra.mxu0 0.0
    %4330 = vmatprep.subr.mxu0 0.0
    %4331 = vmatpush2.msra.mxu0 0.0
    %4332 = vmatprep.subr.mxu0 0.0
    %4333 = vmatpush2.msra.mxu0 0.0
    %4334 = vmatprep.mubr.f32.mxu0 0.0
    %4335 = vmatmul.mubr.f32.gmra.mxu0 %v4268
    %v4336 = vpop.f32.mrf.mxu0
    %v4337 = vadd.f32 %v4265, %v4336
    %v4338 = vpop.f32.mrf.mxu0
    %4339 = vdwg.mxu0
    %4340 = vst [vmem:[#allocation2] sm:$0x3] %v4337
    // Predicated region
    $region94: #{mybert_forward.1} parent=1 // pred_check
      _
    $region95: #{mybert_forward.1} parent=1 // pred_check_branch
      %4342 = sbr.rel (0) target = $region97
    $region96: #{mybert_forward.1} parent=1 // pred_region
      %s4344 = ssub.s32 32, 32
      %4345 = vsyncadd [#allocation3], %s4344
      %s4347 = sshll.u32 [#allocation2], 4
      %s4348 = int_to_ptr.vmem [resolvable:$true] %s4347
      %4350 = dma.vmem_to_hbm [thread:$0]  %s4348, 32, %s23, [#allocation3]
    $region97: #{mybert_forward.1} parent=1 // pred_fallthru
      _
    // Predicated region
    $region98: #{mybert_forward.1} parent=1 // pred_check
      _
    $region99: #{mybert_forward.1} parent=1 // pred_check_branch
      %4352 = sbr.rel (0) target = $region101
    $region100: #{mybert_forward.1} parent=1 // pred_region
      %4353 = dma.done [#allocation3], 32
    $region101: #{mybert_forward.1} parent=1 // pred_fallthru
      _
    %4354 = vsyncpa [#allocation3], 1

</llo_original>
